<compile_context>
chip_gen: v5e
topology: v5e:2x2
jax: 0.10.0
libtpu: 0.0.40
codegen_flags: <defaults>
</compile_context>

<pallas_src>
import jax
import jax.numpy as jnp
from jax.experimental import pallas as pl
from jax.experimental.pallas import tpu as pltpu


# ----------------------------------------------------------------------------
# Pallas kernels
# ----------------------------------------------------------------------------
def _conv_pool_kernel(x_ref, w_ref, b_ref, o_ref):
    """Fused conv-as-matmul + bias + ReLU + 2x2 maxpool for one image.

    x_ref: (1, 4, Mp, Kpad)  -- 4 = position inside the 2x2 pool window,
                                Mp = pooled spatial positions, Kpad = padded patch size.
    w_ref: (Kpad, 128)  b_ref: (1, 128)  o_ref: (1, Mp, 128)
    """
    w = w_ref[...]
    b = b_ref[...]
    pooled = None
    for t in range(4):  # static unroll: 4 matmuls on VMEM-resident weights
        y = jnp.dot(x_ref[0, t], w, preferred_element_type=jnp.float32) + b
        y = jnp.maximum(y, 0.0)
        pooled = y if pooled is None else jnp.maximum(pooled, y)
    o_ref[0] = pooled.astype(o_ref.dtype)


def _fc_kernel(x_ref, w1_ref, b1_ref, w2_ref, b2_ref, w3_ref, b3_ref, o_ref):
    """Fused fc1+ReLU -> fc2+ReLU -> fc3 on a batch tile.

    x_ref: (TB, 25, 128) -- conv2+pool output, channels lane-padded (zeros) to 128.
    w1_ref: (25, 128, 128)  w2_ref/w3_ref: (128, 128)  b*_ref: (1, 128)
    o_ref: (TB, 128) -- first 10 lanes are the logits.
    """
    tb = x_ref.shape[0]
    n1 = w1_ref.shape[2]
    acc = jnp.zeros((tb, n1), jnp.float32)
    # fc1 over the flattened (pos, channel) input, expressed as a sum over the 25
    # pooled positions (avoids any in-kernel reshape of the (25, 128) slab).
    for p in range(x_ref.shape[1]):
        acc = acc + jnp.dot(x_ref[:, p, :], w1_ref[p],
                            preferred_element_type=jnp.float32)
    h1 = jnp.maximum(acc + b1_ref[...], 0.0)
    h2 = jnp.maximum(
        jnp.dot(h1, w2_ref[...], preferred_element_type=jnp.float32) + b2_ref[...],
        0.0)
    o_ref[...] = (jnp.dot(h2, w3_ref[...], preferred_element_type=jnp.float32)
                  + b3_ref[...]).astype(o_ref.dtype)


# ----------------------------------------------------------------------------
# Pallas wrappers
# ----------------------------------------------------------------------------
def conv_pool_pallas(cols, w_mat, b_vec):
    """cols:(B,4,Mp,Kpad) w:(Kpad,128) b:(1,128) -> (B,Mp,128)."""
    B, T, Mp, Kp = cols.shape
    N = w_mat.shape[1]
    return pl.pallas_call(
        _conv_pool_kernel,
        out_shape=jax.ShapeDtypeStruct((B, Mp, N), jnp.float32),
        grid=(B,),
        in_specs=[
            pl.BlockSpec((1, T, Mp, Kp), lambda b: (b, 0, 0, 0)),
            pl.BlockSpec((Kp, N), lambda b: (0, 0)),
            pl.BlockSpec((1, N), lambda b: (0, 0)),
        ],
        out_specs=pl.BlockSpec((1, Mp, N), lambda b: (b, 0, 0)),
        compiler_params=pltpu.CompilerParams(dimension_semantics=("parallel",)),
    )(cols, w_mat, b_vec)


def fc_pallas(x2, w1p, b1, w2p, b2, w3p, b3, *, tb_max=256):
    """x2:(B,25,128) -> (B,128) fused fc1/fc2/fc3 (logits in first 10 lanes)."""
    B, P, C = x2.shape
    TB = min(tb_max, B)
    Bp = ((B + TB - 1) // TB) * TB
    if Bp != B:
        x2 = jnp.pad(x2, ((0, Bp - B), (0, 0), (0, 0)))
    out = pl.pallas_call(
        _fc_kernel,
        out_shape=jax.ShapeDtypeStruct((Bp, w3p.shape[1]), jnp.float32),
        grid=(Bp // TB,),
        in_specs=[
            pl.BlockSpec((TB, P, C), lambda i: (i, 0, 0)),
            pl.BlockSpec(w1p.shape, lambda i: (0, 0, 0)),
            pl.BlockSpec(b1.shape, lambda i: (0, 0)),
            pl.BlockSpec(w2p.shape, lambda i: (0, 0)),
            pl.BlockSpec(b2.shape, lambda i: (0, 0)),
            pl.BlockSpec(w3p.shape, lambda i: (0, 0)),
            pl.BlockSpec(b3.shape, lambda i: (0, 0)),
        ],
        out_specs=pl.BlockSpec((TB, w3p.shape[1]), lambda i: (i, 0)),
        compiler_params=pltpu.CompilerParams(dimension_semantics=("parallel",)),
    )(x2, w1p, b1, w2p, b2, w3p, b3)
    return out[:B]


# ----------------------------------------------------------------------------
# Glue: pool-grouped im2col (channels-last, feature order (kh, kw, c))
# ----------------------------------------------------------------------------
def im2col_pool_grouped(x_nhwc, k, k_pad):
    """x:(B,H,W,C) -> (B, 4, (Ho//2)*(Wo//2), k_pad); zero-padded features."""
    B, H, W, C = x_nhwc.shape
    Ho, Wo = H - k + 1, W - k + 1
    Hp, Wp = Ho // 2, Wo // 2
    K = k * k * C
    patches = []
    for i in range(k):
        for j in range(k):
            patches.append(x_nhwc[:, i:i + Ho, j:j + Wo, :])
    p = jnp.stack(patches, axis=3)                 # (B, Ho, Wo, k*k, C)
    p = p.reshape(B, Ho, Wo, K)                    # feature order (kh, kw, c)
    p = p.reshape(B, Hp, 2, Wp, 2, K)              # (b, ph, dh, pw, dw, f)
    p = p.transpose(0, 2, 4, 1, 3, 5)              # (b, dh, dw, ph, pw, f)
    p = p.reshape(B, 4, Hp * Wp, K)
    if k_pad > K:
        p = jnp.pad(p, ((0, 0), (0, 0), (0, 0), (0, k_pad - K)))
    return p


# ----------------------------------------------------------------------------
# Parameters (PyTorch layout) + one-time packing for the kernels
# ----------------------------------------------------------------------------
def init_lenet_params(key):
    ks = jax.random.split(key, 10)
    p = {}
    p["conv1_w"] = 0.1 * jax.random.normal(ks[0], (6, 3, 5, 5), jnp.float32)
    p["conv1_b"] = 0.1 * jax.random.normal(ks[1], (6,), jnp.float32)
    p["conv2_w"] = 0.1 * jax.random.normal(ks[2], (16, 6, 5, 5), jnp.float32)
    p["conv2_b"] = 0.1 * jax.random.normal(ks[3], (16,), jnp.float32)
    p["fc1_w"] = 0.05 * jax.random.normal(ks[4], (120, 400), jnp.float32)
    p["fc1_b"] = 0.05 * jax.random.normal(ks[5], (120,), jnp.float32)
    p["fc2_w"] = 0.05 * jax.random.normal(ks[6], (84, 120), jnp.float32)
    p["fc2_b"] = 0.05 * jax.random.normal(ks[7], (84,), jnp.float32)
    p["fc3_w"] = 0.05 * jax.random.normal(ks[8], (10, 84), jnp.float32)
    p["fc3_b"] = 0.05 * jax.random.normal(ks[9], (10,), jnp.float32)
    return p


def prepare_params(p):
    """One-time packing: pad K/N to 128-multiples, pre-permute fc1 for NHWC flatten."""
    def pack_conv_w(w, k_pad):
        O, C, kh, kw = w.shape
        wm = jnp.transpose(w, (2, 3, 1, 0)).reshape(kh * kw * C, O)  # (kh,kw,c) x O
        return jnp.pad(wm, ((0, k_pad - kh * kw * C), (0, 128 - O)))
    def pack_bias(b):
        return jnp.pad(b.reshape(1, -1), ((0, 0), (0, 128 - b.shape[0])))

    prep = {}
    prep["c1_w"] = pack_conv_w(p["conv1_w"], 128)          # K=75  -> 128
    prep["c1_b"] = pack_bias(p["conv1_b"])
    prep["c2_w"] = pack_conv_w(p["conv2_w"], 256)          # K=150 -> 256
    prep["c2_b"] = pack_bias(p["conv2_b"])
    # fc1: PyTorch flatten index = c*25 + (h*5 + w); our layout is (pos p, channel c).
    w1 = p["fc1_w"].reshape(120, 16, 25).transpose(2, 1, 0)  # (p, c, o) = (25,16,120)
    prep["fc1_w"] = jnp.pad(w1, ((0, 0), (0, 128 - 16), (0, 128 - 120)))
    prep["fc1_b"] = pack_bias(p["fc1_b"])
    prep["fc2_w"] = jnp.pad(p["fc2_w"].T, ((0, 128 - 120), (0, 128 - 84)))
    prep["fc2_b"] = pack_bias(p["fc2_b"])
    prep["fc3_w"] = jnp.pad(p["fc3_w"].T, ((0, 128 - 84), (0, 128 - 10)))
    prep["fc3_b"] = pack_bias(p["fc3_b"])
    return prep


# ----------------------------------------------------------------------------
# Forward pass
# ----------------------------------------------------------------------------
def lenet_forward(prep, x_nchw):
    """x: (B, 3, 32, 32) float32 NCHW -> logits (B, 10)."""
    B = x_nchw.shape[0]
    x = jnp.transpose(x_nchw, (0, 2, 3, 1)).astype(jnp.float32)     # NHWC boundary permute
    # conv1 + relu + pool (fused kernel)
    cols1 = im2col_pool_grouped(x, 5, 128)                          # (B,4,196,128)
    y1 = conv_pool_pallas(cols1, prep["c1_w"], prep["c1_b"])        # (B,196,128)
    x1 = y1[:, :, :6].reshape(B, 14, 14, 6)                         # NHWC feature map
    # conv2 + relu + pool (fused kernel)
    cols2 = im2col_pool_grouped(x1, 5, 256)                         # (B,4,25,256)
    y2 = conv_pool_pallas(cols2, prep["c2_w"], prep["c2_b"])        # (B,25,128)
    # fused fc1/fc2/fc3 directly on the padded (B,25,128) slab (no flatten round-trip)
    logits = fc_pallas(y2, prep["fc1_w"], prep["fc1_b"],
                       prep["fc2_w"], prep["fc2_b"],
                       prep["fc3_w"], prep["fc3_b"])                # (B,128)
    return logits[:, :10]


# ----------------------------------------------------------------------------
# Pure-JAX reference (matches the PyTorch module) for a sanity check
# ----------------------------------------------------------------------------
def lenet_reference(params, x):
    hi = jax.lax.Precision.HIGHEST

    def conv(x, w, b):
        y = jax.lax.conv_general_dilated(
            x, w, (1, 1), "VALID",
            dimension_numbers=("NCHW", "OIHW", "NCHW"), precision=hi)
        return y + b.reshape(1, -1, 1, 1)

    def pool(x):
        return jax.lax.reduce_window(x, -jnp.inf, jax.lax.max,
                                     (1, 1, 2, 2), (1, 1, 2, 2), "VALID")

    x = pool(jax.nn.relu(conv(x, params["conv1_w"], params["conv1_b"])))
    x = pool(jax.nn.relu(conv(x, params["conv2_w"], params["conv2_b"])))
    x = x.reshape(x.shape[0], -1)
    x = jax.nn.relu(jnp.dot(x, params["fc1_w"].T, precision=hi) + params["fc1_b"])
    x = jax.nn.relu(jnp.dot(x, params["fc2_w"].T, precision=hi) + params["fc2_b"])
    return jnp.dot(x, params["fc3_w"].T, precision=hi) + params["fc3_b"]


if __name__ == "__main__":
    key = jax.random.PRNGKey(0)
    k_param, k_x = jax.random.split(key)
    params = init_lenet_params(k_param)
    prep = prepare_params(params)
    # LeNet's flatten (16*5*5) implies 32x32 spatial input; small batch=2.
    x = jax.random.normal(k_x, (2, 3, 32, 32), jnp.float32)

    fwd = jax.jit(lenet_forward)
    logits = fwd(prep, x)
    jax.block_until_ready(logits)
    assert logits.shape == (2, 10) and logits.dtype == jnp.float32

    ref = lenet_reference(params, x)
    assert jnp.allclose(logits, ref, atol=2e-2, rtol=2e-2), (
        f"max abs err {jnp.max(jnp.abs(logits - ref))}")
    print("KERNEL_OK")
</pallas_src>

<mosaic_0001>
module attributes {stable_mosaic.version = 11 : i64} {
  func.func @_conv_pool_kernel(%arg0: i32, %arg1: memref<1x4x196x128xf32, #tpu.memory_space<vmem>>, %arg2: memref<128x128xf32, #tpu.memory_space<vmem>>, %arg3: memref<1x128xf32, #tpu.memory_space<vmem>>, %arg4: memref<1x196x128xf32, #tpu.memory_space<vmem>>) attributes {dimension_semantics = [#tpu.dimension_semantics<parallel>], iteration_bounds = array<i64: 2>, scalar_prefetch = 0 : i64, scratch_operands = 0 : i64, tpu.core_type = #tpu.core_type<tc>, window_params = [{transform_indices = @transform_0, window_bounds = array<i64: 1, 4, 196, 128>}, {pipeline_mode = #tpu.pipeline_mode<synchronous>, transform_indices = @transform_1, window_bounds = array<i64: 128, 128>}, {pipeline_mode = #tpu.pipeline_mode<synchronous>, transform_indices = @transform_2, window_bounds = array<i64: 1, 128>}, {transform_indices = @transform_3, window_bounds = array<i64: 1, 196, 128>}]} {
    %c0 = arith.constant 0 : index
    %c0_0 = arith.constant 0 : index
    %0 = vector.load %arg2[%c0, %c0_0] : memref<128x128xf32, #tpu.memory_space<vmem>>, vector<128x128xf32>
    %c0_1 = arith.constant 0 : index
    %c0_2 = arith.constant 0 : index
    %1 = vector.load %arg3[%c0_1, %c0_2] : memref<1x128xf32, #tpu.memory_space<vmem>>, vector<1x128xf32>
    %c0_3 = arith.constant 0 : index
    %c0_4 = arith.constant 0 : index
    %c0_5 = arith.constant 0 : index
    %c0_6 = arith.constant 0 : index
    %2 = vector.load %arg1[%c0_3, %c0_4, %c0_5, %c0_6] : memref<1x4x196x128xf32, #tpu.memory_space<vmem>>, vector<1x1x196x128xf32>
    %3 = vector.shape_cast %2 : vector<1x1x196x128xf32> to vector<196x128xf32>
    %cst = arith.constant dense<0.000000e+00> : vector<196x128xf32>
    %4 = tpu.matmul %3, %0, %cst {dimension_numbers = #tpu.dot_dimension_numbers<[1], [0], [0], [1], [0, 0, 1, 1], [], []>} : vector<196x128xf32>, vector<128x128xf32>, vector<196x128xf32> -> vector<196x128xf32>
    %5 = vector.broadcast %1 : vector<1x128xf32> to vector<196x128xf32>
    %6 = arith.addf %4, %5 : vector<196x128xf32>
    %cst_7 = arith.constant 0.000000e+00 : f32
    %7 = vector.broadcast %cst_7 : f32 to vector<196x128xf32>
    %8 = arith.maximumf %6, %7 : vector<196x128xf32>
    %c0_8 = arith.constant 0 : index
    %c1 = arith.constant 1 : index
    %c0_9 = arith.constant 0 : index
    %c0_10 = arith.constant 0 : index
    %9 = vector.load %arg1[%c0_8, %c1, %c0_9, %c0_10] : memref<1x4x196x128xf32, #tpu.memory_space<vmem>>, vector<1x1x196x128xf32>
    %10 = vector.shape_cast %9 : vector<1x1x196x128xf32> to vector<196x128xf32>
    %cst_11 = arith.constant dense<0.000000e+00> : vector<196x128xf32>
    %11 = tpu.matmul %10, %0, %cst_11 {dimension_numbers = #tpu.dot_dimension_numbers<[1], [0], [0], [1], [0, 0, 1, 1], [], []>} : vector<196x128xf32>, vector<128x128xf32>, vector<196x128xf32> -> vector<196x128xf32>
    %12 = vector.broadcast %1 : vector<1x128xf32> to vector<196x128xf32>
    %13 = arith.addf %11, %12 : vector<196x128xf32>
    %cst_12 = arith.constant 0.000000e+00 : f32
    %14 = vector.broadcast %cst_12 : f32 to vector<196x128xf32>
    %15 = arith.maximumf %13, %14 : vector<196x128xf32>
    %16 = arith.maximumf %8, %15 : vector<196x128xf32>
    %c0_13 = arith.constant 0 : index
    %c2 = arith.constant 2 : index
    %c0_14 = arith.constant 0 : index
    %c0_15 = arith.constant 0 : index
    %17 = vector.load %arg1[%c0_13, %c2, %c0_14, %c0_15] : memref<1x4x196x128xf32, #tpu.memory_space<vmem>>, vector<1x1x196x128xf32>
    %18 = vector.shape_cast %17 : vector<1x1x196x128xf32> to vector<196x128xf32>
    %cst_16 = arith.constant dense<0.000000e+00> : vector<196x128xf32>
    %19 = tpu.matmul %18, %0, %cst_16 {dimension_numbers = #tpu.dot_dimension_numbers<[1], [0], [0], [1], [0, 0, 1, 1], [], []>} : vector<196x128xf32>, vector<128x128xf32>, vector<196x128xf32> -> vector<196x128xf32>
    %20 = vector.broadcast %1 : vector<1x128xf32> to vector<196x128xf32>
    %21 = arith.addf %19, %20 : vector<196x128xf32>
    %cst_17 = arith.constant 0.000000e+00 : f32
    %22 = vector.broadcast %cst_17 : f32 to vector<196x128xf32>
    %23 = arith.maximumf %21, %22 : vector<196x128xf32>
    %24 = arith.maximumf %16, %23 : vector<196x128xf32>
    %c0_18 = arith.constant 0 : index
    %c3 = arith.constant 3 : index
    %c0_19 = arith.constant 0 : index
    %c0_20 = arith.constant 0 : index
    %25 = vector.load %arg1[%c0_18, %c3, %c0_19, %c0_20] : memref<1x4x196x128xf32, #tpu.memory_space<vmem>>, vector<1x1x196x128xf32>
    %26 = vector.shape_cast %25 : vector<1x1x196x128xf32> to vector<196x128xf32>
    %cst_21 = arith.constant dense<0.000000e+00> : vector<196x128xf32>
    %27 = tpu.matmul %26, %0, %cst_21 {dimension_numbers = #tpu.dot_dimension_numbers<[1], [0], [0], [1], [0, 0, 1, 1], [], []>} : vector<196x128xf32>, vector<128x128xf32>, vector<196x128xf32> -> vector<196x128xf32>
    %28 = vector.broadcast %1 : vector<1x128xf32> to vector<196x128xf32>
    %29 = arith.addf %27, %28 : vector<196x128xf32>
    %cst_22 = arith.constant 0.000000e+00 : f32
    %30 = vector.broadcast %cst_22 : f32 to vector<196x128xf32>
    %31 = arith.maximumf %29, %30 : vector<196x128xf32>
    %32 = arith.maximumf %24, %31 : vector<196x128xf32>
    %c0_23 = arith.constant 0 : index
    %c0_24 = arith.constant 0 : index
    %c0_25 = arith.constant 0 : index
    %33 = vector.load %arg4[%c0_23, %c0_24, %c0_25] : memref<1x196x128xf32, #tpu.memory_space<vmem>>, vector<1x196x128xf32>
    %34 = vector.shape_cast %33 : vector<1x196x128xf32> to vector<196x128xf32>
    %35 = vector.shape_cast %32 : vector<196x128xf32> to vector<1x196x128xf32>
    tpu.vector_store %arg4[%c0_23, %c0_24, %c0_25], %35 {strides = array<i32>} : memref<1x196x128xf32, #tpu.memory_space<vmem>>, vector<1x196x128xf32>,
    return
  }
  func.func @transform_0(%arg0: i32) -> (i32, i32, i32, i32) {
    %c0_i32 = arith.constant 0 : i32
    %c0_i32_0 = arith.constant 0 : i32
    %c0_i32_1 = arith.constant 0 : i32
    %c0_i32_2 = arith.constant 0 : i32
    return %arg0, %c0_i32, %c0_i32_0, %c0_i32_1 : i32, i32, i32, i32
  }
  func.func @transform_1(%arg0: i32) -> (i32, i32) {
    %c0_i32 = arith.constant 0 : i32
    %c0_i32_0 = arith.constant 0 : i32
    %c0_i32_1 = arith.constant 0 : i32
    return %c0_i32, %c0_i32_0 : i32, i32
  }
  func.func @transform_2(%arg0: i32) -> (i32, i32) {
    %c0_i32 = arith.constant 0 : i32
    %c0_i32_0 = arith.constant 0 : i32
    %c0_i32_1 = arith.constant 0 : i32
    return %c0_i32, %c0_i32_0 : i32, i32
  }
  func.func @transform_3(%arg0: i32) -> (i32, i32, i32) {
    %c0_i32 = arith.constant 0 : i32
    %c0_i32_0 = arith.constant 0 : i32
    %c0_i32_1 = arith.constant 0 : i32
    return %arg0, %c0_i32, %c0_i32_0 : i32, i32, i32
  }
}

module attributes {stable_mosaic.version = 11 : i64} {
  func.func @_conv_pool_kernel(%arg0: i32, %arg1: memref<1x4x25x256xf32, #tpu.memory_space<vmem>>, %arg2: memref<256x128xf32, #tpu.memory_space<vmem>>, %arg3: memref<1x128xf32, #tpu.memory_space<vmem>>, %arg4: memref<1x25x128xf32, #tpu.memory_space<vmem>>) attributes {dimension_semantics = [#tpu.dimension_semantics<parallel>], iteration_bounds = array<i64: 2>, scalar_prefetch = 0 : i64, scratch_operands = 0 : i64, tpu.core_type = #tpu.core_type<tc>, window_params = [{transform_indices = @transform_0, window_bounds = array<i64: 1, 4, 25, 256>}, {pipeline_mode = #tpu.pipeline_mode<synchronous>, transform_indices = @transform_1, window_bounds = array<i64: 256, 128>}, {pipeline_mode = #tpu.pipeline_mode<synchronous>, transform_indices = @transform_2, window_bounds = array<i64: 1, 128>}, {transform_indices = @transform_3, window_bounds = array<i64: 1, 25, 128>}]} {
    %c0 = arith.constant 0 : index
    %c0_0 = arith.constant 0 : index
    %0 = vector.load %arg2[%c0, %c0_0] : memref<256x128xf32, #tpu.memory_space<vmem>>, vector<256x128xf32>
    %c0_1 = arith.constant 0 : index
    %c0_2 = arith.constant 0 : index
    %1 = vector.load %arg3[%c0_1, %c0_2] : memref<1x128xf32, #tpu.memory_space<vmem>>, vector<1x128xf32>
    %c0_3 = arith.constant 0 : index
    %c0_4 = arith.constant 0 : index
    %c0_5 = arith.constant 0 : index
    %c0_6 = arith.constant 0 : index
    %2 = vector.load %arg1[%c0_3, %c0_4, %c0_5, %c0_6] : memref<1x4x25x256xf32, #tpu.memory_space<vmem>>, vector<1x1x25x256xf32>
    %3 = vector.shape_cast %2 : vector<1x1x25x256xf32> to vector<25x256xf32>
    %cst = arith.constant dense<0.000000e+00> : vector<25x128xf32>
    %4 = tpu.matmul %3, %0, %cst {dimension_numbers = #tpu.dot_dimension_numbers<[1], [0], [0], [1], [0, 0, 1, 1], [], []>} : vector<25x256xf32>, vector<256x128xf32>, vector<25x128xf32> -> vector<25x128xf32>
    %5 = vector.broadcast %1 : vector<1x128xf32> to vector<25x128xf32>
    %6 = arith.addf %4, %5 : vector<25x128xf32>
    %cst_7 = arith.constant 0.000000e+00 : f32
    %7 = vector.broadcast %cst_7 : f32 to vector<25x128xf32>
    %8 = arith.maximumf %6, %7 : vector<25x128xf32>
    %c0_8 = arith.constant 0 : index
    %c1 = arith.constant 1 : index
    %c0_9 = arith.constant 0 : index
    %c0_10 = arith.constant 0 : index
    %9 = vector.load %arg1[%c0_8, %c1, %c0_9, %c0_10] : memref<1x4x25x256xf32, #tpu.memory_space<vmem>>, vector<1x1x25x256xf32>
    %10 = vector.shape_cast %9 : vector<1x1x25x256xf32> to vector<25x256xf32>
    %cst_11 = arith.constant dense<0.000000e+00> : vector<25x128xf32>
    %11 = tpu.matmul %10, %0, %cst_11 {dimension_numbers = #tpu.dot_dimension_numbers<[1], [0], [0], [1], [0, 0, 1, 1], [], []>} : vector<25x256xf32>, vector<256x128xf32>, vector<25x128xf32> -> vector<25x128xf32>
    %12 = vector.broadcast %1 : vector<1x128xf32> to vector<25x128xf32>
    %13 = arith.addf %11, %12 : vector<25x128xf32>
    %cst_12 = arith.constant 0.000000e+00 : f32
    %14 = vector.broadcast %cst_12 : f32 to vector<25x128xf32>
    %15 = arith.maximumf %13, %14 : vector<25x128xf32>
    %16 = arith.maximumf %8, %15 : vector<25x128xf32>
    %c0_13 = arith.constant 0 : index
    %c2 = arith.constant 2 : index
    %c0_14 = arith.constant 0 : index
    %c0_15 = arith.constant 0 : index
    %17 = vector.load %arg1[%c0_13, %c2, %c0_14, %c0_15] : memref<1x4x25x256xf32, #tpu.memory_space<vmem>>, vector<1x1x25x256xf32>
    %18 = vector.shape_cast %17 : vector<1x1x25x256xf32> to vector<25x256xf32>
    %cst_16 = arith.constant dense<0.000000e+00> : vector<25x128xf32>
    %19 = tpu.matmul %18, %0, %cst_16 {dimension_numbers = #tpu.dot_dimension_numbers<[1], [0], [0], [1], [0, 0, 1, 1], [], []>} : vector<25x256xf32>, vector<256x128xf32>, vector<25x128xf32> -> vector<25x128xf32>
    %20 = vector.broadcast %1 : vector<1x128xf32> to vector<25x128xf32>
    %21 = arith.addf %19, %20 : vector<25x128xf32>
    %cst_17 = arith.constant 0.000000e+00 : f32
    %22 = vector.broadcast %cst_17 : f32 to vector<25x128xf32>
    %23 = arith.maximumf %21, %22 : vector<25x128xf32>
    %24 = arith.maximumf %16, %23 : vector<25x128xf32>
    %c0_18 = arith.constant 0 : index
    %c3 = arith.constant 3 : index
    %c0_19 = arith.constant 0 : index
    %c0_20 = arith.constant 0 : index
    %25 = vector.load %arg1[%c0_18, %c3, %c0_19, %c0_20] : memref<1x4x25x256xf32, #tpu.memory_space<vmem>>, vector<1x1x25x256xf32>
    %26 = vector.shape_cast %25 : vector<1x1x25x256xf32> to vector<25x256xf32>
    %cst_21 = arith.constant dense<0.000000e+00> : vector<25x128xf32>
    %27 = tpu.matmul %26, %0, %cst_21 {dimension_numbers = #tpu.dot_dimension_numbers<[1], [0], [0], [1], [0, 0, 1, 1], [], []>} : vector<25x256xf32>, vector<256x128xf32>, vector<25x128xf32> -> vector<25x128xf32>
    %28 = vector.broadcast %1 : vector<1x128xf32> to vector<25x128xf32>
    %29 = arith.addf %27, %28 : vector<25x128xf32>
    %cst_22 = arith.constant 0.000000e+00 : f32
    %30 = vector.broadcast %cst_22 : f32 to vector<25x128xf32>
    %31 = arith.maximumf %29, %30 : vector<25x128xf32>
    %32 = arith.maximumf %24, %31 : vector<25x128xf32>
    %c0_23 = arith.constant 0 : index
    %c0_24 = arith.constant 0 : index
    %c0_25 = arith.constant 0 : index
    %33 = vector.load %arg4[%c0_23, %c0_24, %c0_25] : memref<1x25x128xf32, #tpu.memory_space<vmem>>, vector<1x25x128xf32>
    %34 = vector.shape_cast %33 : vector<1x25x128xf32> to vector<25x128xf32>
    %35 = vector.shape_cast %32 : vector<25x128xf32> to vector<1x25x128xf32>
    tpu.vector_store %arg4[%c0_23, %c0_24, %c0_25], %35 {strides = array<i32>} : memref<1x25x128xf32, #tpu.memory_space<vmem>>, vector<1x25x128xf32>,
    return
  }
  func.func @transform_0(%arg0: i32) -> (i32, i32, i32, i32) {
    %c0_i32 = arith.constant 0 : i32
    %c0_i32_0 = arith.constant 0 : i32
    %c0_i32_1 = arith.constant 0 : i32
    %c0_i32_2 = arith.constant 0 : i32
    return %arg0, %c0_i32, %c0_i32_0, %c0_i32_1 : i32, i32, i32, i32
  }
  func.func @transform_1(%arg0: i32) -> (i32, i32) {
    %c0_i32 = arith.constant 0 : i32
    %c0_i32_0 = arith.constant 0 : i32
    %c0_i32_1 = arith.constant 0 : i32
    return %c0_i32, %c0_i32_0 : i32, i32
  }
  func.func @transform_2(%arg0: i32) -> (i32, i32) {
    %c0_i32 = arith.constant 0 : i32
    %c0_i32_0 = arith.constant 0 : i32
    %c0_i32_1 = arith.constant 0 : i32
    return %c0_i32, %c0_i32_0 : i32, i32
  }
  func.func @transform_3(%arg0: i32) -> (i32, i32, i32) {
    %c0_i32 = arith.constant 0 : i32
    %c0_i32_0 = arith.constant 0 : i32
    %c0_i32_1 = arith.constant 0 : i32
    return %arg0, %c0_i32, %c0_i32_0 : i32, i32, i32
  }
}

module attributes {stable_mosaic.version = 11 : i64} {
  func.func @_fc_kernel(%arg0: i32, %arg1: memref<2x25x128xf32, #tpu.memory_space<vmem>>, %arg2: memref<25x128x128xf32, #tpu.memory_space<vmem>>, %arg3: memref<1x128xf32, #tpu.memory_space<vmem>>, %arg4: memref<128x128xf32, #tpu.memory_space<vmem>>, %arg5: memref<1x128xf32, #tpu.memory_space<vmem>>, %arg6: memref<128x128xf32, #tpu.memory_space<vmem>>, %arg7: memref<1x128xf32, #tpu.memory_space<vmem>>, %arg8: memref<2x128xf32, #tpu.memory_space<vmem>>) attributes {dimension_semantics = [#tpu.dimension_semantics<parallel>], iteration_bounds = array<i64: 1>, scalar_prefetch = 0 : i64, scratch_operands = 0 : i64, tpu.core_type = #tpu.core_type<tc>, window_params = [{transform_indices = @transform_0, window_bounds = array<i64: 2, 25, 128>}, {pipeline_mode = #tpu.pipeline_mode<synchronous>, transform_indices = @transform_1, window_bounds = array<i64: 25, 128, 128>}, {pipeline_mode = #tpu.pipeline_mode<synchronous>, transform_indices = @transform_2, window_bounds = array<i64: 1, 128>}, {pipeline_mode = #tpu.pipeline_mode<synchronous>, transform_indices = @transform_3, window_bounds = array<i64: 128, 128>}, {pipeline_mode = #tpu.pipeline_mode<synchronous>, transform_indices = @transform_4, window_bounds = array<i64: 1, 128>}, {pipeline_mode = #tpu.pipeline_mode<synchronous>, transform_indices = @transform_5, window_bounds = array<i64: 128, 128>}, {pipeline_mode = #tpu.pipeline_mode<synchronous>, transform_indices = @transform_6, window_bounds = array<i64: 1, 128>}, {transform_indices = @transform_7, window_bounds = array<i64: 2, 128>}]} {
    %cst = arith.constant 0.000000e+00 : f32
    %0 = vector.broadcast %cst : f32 to vector<2x128xf32>
    %c0 = arith.constant 0 : index
    %c0_0 = arith.constant 0 : index
    %c0_1 = arith.constant 0 : index
    %1 = vector.load %arg1[%c0, %c0_0, %c0_1] : memref<2x25x128xf32, #tpu.memory_space<vmem>>, vector<2x1x128xf32>
    %2 = vector.shape_cast %1 : vector<2x1x128xf32> to vector<2x128xf32>
    %c0_2 = arith.constant 0 : index
    %c0_3 = arith.constant 0 : index
    %c0_4 = arith.constant 0 : index
    %3 = vector.load %arg2[%c0_2, %c0_3, %c0_4] : memref<25x128x128xf32, #tpu.memory_space<vmem>>, vector<1x128x128xf32>
    %4 = vector.shape_cast %3 : vector<1x128x128xf32> to vector<128x128xf32>
    %cst_5 = arith.constant dense<0.000000e+00> : vector<2x128xf32>
    %5 = tpu.matmul %2, %4, %cst_5 {dimension_numbers = #tpu.dot_dimension_numbers<[1], [0], [0], [1], [0, 0, 1, 1], [], []>} : vector<2x128xf32>, vector<128x128xf32>, vector<2x128xf32> -> vector<2x128xf32>
    %6 = arith.addf %0, %5 : vector<2x128xf32>
    %c0_6 = arith.constant 0 : index
    %c1 = arith.constant 1 : index
    %c0_7 = arith.constant 0 : index
    %7 = vector.load %arg1[%c0_6, %c1, %c0_7] : memref<2x25x128xf32, #tpu.memory_space<vmem>>, vector<2x1x128xf32>
    %8 = vector.shape_cast %7 : vector<2x1x128xf32> to vector<2x128xf32>
    %c1_8 = arith.constant 1 : index
    %c0_9 = arith.constant 0 : index
    %c0_10 = arith.constant 0 : index
    %9 = vector.load %arg2[%c1_8, %c0_9, %c0_10] : memref<25x128x128xf32, #tpu.memory_space<vmem>>, vector<1x128x128xf32>
    %10 = vector.shape_cast %9 : vector<1x128x128xf32> to vector<128x128xf32>
    %cst_11 = arith.constant dense<0.000000e+00> : vector<2x128xf32>
    %11 = tpu.matmul %8, %10, %cst_11 {dimension_numbers = #tpu.dot_dimension_numbers<[1], [0], [0], [1], [0, 0, 1, 1], [], []>} : vector<2x128xf32>, vector<128x128xf32>, vector<2x128xf32> -> vector<2x128xf32>
    %12 = arith.addf %6, %11 : vector<2x128xf32>
    %c0_12 = arith.constant 0 : index
    %c2 = arith.constant 2 : index
    %c0_13 = arith.constant 0 : index
    %13 = vector.load %arg1[%c0_12, %c2, %c0_13] : memref<2x25x128xf32, #tpu.memory_space<vmem>>, vector<2x1x128xf32>
    %14 = vector.shape_cast %13 : vector<2x1x128xf32> to vector<2x128xf32>
    %c2_14 = arith.constant 2 : index
    %c0_15 = arith.constant 0 : index
    %c0_16 = arith.constant 0 : index
    %15 = vector.load %arg2[%c2_14, %c0_15, %c0_16] : memref<25x128x128xf32, #tpu.memory_space<vmem>>, vector<1x128x128xf32>
    %16 = vector.shape_cast %15 : vector<1x128x128xf32> to vector<128x128xf32>
    %cst_17 = arith.constant dense<0.000000e+00> : vector<2x128xf32>
    %17 = tpu.matmul %14, %16, %cst_17 {dimension_numbers = #tpu.dot_dimension_numbers<[1], [0], [0], [1], [0, 0, 1, 1], [], []>} : vector<2x128xf32>, vector<128x128xf32>, vector<2x128xf32> -> vector<2x128xf32>
    %18 = arith.addf %12, %17 : vector<2x128xf32>
    %c0_18 = arith.constant 0 : index
    %c3 = arith.constant 3 : index
    %c0_19 = arith.constant 0 : index
    %19 = vector.load %arg1[%c0_18, %c3, %c0_19] : memref<2x25x128xf32, #tpu.memory_space<vmem>>, vector<2x1x128xf32>
    %20 = vector.shape_cast %19 : vector<2x1x128xf32> to vector<2x128xf32>
    %c3_20 = arith.constant 3 : index
    %c0_21 = arith.constant 0 : index
    %c0_22 = arith.constant 0 : index
    %21 = vector.load %arg2[%c3_20, %c0_21, %c0_22] : memref<25x128x128xf32, #tpu.memory_space<vmem>>, vector<1x128x128xf32>
    %22 = vector.shape_cast %21 : vector<1x128x128xf32> to vector<128x128xf32>
    %cst_23 = arith.constant dense<0.000000e+00> : vector<2x128xf32>
    %23 = tpu.matmul %20, %22, %cst_23 {dimension_numbers = #tpu.dot_dimension_numbers<[1], [0], [0], [1], [0, 0, 1, 1], [], []>} : vector<2x128xf32>, vector<128x128xf32>, vector<2x128xf32> -> vector<2x128xf32>
    %24 = arith.addf %18, %23 : vector<2x128xf32>
    %c0_24 = arith.constant 0 : index
    %c4 = arith.constant 4 : index
    %c0_25 = arith.constant 0 : index
    %25 = vector.load %arg1[%c0_24, %c4, %c0_25] : memref<2x25x128xf32, #tpu.memory_space<vmem>>, vector<2x1x128xf32>
    %26 = vector.shape_cast %25 : vector<2x1x128xf32> to vector<2x128xf32>
    %c4_26 = arith.constant 4 : index
    %c0_27 = arith.constant 0 : index
    %c0_28 = arith.constant 0 : index
    %27 = vector.load %arg2[%c4_26, %c0_27, %c0_28] : memref<25x128x128xf32, #tpu.memory_space<vmem>>, vector<1x128x128xf32>
    %28 = vector.shape_cast %27 : vector<1x128x128xf32> to vector<128x128xf32>
    %cst_29 = arith.constant dense<0.000000e+00> : vector<2x128xf32>
    %29 = tpu.matmul %26, %28, %cst_29 {dimension_numbers = #tpu.dot_dimension_numbers<[1], [0], [0], [1], [0, 0, 1, 1], [], []>} : vector<2x128xf32>, vector<128x128xf32>, vector<2x128xf32> -> vector<2x128xf32>
    %30 = arith.addf %24, %29 : vector<2x128xf32>
    %c0_30 = arith.constant 0 : index
    %c5 = arith.constant 5 : index
    %c0_31 = arith.constant 0 : index
    %31 = vector.load %arg1[%c0_30, %c5, %c0_31] : memref<2x25x128xf32, #tpu.memory_space<vmem>>, vector<2x1x128xf32>
    %32 = vector.shape_cast %31 : vector<2x1x128xf32> to vector<2x128xf32>
    %c5_32 = arith.constant 5 : index
    %c0_33 = arith.constant 0 : index
    %c0_34 = arith.constant 0 : index
    %33 = vector.load %arg2[%c5_32, %c0_33, %c0_34] : memref<25x128x128xf32, #tpu.memory_space<vmem>>, vector<1x128x128xf32>
    %34 = vector.shape_cast %33 : vector<1x128x128xf32> to vector<128x128xf32>
    %cst_35 = arith.constant dense<0.000000e+00> : vector<2x128xf32>
    %35 = tpu.matmul %32, %34, %cst_35 {dimension_numbers = #tpu.dot_dimension_numbers<[1], [0], [0], [1], [0, 0, 1, 1], [], []>} : vector<2x128xf32>, vector<128x128xf32>, vector<2x128xf32> -> vector<2x128xf32>
    %36 = arith.addf %30, %35 : vector<2x128xf32>
    %c0_36 = arith.constant 0 : index
    %c6 = arith.constant 6 : index
    %c0_37 = arith.constant 0 : index
    %37 = vector.load %arg1[%c0_36, %c6, %c0_37] : memref<2x25x128xf32, #tpu.memory_space<vmem>>, vector<2x1x128xf32>
    %38 = vector.shape_cast %37 : vector<2x1x128xf32> to vector<2x128xf32>
    %c6_38 = arith.constant 6 : index
    %c0_39 = arith.constant 0 : index
    %c0_40 = arith.constant 0 : index
    %39 = vector.load %arg2[%c6_38, %c0_39, %c0_40] : memref<25x128x128xf32, #tpu.memory_space<vmem>>, vector<1x128x128xf32>
    %40 = vector.shape_cast %39 : vector<1x128x128xf32> to vector<128x128xf32>
    %cst_41 = arith.constant dense<0.000000e+00> : vector<2x128xf32>
    %41 = tpu.matmul %38, %40, %cst_41 {dimension_numbers = #tpu.dot_dimension_numbers<[1], [0], [0], [1], [0, 0, 1, 1], [], []>} : vector<2x128xf32>, vector<128x128xf32>, vector<2x128xf32> -> vector<2x128xf32>
    %42 = arith.addf %36, %41 : vector<2x128xf32>
    %c0_42 = arith.constant 0 : index
    %c7 = arith.constant 7 : index
    %c0_43 = arith.constant 0 : index
    %43 = vector.load %arg1[%c0_42, %c7, %c0_43] : memref<2x25x128xf32, #tpu.memory_space<vmem>>, vector<2x1x128xf32>
    %44 = vector.shape_cast %43 : vector<2x1x128xf32> to vector<2x128xf32>
    %c7_44 = arith.constant 7 : index
    %c0_45 = arith.constant 0 : index
    %c0_46 = arith.constant 0 : index
    %45 = vector.load %arg2[%c7_44, %c0_45, %c0_46] : memref<25x128x128xf32, #tpu.memory_space<vmem>>, vector<1x128x128xf32>
    %46 = vector.shape_cast %45 : vector<1x128x128xf32> to vector<128x128xf32>
    %cst_47 = arith.constant dense<0.000000e+00> : vector<2x128xf32>
    %47 = tpu.matmul %44, %46, %cst_47 {dimension_numbers = #tpu.dot_dimension_numbers<[1], [0], [0], [1], [0, 0, 1, 1], [], []>} : vector<2x128xf32>, vector<128x128xf32>, vector<2x128xf32> -> vector<2x128xf32>
    %48 = arith.addf %42, %47 : vector<2x128xf32>
    %c0_48 = arith.constant 0 : index
    %c8 = arith.constant 8 : index
    %c0_49 = arith.constant 0 : index
    %49 = vector.load %arg1[%c0_48, %c8, %c0_49] : memref<2x25x128xf32, #tpu.memory_space<vmem>>, vector<2x1x128xf32>
    %50 = vector.shape_cast %49 : vector<2x1x128xf32> to vector<2x128xf32>
    %c8_50 = arith.constant 8 : index
    %c0_51 = arith.constant 0 : index
    %c0_52 = arith.constant 0 : index
    %51 = vector.load %arg2[%c8_50, %c0_51, %c0_52] : memref<25x128x128xf32, #tpu.memory_space<vmem>>, vector<1x128x128xf32>
    %52 = vector.shape_cast %51 : vector<1x128x128xf32> to vector<128x128xf32>
    %cst_53 = arith.constant dense<0.000000e+00> : vector<2x128xf32>
    %53 = tpu.matmul %50, %52, %cst_53 {dimension_numbers = #tpu.dot_dimension_numbers<[1], [0], [0], [1], [0, 0, 1, 1], [], []>} : vector<2x128xf32>, vector<128x128xf32>, vector<2x128xf32> -> vector<2x128xf32>
    %54 = arith.addf %48, %53 : vector<2x128xf32>
    %c0_54 = arith.constant 0 : index
    %c9 = arith.constant 9 : index
    %c0_55 = arith.constant 0 : index
    %55 = vector.load %arg1[%c0_54, %c9, %c0_55] : memref<2x25x128xf32, #tpu.memory_space<vmem>>, vector<2x1x128xf32>
    %56 = vector.shape_cast %55 : vector<2x1x128xf32> to vector<2x128xf32>
    %c9_56 = arith.constant 9 : index
    %c0_57 = arith.constant 0 : index
    %c0_58 = arith.constant 0 : index
    %57 = vector.load %arg2[%c9_56, %c0_57, %c0_58] : memref<25x128x128xf32, #tpu.memory_space<vmem>>, vector<1x128x128xf32>
    %58 = vector.shape_cast %57 : vector<1x128x128xf32> to vector<128x128xf32>
    %cst_59 = arith.constant dense<0.000000e+00> : vector<2x128xf32>
    %59 = tpu.matmul %56, %58, %cst_59 {dimension_numbers = #tpu.dot_dimension_numbers<[1], [0], [0], [1], [0, 0, 1, 1], [], []>} : vector<2x128xf32>, vector<128x128xf32>, vector<2x128xf32> -> vector<2x128xf32>
    %60 = arith.addf %54, %59 : vector<2x128xf32>
    %c0_60 = arith.constant 0 : index
    %c10 = arith.constant 10 : index
    %c0_61 = arith.constant 0 : index
    %61 = vector.load %arg1[%c0_60, %c10, %c0_61] : memref<2x25x128xf32, #tpu.memory_space<vmem>>, vector<2x1x128xf32>
    %62 = vector.shape_cast %61 : vector<2x1x128xf32> to vector<2x128xf32>
    %c10_62 = arith.constant 10 : index
    %c0_63 = arith.constant 0 : index
    %c0_64 = arith.constant 0 : index
    %63 = vector.load %arg2[%c10_62, %c0_63, %c0_64] : memref<25x128x128xf32, #tpu.memory_space<vmem>>, vector<1x128x128xf32>
    %64 = vector.shape_cast %63 : vector<1x128x128xf32> to vector<128x128xf32>
    %cst_65 = arith.constant dense<0.000000e+00> : vector<2x128xf32>
    %65 = tpu.matmul %62, %64, %cst_65 {dimension_numbers = #tpu.dot_dimension_numbers<[1], [0], [0], [1], [0, 0, 1, 1], [], []>} : vector<2x128xf32>, vector<128x128xf32>, vector<2x128xf32> -> vector<2x128xf32>
    %66 = arith.addf %60, %65 : vector<2x128xf32>
    %c0_66 = arith.constant 0 : index
    %c11 = arith.constant 11 : index
    %c0_67 = arith.constant 0 : index
    %67 = vector.load %arg1[%c0_66, %c11, %c0_67] : memref<2x25x128xf32, #tpu.memory_space<vmem>>, vector<2x1x128xf32>
    %68 = vector.shape_cast %67 : vector<2x1x128xf32> to vector<2x128xf32>
    %c11_68 = arith.constant 11 : index
    %c0_69 = arith.constant 0 : index
    %c0_70 = arith.constant 0 : index
    %69 = vector.load %arg2[%c11_68, %c0_69, %c0_70] : memref<25x128x128xf32, #tpu.memory_space<vmem>>, vector<1x128x128xf32>
    %70 = vector.shape_cast %69 : vector<1x128x128xf32> to vector<128x128xf32>
    %cst_71 = arith.constant dense<0.000000e+00> : vector<2x128xf32>
    %71 = tpu.matmul %68, %70, %cst_71 {dimension_numbers = #tpu.dot_dimension_numbers<[1], [0], [0], [1], [0, 0, 1, 1], [], []>} : vector<2x128xf32>, vector<128x128xf32>, vector<2x128xf32> -> vector<2x128xf32>
    %72 = arith.addf %66, %71 : vector<2x128xf32>
    %c0_72 = arith.constant 0 : index
    %c12 = arith.constant 12 : index
    %c0_73 = arith.constant 0 : index
    %73 = vector.load %arg1[%c0_72, %c12, %c0_73] : memref<2x25x128xf32, #tpu.memory_space<vmem>>, vector<2x1x128xf32>
    %74 = vector.shape_cast %73 : vector<2x1x128xf32> to vector<2x128xf32>
    %c12_74 = arith.constant 12 : index
    %c0_75 = arith.constant 0 : index
    %c0_76 = arith.constant 0 : index
    %75 = vector.load %arg2[%c12_74, %c0_75, %c0_76] : memref<25x128x128xf32, #tpu.memory_space<vmem>>, vector<1x128x128xf32>
    %76 = vector.shape_cast %75 : vector<1x128x128xf32> to vector<128x128xf32>
    %cst_77 = arith.constant dense<0.000000e+00> : vector<2x128xf32>
    %77 = tpu.matmul %74, %76, %cst_77 {dimension_numbers = #tpu.dot_dimension_numbers<[1], [0], [0], [1], [0, 0, 1, 1], [], []>} : vector<2x128xf32>, vector<128x128xf32>, vector<2x128xf32> -> vector<2x128xf32>
    %78 = arith.addf %72, %77 : vector<2x128xf32>
    %c0_78 = arith.constant 0 : index
    %c13 = arith.constant 13 : index
    %c0_79 = arith.constant 0 : index
    %79 = vector.load %arg1[%c0_78, %c13, %c0_79] : memref<2x25x128xf32, #tpu.memory_space<vmem>>, vector<2x1x128xf32>
    %80 = vector.shape_cast %79 : vector<2x1x128xf32> to vector<2x128xf32>
    %c13_80 = arith.constant 13 : index
    %c0_81 = arith.constant 0 : index
    %c0_82 = arith.constant 0 : index
    %81 = vector.load %arg2[%c13_80, %c0_81, %c0_82] : memref<25x128x128xf32, #tpu.memory_space<vmem>>, vector<1x128x128xf32>
    %82 = vector.shape_cast %81 : vector<1x128x128xf32> to vector<128x128xf32>
    %cst_83 = arith.constant dense<0.000000e+00> : vector<2x128xf32>
    %83 = tpu.matmul %80, %82, %cst_83 {dimension_numbers = #tpu.dot_dimension_numbers<[1], [0], [0], [1], [0, 0, 1, 1], [], []>} : vector<2x128xf32>, vector<128x128xf32>, vector<2x128xf32> -> vector<2x128xf32>
    %84 = arith.addf %78, %83 : vector<2x128xf32>
    %c0_84 = arith.constant 0 : index
    %c14 = arith.constant 14 : index
    %c0_85 = arith.constant 0 : index
    %85 = vector.load %arg1[%c0_84, %c14, %c0_85] : memref<2x25x128xf32, #tpu.memory_space<vmem>>, vector<2x1x128xf32>
    %86 = vector.shape_cast %85 : vector<2x1x128xf32> to vector<2x128xf32>
    %c14_86 = arith.constant 14 : index
    %c0_87 = arith.constant 0 : index
    %c0_88 = arith.constant 0 : index
    %87 = vector.load %arg2[%c14_86, %c0_87, %c0_88] : memref<25x128x128xf32, #tpu.memory_space<vmem>>, vector<1x128x128xf32>
    %88 = vector.shape_cast %87 : vector<1x128x128xf32> to vector<128x128xf32>
    %cst_89 = arith.constant dense<0.000000e+00> : vector<2x128xf32>
    %89 = tpu.matmul %86, %88, %cst_89 {dimension_numbers = #tpu.dot_dimension_numbers<[1], [0], [0], [1], [0, 0, 1, 1], [], []>} : vector<2x128xf32>, vector<128x128xf32>, vector<2x128xf32> -> vector<2x128xf32>
    %90 = arith.addf %84, %89 : vector<2x128xf32>
    %c0_90 = arith.constant 0 : index
    %c15 = arith.constant 15 : index
    %c0_91 = arith.constant 0 : index
    %91 = vector.load %arg1[%c0_90, %c15, %c0_91] : memref<2x25x128xf32, #tpu.memory_space<vmem>>, vector<2x1x128xf32>
    %92 = vector.shape_cast %91 : vector<2x1x128xf32> to vector<2x128xf32>
    %c15_92 = arith.constant 15 : index
    %c0_93 = arith.constant 0 : index
    %c0_94 = arith.constant 0 : index
    %93 = vector.load %arg2[%c15_92, %c0_93, %c0_94] : memref<25x128x128xf32, #tpu.memory_space<vmem>>, vector<1x128x128xf32>
    %94 = vector.shape_cast %93 : vector<1x128x128xf32> to vector<128x128xf32>
    %cst_95 = arith.constant dense<0.000000e+00> : vector<2x128xf32>
    %95 = tpu.matmul %92, %94, %cst_95 {dimension_numbers = #tpu.dot_dimension_numbers<[1], [0], [0], [1], [0, 0, 1, 1], [], []>} : vector<2x128xf32>, vector<128x128xf32>, vector<2x128xf32> -> vector<2x128xf32>
    %96 = arith.addf %90, %95 : vector<2x128xf32>
    %c0_96 = arith.constant 0 : index
    %c16 = arith.constant 16 : index
    %c0_97 = arith.constant 0 : index
    %97 = vector.load %arg1[%c0_96, %c16, %c0_97] : memref<2x25x128xf32, #tpu.memory_space<vmem>>, vector<2x1x128xf32>
    %98 = vector.shape_cast %97 : vector<2x1x128xf32> to vector<2x128xf32>
    %c16_98 = arith.constant 16 : index
    %c0_99 = arith.constant 0 : index
    %c0_100 = arith.constant 0 : index
    %99 = vector.load %arg2[%c16_98, %c0_99, %c0_100] : memref<25x128x128xf32, #tpu.memory_space<vmem>>, vector<1x128x128xf32>
    %100 = vector.shape_cast %99 : vector<1x128x128xf32> to vector<128x128xf32>
    %cst_101 = arith.constant dense<0.000000e+00> : vector<2x128xf32>
    %101 = tpu.matmul %98, %100, %cst_101 {dimension_numbers = #tpu.dot_dimension_numbers<[1], [0], [0], [1], [0, 0, 1, 1], [], []>} : vector<2x128xf32>, vector<128x128xf32>, vector<2x128xf32> -> vector<2x128xf32>
    %102 = arith.addf %96, %101 : vector<2x128xf32>
    %c0_102 = arith.constant 0 : index
    %c17 = arith.constant 17 : index
    %c0_103 = arith.constant 0 : index
    %103 = vector.load %arg1[%c0_102, %c17, %c0_103] : memref<2x25x128xf32, #tpu.memory_space<vmem>>, vector<2x1x128xf32>
    %104 = vector.shape_cast %103 : vector<2x1x128xf32> to vector<2x128xf32>
    %c17_104 = arith.constant 17 : index
    %c0_105 = arith.constant 0 : index
    %c0_106 = arith.constant 0 : index
    %105 = vector.load %arg2[%c17_104, %c0_105, %c0_106] : memref<25x128x128xf32, #tpu.memory_space<vmem>>, vector<1x128x128xf32>
    %106 = vector.shape_cast %105 : vector<1x128x128xf32> to vector<128x128xf32>
    %cst_107 = arith.constant dense<0.000000e+00> : vector<2x128xf32>
    %107 = tpu.matmul %104, %106, %cst_107 {dimension_numbers = #tpu.dot_dimension_numbers<[1], [0], [0], [1], [0, 0, 1, 1], [], []>} : vector<2x128xf32>, vector<128x128xf32>, vector<2x128xf32> -> vector<2x128xf32>
    %108 = arith.addf %102, %107 : vector<2x128xf32>
    %c0_108 = arith.constant 0 : index
    %c18 = arith.constant 18 : index
    %c0_109 = arith.constant 0 : index
    %109 = vector.load %arg1[%c0_108, %c18, %c0_109] : memref<2x25x128xf32, #tpu.memory_space<vmem>>, vector<2x1x128xf32>
    %110 = vector.shape_cast %109 : vector<2x1x128xf32> to vector<2x128xf32>
    %c18_110 = arith.constant 18 : index
    %c0_111 = arith.constant 0 : index
    %c0_112 = arith.constant 0 : index
    %111 = vector.load %arg2[%c18_110, %c0_111, %c0_112] : memref<25x128x128xf32, #tpu.memory_space<vmem>>, vector<1x128x128xf32>
    %112 = vector.shape_cast %111 : vector<1x128x128xf32> to vector<128x128xf32>
    %cst_113 = arith.constant dense<0.000000e+00> : vector<2x128xf32>
    %113 = tpu.matmul %110, %112, %cst_113 {dimension_numbers = #tpu.dot_dimension_numbers<[1], [0], [0], [1], [0, 0, 1, 1], [], []>} : vector<2x128xf32>, vector<128x128xf32>, vector<2x128xf32> -> vector<2x128xf32>
    %114 = arith.addf %108, %113 : vector<2x128xf32>
    %c0_114 = arith.constant 0 : index
    %c19 = arith.constant 19 : index
    %c0_115 = arith.constant 0 : index
    %115 = vector.load %arg1[%c0_114, %c19, %c0_115] : memref<2x25x128xf32, #tpu.memory_space<vmem>>, vector<2x1x128xf32>
    %116 = vector.shape_cast %115 : vector<2x1x128xf32> to vector<2x128xf32>
    %c19_116 = arith.constant 19 : index
    %c0_117 = arith.constant 0 : index
    %c0_118 = arith.constant 0 : index
    %117 = vector.load %arg2[%c19_116, %c0_117, %c0_118] : memref<25x128x128xf32, #tpu.memory_space<vmem>>, vector<1x128x128xf32>
    %118 = vector.shape_cast %117 : vector<1x128x128xf32> to vector<128x128xf32>
    %cst_119 = arith.constant dense<0.000000e+00> : vector<2x128xf32>
    %119 = tpu.matmul %116, %118, %cst_119 {dimension_numbers = #tpu.dot_dimension_numbers<[1], [0], [0], [1], [0, 0, 1, 1], [], []>} : vector<2x128xf32>, vector<128x128xf32>, vector<2x128xf32> -> vector<2x128xf32>
    %120 = arith.addf %114, %119 : vector<2x128xf32>
    %c0_120 = arith.constant 0 : index
    %c20 = arith.constant 20 : index
    %c0_121 = arith.constant 0 : index
    %121 = vector.load %arg1[%c0_120, %c20, %c0_121] : memref<2x25x128xf32, #tpu.memory_space<vmem>>, vector<2x1x128xf32>
    %122 = vector.shape_cast %121 : vector<2x1x128xf32> to vector<2x128xf32>
    %c20_122 = arith.constant 20 : index
    %c0_123 = arith.constant 0 : index
    %c0_124 = arith.constant 0 : index
    %123 = vector.load %arg2[%c20_122, %c0_123, %c0_124] : memref<25x128x128xf32, #tpu.memory_space<vmem>>, vector<1x128x128xf32>
    %124 = vector.shape_cast %123 : vector<1x128x128xf32> to vector<128x128xf32>
    %cst_125 = arith.constant dense<0.000000e+00> : vector<2x128xf32>
    %125 = tpu.matmul %122, %124, %cst_125 {dimension_numbers = #tpu.dot_dimension_numbers<[1], [0], [0], [1], [0, 0, 1, 1], [], []>} : vector<2x128xf32>, vector<128x128xf32>, vector<2x128xf32> -> vector<2x128xf32>
    %126 = arith.addf %120, %125 : vector<2x128xf32>
    %c0_126 = arith.constant 0 : index
    %c21 = arith.constant 21 : index
    %c0_127 = arith.constant 0 : index
    %127 = vector.load %arg1[%c0_126, %c21, %c0_127] : memref<2x25x128xf32, #tpu.memory_space<vmem>>, vector<2x1x128xf32>
    %128 = vector.shape_cast %127 : vector<2x1x128xf32> to vector<2x128xf32>
    %c21_128 = arith.constant 21 : index
    %c0_129 = arith.constant 0 : index
    %c0_130 = arith.constant 0 : index
    %129 = vector.load %arg2[%c21_128, %c0_129, %c0_130] : memref<25x128x128xf32, #tpu.memory_space<vmem>>, vector<1x128x128xf32>
    %130 = vector.shape_cast %129 : vector<1x128x128xf32> to vector<128x128xf32>
    %cst_131 = arith.constant dense<0.000000e+00> : vector<2x128xf32>
    %131 = tpu.matmul %128, %130, %cst_131 {dimension_numbers = #tpu.dot_dimension_numbers<[1], [0], [0], [1], [0, 0, 1, 1], [], []>} : vector<2x128xf32>, vector<128x128xf32>, vector<2x128xf32> -> vector<2x128xf32>
    %132 = arith.addf %126, %131 : vector<2x128xf32>
    %c0_132 = arith.constant 0 : index
    %c22 = arith.constant 22 : index
    %c0_133 = arith.constant 0 : index
    %133 = vector.load %arg1[%c0_132, %c22, %c0_133] : memref<2x25x128xf32, #tpu.memory_space<vmem>>, vector<2x1x128xf32>
    %134 = vector.shape_cast %133 : vector<2x1x128xf32> to vector<2x128xf32>
    %c22_134 = arith.constant 22 : index
    %c0_135 = arith.constant 0 : index
    %c0_136 = arith.constant 0 : index
    %135 = vector.load %arg2[%c22_134, %c0_135, %c0_136] : memref<25x128x128xf32, #tpu.memory_space<vmem>>, vector<1x128x128xf32>
    %136 = vector.shape_cast %135 : vector<1x128x128xf32> to vector<128x128xf32>
    %cst_137 = arith.constant dense<0.000000e+00> : vector<2x128xf32>
    %137 = tpu.matmul %134, %136, %cst_137 {dimension_numbers = #tpu.dot_dimension_numbers<[1], [0], [0], [1], [0, 0, 1, 1], [], []>} : vector<2x128xf32>, vector<128x128xf32>, vector<2x128xf32> -> vector<2x128xf32>
    %138 = arith.addf %132, %137 : vector<2x128xf32>
    %c0_138 = arith.constant 0 : index
    %c23 = arith.constant 23 : index
    %c0_139 = arith.constant 0 : index
    %139 = vector.load %arg1[%c0_138, %c23, %c0_139] : memref<2x25x128xf32, #tpu.memory_space<vmem>>, vector<2x1x128xf32>
    %140 = vector.shape_cast %139 : vector<2x1x128xf32> to vector<2x128xf32>
    %c23_140 = arith.constant 23 : index
    %c0_141 = arith.constant 0 : index
    %c0_142 = arith.constant 0 : index
    %141 = vector.load %arg2[%c23_140, %c0_141, %c0_142] : memref<25x128x128xf32, #tpu.memory_space<vmem>>, vector<1x128x128xf32>
    %142 = vector.shape_cast %141 : vector<1x128x128xf32> to vector<128x128xf32>
    %cst_143 = arith.constant dense<0.000000e+00> : vector<2x128xf32>
    %143 = tpu.matmul %140, %142, %cst_143 {dimension_numbers = #tpu.dot_dimension_numbers<[1], [0], [0], [1], [0, 0, 1, 1], [], []>} : vector<2x128xf32>, vector<128x128xf32>, vector<2x128xf32> -> vector<2x128xf32>
    %144 = arith.addf %138, %143 : vector<2x128xf32>
    %c0_144 = arith.constant 0 : index
    %c24 = arith.constant 24 : index
    %c0_145 = arith.constant 0 : index
    %145 = vector.load %arg1[%c0_144, %c24, %c0_145] : memref<2x25x128xf32, #tpu.memory_space<vmem>>, vector<2x1x128xf32>
    %146 = vector.shape_cast %145 : vector<2x1x128xf32> to vector<2x128xf32>
    %c24_146 = arith.constant 24 : index
    %c0_147 = arith.constant 0 : index
    %c0_148 = arith.constant 0 : index
    %147 = vector.load %arg2[%c24_146, %c0_147, %c0_148] : memref<25x128x128xf32, #tpu.memory_space<vmem>>, vector<1x128x128xf32>
    %148 = vector.shape_cast %147 : vector<1x128x128xf32> to vector<128x128xf32>
    %cst_149 = arith.constant dense<0.000000e+00> : vector<2x128xf32>
    %149 = tpu.matmul %146, %148, %cst_149 {dimension_numbers = #tpu.dot_dimension_numbers<[1], [0], [0], [1], [0, 0, 1, 1], [], []>} : vector<2x128xf32>, vector<128x128xf32>, vector<2x128xf32> -> vector<2x128xf32>
    %150 = arith.addf %144, %149 : vector<2x128xf32>
    %c0_150 = arith.constant 0 : index
    %c0_151 = arith.constant 0 : index
    %151 = vector.load %arg3[%c0_150, %c0_151] : memref<1x128xf32, #tpu.memory_space<vmem>>, vector<1x128xf32>
    %152 = vector.broadcast %151 : vector<1x128xf32> to vector<2x128xf32>
    %153 = arith.addf %150, %152 : vector<2x128xf32>
    %cst_152 = arith.constant 0.000000e+00 : f32
    %154 = vector.broadcast %cst_152 : f32 to vector<2x128xf32>
    %155 = arith.maximumf %153, %154 : vector<2x128xf32>
    %c0_153 = arith.constant 0 : index
    %c0_154 = arith.constant 0 : index
    %156 = vector.load %arg4[%c0_153, %c0_154] : memref<128x128xf32, #tpu.memory_space<vmem>>, vector<128x128xf32>
    %cst_155 = arith.constant dense<0.000000e+00> : vector<2x128xf32>
    %157 = tpu.matmul %155, %156, %cst_155 {dimension_numbers = #tpu.dot_dimension_numbers<[1], [0], [0], [1], [0, 0, 1, 1], [], []>} : vector<2x128xf32>, vector<128x128xf32>, vector<2x128xf32> -> vector<2x128xf32>
    %c0_156 = arith.constant 0 : index
    %c0_157 = arith.constant 0 : index
    %158 = vector.load %arg5[%c0_156, %c0_157] : memref<1x128xf32, #tpu.memory_space<vmem>>, vector<1x128xf32>
    %159 = vector.broadcast %158 : vector<1x128xf32> to vector<2x128xf32>
    %160 = arith.addf %157, %159 : vector<2x128xf32>
    %cst_158 = arith.constant 0.000000e+00 : f32
    %161 = vector.broadcast %cst_158 : f32 to vector<2x128xf32>
    %162 = arith.maximumf %160, %161 : vector<2x128xf32>
    %c0_159 = arith.constant 0 : index
    %c0_160 = arith.constant 0 : index
    %163 = vector.load %arg6[%c0_159, %c0_160] : memref<128x128xf32, #tpu.memory_space<vmem>>, vector<128x128xf32>
    %cst_161 = arith.constant dense<0.000000e+00> : vector<2x128xf32>
    %164 = tpu.matmul %162, %163, %cst_161 {dimension_numbers = #tpu.dot_dimension_numbers<[1], [0], [0], [1], [0, 0, 1, 1], [], []>} : vector<2x128xf32>, vector<128x128xf32>, vector<2x128xf32> -> vector<2x128xf32>
    %c0_162 = arith.constant 0 : index
    %c0_163 = arith.constant 0 : index
    %165 = vector.load %arg7[%c0_162, %c0_163] : memref<1x128xf32, #tpu.memory_space<vmem>>, vector<1x128xf32>
    %166 = vector.broadcast %165 : vector<1x128xf32> to vector<2x128xf32>
    %167 = arith.addf %164, %166 : vector<2x128xf32>
    %c0_164 = arith.constant 0 : index
    %c0_165 = arith.constant 0 : index
    %168 = vector.load %arg8[%c0_164, %c0_165] : memref<2x128xf32, #tpu.memory_space<vmem>>, vector<2x128xf32>
    tpu.vector_store %arg8[%c0_164, %c0_165], %167 {strides = array<i32>} : memref<2x128xf32, #tpu.memory_space<vmem>>, vector<2x128xf32>,
    return
  }
  func.func @transform_0(%arg0: i32) -> (i32, i32, i32) {
    %c0_i32 = arith.constant 0 : i32
    %c0_i32_0 = arith.constant 0 : i32
    %c0_i32_1 = arith.constant 0 : i32
    return %arg0, %c0_i32, %c0_i32_0 : i32, i32, i32
  }
  func.func @transform_1(%arg0: i32) -> (i32, i32, i32) {
    %c0_i32 = arith.constant 0 : i32
    %c0_i32_0 = arith.constant 0 : i32
    %c0_i32_1 = arith.constant 0 : i32
    %c0_i32_2 = arith.constant 0 : i32
    return %c0_i32, %c0_i32_0, %c0_i32_1 : i32, i32, i32
  }
  func.func @transform_2(%arg0: i32) -> (i32, i32) {
    %c0_i32 = arith.constant 0 : i32
    %c0_i32_0 = arith.constant 0 : i32
    %c0_i32_1 = arith.constant 0 : i32
    return %c0_i32, %c0_i32_0 : i32, i32
  }
  func.func @transform_3(%arg0: i32) -> (i32, i32) {
    %c0_i32 = arith.constant 0 : i32
    %c0_i32_0 = arith.constant 0 : i32
    %c0_i32_1 = arith.constant 0 : i32
    return %c0_i32, %c0_i32_0 : i32, i32
  }
  func.func @transform_4(%arg0: i32) -> (i32, i32) {
    %c0_i32 = arith.constant 0 : i32
    %c0_i32_0 = arith.constant 0 : i32
    %c0_i32_1 = arith.constant 0 : i32
    return %c0_i32, %c0_i32_0 : i32, i32
  }
  func.func @transform_5(%arg0: i32) -> (i32, i32) {
    %c0_i32 = arith.constant 0 : i32
    %c0_i32_0 = arith.constant 0 : i32
    %c0_i32_1 = arith.constant 0 : i32
    return %c0_i32, %c0_i32_0 : i32, i32
  }
  func.func @transform_6(%arg0: i32) -> (i32, i32) {
    %c0_i32 = arith.constant 0 : i32
    %c0_i32_0 = arith.constant 0 : i32
    %c0_i32_1 = arith.constant 0 : i32
    return %c0_i32, %c0_i32_0 : i32, i32
  }
  func.func @transform_7(%arg0: i32) -> (i32, i32) {
    %c0_i32 = arith.constant 0 : i32
    %c0_i32_0 = arith.constant 0 : i32
    return %arg0, %c0_i32 : i32, i32
  }
}

</mosaic_0001>

<llo_original>
// kernel: lenet_forward.3
$region0: #{lenet_forward.3}
  #allocation0 [shape = 'u32[]', space=smem, size = 0x4, offset = 0x4, fixed_abs, tag = 'smem constant byte address 0x4 - core index']
  #allocation1 [shape = 'u32[72,128]{1,0:T(1,128)}', space=vmem, size = 0x9000, scoped, tag = 'internal scratch']
  %s0 = inlined_call_operand.vmem [shape: f32[2,4,196,128], index: 0, kind: input, shape index: {}]
  %s1 = inlined_call_operand.vmem [shape: f32[128,128], index: 1, kind: input, shape index: {}]
  %s2 = inlined_call_operand.vmem [shape: f32[1,128], index: 2, kind: input, shape index: {}]
  %s3 = inlined_call_operand.vmem [shape: f32[2,196,128], index: 3, kind: output, shape index: {}]
  %s4 = sld [smem:[#allocation0]]
  $region45: #{lenet_forward.3} parent=0
    _
  %s6 = ssub.s32 1, %s4
  %s7 = scalar_select 0, %s6, %s4
  loop: start=0, step=1, limit=4
  $region2: #{lenet_forward.3} parent=0 // loop_pre_header
    _
  $region3: #{lenet_forward.3} parent=0 // loop_header
    %s9 = sphi 0, %s13
    %p10 = scmp.ge.s32.totalorder %s9, 4
    %s19 = sphi 0, %s21
    %s22 = sphi 0, %s19
    %s23 = sphi 0, %s22
    %s39 = sphi 0, %s23
    %s43 = sphi 0, %s43
    %s45 = sphi 0, %s43
    %s46 = sphi 0, %s45
    %s60 = sphi 0, %s46
    %s64 = sphi 0, %s64
    %s66 = sphi 0, %s64
    %s67 = sphi 0, %s66
    %s81 = sphi 0, %s67
    %s87 = sphi 0, %s89
    %s90 = sphi 0, %s87
    %s91 = sphi 0, %s90
    %s107 = sphi 0, %s91
  $region4: #{lenet_forward.3} parent=0 // loop_header_branch
    %12 = sbr.rel (%p10) target = $region8
  $region5: #{lenet_forward.3} parent=0 // loop_body
    %s14 = ssub.s32 %s9, 1
    %s15 = ssub.s32 %s9, 2
    %s16 = sadd.s32 %s9, 1
    %s17 = ssub.s32 %s9, %s16
    %p18 = scmp.eq.s32.totalorder %s17, 0
    %s20 = sadd.s32 %s19, 1
    %s21 = scalar_select %p18, %s19, %s20
    %p24 = pneg %p18
    %p25 = scmp.eq.s32.totalorder %s9, 1
    %p26 = por %p24, %p25
    %p27 = scmp.ne.s32.totalorder %s19, %s22
    %p28 = scmp.eq.s32.totalorder %s9, 0
    %p29 = por %p27, %p28
    %p30 = scmp.ne.s32.totalorder %s19, %s22
    %p31 = scmp.eq.s32.totalorder %s14, 1
    %p32 = por %p30, %p31
    %p33 = scmp.ne.s32.totalorder %s22, %s23
    %p34 = scmp.eq.s32.totalorder %s14, 0
    %p35 = por %p33, %p34
    %p36 = scmp.ne.s32.totalorder %s22, %s23
    %p37 = scmp.eq.s32.totalorder %s15, 1
    %p38 = por %p36, %p37
    %p40 = scmp.ne.s32.totalorder %s23, %s39
    %p41 = scmp.eq.s32.totalorder %s15, 0
    %p42 = por %p40, %p41
    %s44 = sadd.s32 %s43, 1
    %p47 = scmp.eq.s32.totalorder %s9, 1
    %p48 = scmp.ne.s32.totalorder %s43, %s45
    %p49 = scmp.eq.s32.totalorder %s9, 0
    %p50 = por %p48, %p49
    %p51 = scmp.ne.s32.totalorder %s43, %s45
    %p52 = scmp.eq.s32.totalorder %s14, 1
    %p53 = por %p51, %p52
    %p54 = scmp.ne.s32.totalorder %s45, %s46
    %p55 = scmp.eq.s32.totalorder %s14, 0
    %p56 = por %p54, %p55
    %p57 = scmp.ne.s32.totalorder %s45, %s46
    %p58 = scmp.eq.s32.totalorder %s15, 1
    %p59 = por %p57, %p58
    %p61 = scmp.ne.s32.totalorder %s46, %s60
    %p62 = scmp.eq.s32.totalorder %s15, 0
    %p63 = por %p61, %p62
    %s65 = sadd.s32 %s64, 1
    %p68 = scmp.eq.s32.totalorder %s9, 1
    %p69 = scmp.ne.s32.totalorder %s64, %s66
    %p70 = scmp.eq.s32.totalorder %s9, 0
    %p71 = por %p69, %p70
    %p72 = scmp.ne.s32.totalorder %s64, %s66
    %p73 = scmp.eq.s32.totalorder %s14, 1
    %p74 = por %p72, %p73
    %p75 = scmp.ne.s32.totalorder %s66, %s67
    %p76 = scmp.eq.s32.totalorder %s14, 0
    %p77 = por %p75, %p76
    %p78 = scmp.ne.s32.totalorder %s66, %s67
    %p79 = scmp.eq.s32.totalorder %s15, 1
    %p80 = por %p78, %p79
    %p82 = scmp.ne.s32.totalorder %s67, %s81
    %p83 = scmp.eq.s32.totalorder %s15, 0
    %p84 = por %p82, %p83
    %s85 = ssub.s32 %s9, %s16
    %p86 = scmp.eq.s32.totalorder %s85, 0
    %s88 = sadd.s32 %s87, 1
    %s89 = scalar_select %p86, %s87, %s88
    %p92 = pneg %p86
    %p93 = scmp.eq.s32.totalorder %s9, 1
    %p94 = por %p92, %p93
    %p95 = scmp.ne.s32.totalorder %s87, %s90
    %p96 = scmp.eq.s32.totalorder %s9, 0
    %p97 = por %p95, %p96
    %p98 = scmp.ne.s32.totalorder %s87, %s90
    %p99 = scmp.eq.s32.totalorder %s14, 1
    %p100 = por %p98, %p99
    %p101 = scmp.ne.s32.totalorder %s90, %s91
    %p102 = scmp.eq.s32.totalorder %s14, 0
    %p103 = por %p101, %p102
    %p104 = scmp.ne.s32.totalorder %s90, %s91
    %p105 = scmp.eq.s32.totalorder %s15, 1
    %p106 = por %p104, %p105
    %p108 = scmp.ne.s32.totalorder %s91, %s107
    %p109 = scmp.eq.s32.totalorder %s15, 0
    %p110 = por %p108, %p109
    %p111 = scmp.le.s32.totalorder 1, %s9
    %p112 = scmp.lt.s32.totalorder %s9, 3
    %p113 = pnand %p111, %p112
    %p114 = pneg %p113
    // Predicated region
    $region9: #{lenet_forward.3} parent=5 // pred_check
      _
    $region10: #{lenet_forward.3} parent=5 // pred_check_branch
      %116 = sbr.rel (%p113) target = $region12
    $region11: #{lenet_forward.3} parent=5 // pred_region
      %s117 = ssub.s32 %s9, 1
      // Predicated region
      $region13: #{lenet_forward.3} parent=11 // pred_check
        %p118 = pneg %p56
      $region14: #{lenet_forward.3} parent=11 // pred_check_branch
        %120 = sbr.rel (%p118) target = $region16
      $region15: #{lenet_forward.3} parent=11 // pred_region
        _
      $region16: #{lenet_forward.3} parent=11 // pred_fallthru
        _
      // Predicated region
      $region17: #{lenet_forward.3} parent=11 // pred_check
        %p121 = pneg %p77
      $region18: #{lenet_forward.3} parent=11 // pred_check_branch
        %123 = sbr.rel (%p121) target = $region20
      $region19: #{lenet_forward.3} parent=11 // pred_region
        _
      $region20: #{lenet_forward.3} parent=11 // pred_fallthru
        _
    $region12: #{lenet_forward.3} parent=5 // pred_fallthru
      _
    %p124 = scmp.lt.s32.totalorder %s9, 2
    // Predicated region
    $region21: #{lenet_forward.3} parent=5 // pred_check
      %p125 = pneg %p124
    $region22: #{lenet_forward.3} parent=5 // pred_check_branch
      %127 = sbr.rel (%p125) target = $region24
    $region23: #{lenet_forward.3} parent=5 // pred_region
      // Predicated region
      $region25: #{lenet_forward.3} parent=23 // pred_check
        %p128 = pneg %p29
      $region26: #{lenet_forward.3} parent=23 // pred_check_branch
        %130 = sbr.rel (%p128) target = $region28
      $region27: #{lenet_forward.3} parent=23 // pred_region
        %p131 = scmp.lt.s32.totalorder %s9, 1
        %s132 = scalar_select %p131, %s9, 1
        %s133 = smul.addr %s132, 100
        %s134 = smul.addr %s133, 8
        %s135 = scalar_lea.vmem %s0, %s134
      $region28: #{lenet_forward.3} parent=23 // pred_fallthru
        _
    $region24: #{lenet_forward.3} parent=5 // pred_fallthru
      _
    %p136 = scmp.le.s32.totalorder 1, %s9
    %p137 = scmp.lt.s32.totalorder %s9, 3
    %p138 = pnand %p136, %p137
    %p139 = pneg %p138
    // Predicated region
    $region29: #{lenet_forward.3} parent=5 // pred_check
      _
    $region30: #{lenet_forward.3} parent=5 // pred_check_branch
      %141 = sbr.rel (%p138) target = $region32
    $region31: #{lenet_forward.3} parent=5 // pred_region
      %s142 = ssub.s32 %s9, 1
      %p143 = scmp.lt.s32.totalorder %s14, 1
      %s144 = scalar_select %p143, %s14, 1
      %s145 = smul.addr %s144, 100
      %s146 = smul.addr %s145, 8
      %s147 = scalar_lea.vmem %s0, %s146
      %p148 = pneg %p35
      %p149 = pneg %p32
      %p150 = pneg %p56
      %p151 = pneg %p53
      %p152 = pneg %p77
      %p153 = pneg %p74
      %p154 = pneg %p103
      %p155 = pneg %p100
      %p156 = scmp.lt.s32.totalorder %s14, 1
      %s157 = scalar_select %p156, %s14, 1
      %s158 = smul.addr %s157, 25
      %s159 = smul.addr %s158, 8
      %s160 = scalar_lea.vmem %s3, %s159
      %p161 = scmp.lt.s32.totalorder %s14, 1
      %s162 = scalar_select %p161, %s14, 1
      %s163 = smul.addr %s162, 100
      %s164 = smul.addr %s163, 8
      %s165 = scalar_lea.vmem %s0, %s164
      %p166 = scmp.lt.s32.totalorder %s14, 1
      %s167 = scalar_select %p166, %s14, 1
      %s168 = smul.addr %s167, 25
      %s169 = smul.addr %s168, 8
      %s170 = scalar_lea.vmem %s3, %s169
      %v171 = vld [vmem:[%s1] sm:$0xff]
      %v172 = vld [vmem:[%s1 + $0x8] sm:$0xff]
      %v173 = vld [vmem:[%s1 + $0x10] sm:$0xff]
      %v174 = vld [vmem:[%s1 + $0x18] sm:$0xff]
      %v175 = vld [vmem:[%s1 + $0x20] sm:$0xff]
      %v176 = vld [vmem:[%s1 + $0x28] sm:$0xff]
      %v177 = vld [vmem:[%s1 + $0x30] sm:$0xff]
      %v178 = vld [vmem:[%s1 + $0x38] sm:$0xff]
      %v179 = vld [vmem:[%s1 + $0x40] sm:$0xff]
      %v180 = vld [vmem:[%s1 + $0x48] sm:$0xff]
      %v181 = vld [vmem:[%s1 + $0x50] sm:$0xff]
      %v182 = vld [vmem:[%s1 + $0x58] sm:$0xff]
      %v183 = vld [vmem:[%s1 + $0x60] sm:$0xff]
      %v184 = vld [vmem:[%s1 + $0x68] sm:$0xff]
      %v185 = vld [vmem:[%s1 + $0x70] sm:$0xff]
      %v186 = vld [vmem:[%s1 + $0x78] sm:$0xff]
      %v187 = vld [vmem:[%s2] sm:$0x1]
      %v188 = vld [vmem:[%s165] sm:$0xff]
      %v189 = vld [vmem:[%s165 + $0x8] sm:$0xff]
      %v190 = vld [vmem:[%s165 + $0x10] sm:$0xff]
      %v191 = vld [vmem:[%s165 + $0x18] sm:$0xff]
      %v192 = vld [vmem:[%s165 + $0x20] sm:$0xff]
      %v193 = vld [vmem:[%s165 + $0x28] sm:$0xff]
      %v194 = vld [vmem:[%s165 + $0x30] sm:$0xff]
      %v195 = vld [vmem:[%s165 + $0x38] sm:$0xff]
      %v196 = vld [vmem:[%s165 + $0x40] sm:$0xff]
      %v197 = vld [vmem:[%s165 + $0x48] sm:$0xff]
      %v198 = vld [vmem:[%s165 + $0x50] sm:$0xff]
      %v199 = vld [vmem:[%s165 + $0x58] sm:$0xff]
      %v200 = vld [vmem:[%s165 + $0x60] sm:$0xff]
      %v201 = vld [vmem:[%s165 + $0x68] sm:$0xff]
      %v202 = vld [vmem:[%s165 + $0x70] sm:$0xff]
      %v203 = vld [vmem:[%s165 + $0x78] sm:$0xff]
      %v204 = vld [vmem:[%s165 + $0x80] sm:$0xff]
      %v205 = vld [vmem:[%s165 + $0x88] sm:$0xff]
      %v206 = vld [vmem:[%s165 + $0x90] sm:$0xff]
      %v207 = vld [vmem:[%s165 + $0x98] sm:$0xff]
      %v208 = vld [vmem:[%s165 + $0xa0] sm:$0xff]
      %v209 = vld [vmem:[%s165 + $0xa8] sm:$0xff]
      %v210 = vld [vmem:[%s165 + $0xb0] sm:$0xff]
      %v211 = vld [vmem:[%s165 + $0xb8] sm:$0xff]
      %v212 = vld [vmem:[%s165 + $0xc0] sm:$0xf]
      %v214 = vperm.slane %v187, 0
      %216 = vmatpush.msra.mxu0 %v186
      %217 = vmatpush.msra.mxu0 %v185
      %218 = vmatpush.msra.mxu0 %v184
      %219 = vmatpush.msra.mxu0 %v183
      %220 = vmatpush.msra.mxu0 %v182
      %221 = vmatpush.msra.mxu0 %v181
      %222 = vmatpush.msra.mxu0 %v180
      %223 = vmatpush.msra.mxu0 %v179
      %224 = vmatpush.msra.mxu0 %v178
      %225 = vmatpush.msra.mxu0 %v177
      %226 = vmatpush.msra.mxu0 %v176
      %227 = vmatpush.msra.mxu0 %v175
      %228 = vmatpush.msra.mxu0 %v174
      %229 = vmatpush.msra.mxu0 %v173
      %230 = vmatpush.msra.mxu0 %v172
      %231 = vmatpush.msra.mxu0 %v171
      %232 = vmatmul.f32.gmra.mxu0 %v188
      %v233 = vpop.f32.mrf.mxu0
      %v234 = vadd.f32 %v214, %v233
      %235 = vmatmul.f32.gmra.mxu0 %v189
      %v236 = vpop.f32.mrf.mxu0
      %v237 = vadd.f32 %v214, %v236
      %238 = vmatmul.f32.gmra.mxu0 %v190
      %v239 = vpop.f32.mrf.mxu0
      %v240 = vadd.f32 %v214, %v239
      %241 = vmatmul.f32.gmra.mxu0 %v191
      %v242 = vpop.f32.mrf.mxu0
      %v243 = vadd.f32 %v214, %v242
      %244 = vmatmul.f32.gmra.mxu0 %v192
      %v245 = vpop.f32.mrf.mxu0
      %v246 = vadd.f32 %v214, %v245
      %247 = vmatmul.f32.gmra.mxu0 %v193
      %v248 = vpop.f32.mrf.mxu0
      %v249 = vadd.f32 %v214, %v248
      %250 = vmatmul.f32.gmra.mxu0 %v194
      %v251 = vpop.f32.mrf.mxu0
      %v252 = vadd.f32 %v214, %v251
      %253 = vmatmul.f32.gmra.mxu0 %v195
      %v254 = vpop.f32.mrf.mxu0
      %v255 = vadd.f32 %v214, %v254
      %256 = vmatmul.f32.gmra.mxu0 %v196
      %v257 = vpop.f32.mrf.mxu0
      %v258 = vadd.f32 %v214, %v257
      %259 = vmatmul.f32.gmra.mxu0 %v197
      %v260 = vpop.f32.mrf.mxu0
      %v261 = vadd.f32 %v214, %v260
      %262 = vmatmul.f32.gmra.mxu0 %v198
      %v263 = vpop.f32.mrf.mxu0
      %v264 = vadd.f32 %v214, %v263
      %265 = vmatmul.f32.gmra.mxu0 %v199
      %v266 = vpop.f32.mrf.mxu0
      %v267 = vadd.f32 %v214, %v266
      %268 = vmatmul.f32.gmra.mxu0 %v200
      %v269 = vpop.f32.mrf.mxu0
      %v270 = vadd.f32 %v214, %v269
      %271 = vmatmul.f32.gmra.mxu0 %v201
      %v272 = vpop.f32.mrf.mxu0
      %v273 = vadd.f32 %v214, %v272
      %274 = vmatmul.f32.gmra.mxu0 %v202
      %v275 = vpop.f32.mrf.mxu0
      %v276 = vadd.f32 %v214, %v275
      %277 = vmatmul.f32.gmra.mxu0 %v203
      %v278 = vpop.f32.mrf.mxu0
      %v279 = vadd.f32 %v214, %v278
      %280 = vmatmul.f32.gmra.mxu0 %v204
      %v281 = vpop.f32.mrf.mxu0
      %v282 = vadd.f32 %v214, %v281
      %283 = vmatmul.f32.gmra.mxu0 %v205
      %v284 = vpop.f32.mrf.mxu0
      %v285 = vadd.f32 %v214, %v284
      %286 = vmatmul.f32.gmra.mxu0 %v206
      %v287 = vpop.f32.mrf.mxu0
      %v288 = vadd.f32 %v214, %v287
      %289 = vmatmul.f32.gmra.mxu0 %v207
      %v290 = vpop.f32.mrf.mxu0
      %v291 = vadd.f32 %v214, %v290
      %292 = vmatmul.f32.gmra.mxu0 %v208
      %v293 = vpop.f32.mrf.mxu0
      %v294 = vadd.f32 %v214, %v293
      %295 = vmatmul.f32.gmra.mxu0 %v209
      %v296 = vpop.f32.mrf.mxu0
      %v297 = vadd.f32 %v214, %v296
      %298 = vmatmul.f32.gmra.mxu0 %v210
      %v299 = vpop.f32.mrf.mxu0
      %v300 = vadd.f32 %v214, %v299
      %301 = vmatmul.f32.gmra.mxu0 %v211
      %v302 = vpop.f32.mrf.mxu0
      %v303 = vadd.f32 %v214, %v302
      %304 = vmatmul.f32.gmra.mxu0 %v212
      %v305 = vpop.f32.mrf.mxu0
      %v306 = vadd.f32 %v214, %v305
      %307 = vdwg.mxu0
      %v308 = vmax.f32 %v234, 0.0
      %v309 = vmax.f32 %v237, 0.0
      %v310 = vmax.f32 %v240, 0.0
      %v311 = vmax.f32 %v243, 0.0
      %v312 = vmax.f32 %v246, 0.0
      %v313 = vmax.f32 %v249, 0.0
      %v314 = vmax.f32 %v252, 0.0
      %v315 = vmax.f32 %v255, 0.0
      %v316 = vmax.f32 %v258, 0.0
      %v317 = vmax.f32 %v261, 0.0
      %v318 = vmax.f32 %v264, 0.0
      %v319 = vmax.f32 %v267, 0.0
      %v320 = vmax.f32 %v270, 0.0
      %v321 = vmax.f32 %v273, 0.0
      %v322 = vmax.f32 %v276, 0.0
      %v323 = vmax.f32 %v279, 0.0
      %v324 = vmax.f32 %v282, 0.0
      %v325 = vmax.f32 %v285, 0.0
      %v326 = vmax.f32 %v288, 0.0
      %v327 = vmax.f32 %v291, 0.0
      %v328 = vmax.f32 %v294, 0.0
      %v329 = vmax.f32 %v297, 0.0
      %v330 = vmax.f32 %v300, 0.0
      %v331 = vmax.f32 %v303, 0.0
      %v332 = vmax.f32 %v306, 0.0
      %s333 = scalar_lea.vmem %s165, 200
      %v334 = vld [vmem:[%s333] sm:$0xff]
      %v335 = vld [vmem:[%s333 + $0x8] sm:$0xff]
      %v336 = vld [vmem:[%s333 + $0x10] sm:$0xff]
      %v337 = vld [vmem:[%s333 + $0x18] sm:$0xff]
      %v338 = vld [vmem:[%s333 + $0x20] sm:$0xff]
      %v339 = vld [vmem:[%s333 + $0x28] sm:$0xff]
      %v340 = vld [vmem:[%s333 + $0x30] sm:$0xff]
      %v341 = vld [vmem:[%s333 + $0x38] sm:$0xff]
      %v342 = vld [vmem:[%s333 + $0x40] sm:$0xff]
      %v343 = vld [vmem:[%s333 + $0x48] sm:$0xff]
      %v344 = vld [vmem:[%s333 + $0x50] sm:$0xff]
      %v345 = vld [vmem:[%s333 + $0x58] sm:$0xff]
      %v346 = vld [vmem:[%s333 + $0x60] sm:$0xff]
      %v347 = vld [vmem:[%s333 + $0x68] sm:$0xff]
      %v348 = vld [vmem:[%s333 + $0x70] sm:$0xff]
      %v349 = vld [vmem:[%s333 + $0x78] sm:$0xff]
      %v350 = vld [vmem:[%s333 + $0x80] sm:$0xff]
      %v351 = vld [vmem:[%s333 + $0x88] sm:$0xff]
      %v352 = vld [vmem:[%s333 + $0x90] sm:$0xff]
      %v353 = vld [vmem:[%s333 + $0x98] sm:$0xff]
      %v354 = vld [vmem:[%s333 + $0xa0] sm:$0xff]
      %v355 = vld [vmem:[%s333 + $0xa8] sm:$0xff]
      %v356 = vld [vmem:[%s333 + $0xb0] sm:$0xff]
      %v357 = vld [vmem:[%s333 + $0xb8] sm:$0xff]
      %v358 = vld [vmem:[%s333 + $0xc0] sm:$0xf]
      %359 = vmatpush.msra.mxu0 %v186
      %360 = vmatpush.msra.mxu0 %v185
      %361 = vmatpush.msra.mxu0 %v184
      %362 = vmatpush.msra.mxu0 %v183
      %363 = vmatpush.msra.mxu0 %v182
      %364 = vmatpush.msra.mxu0 %v181
      %365 = vmatpush.msra.mxu0 %v180
      %366 = vmatpush.msra.mxu0 %v179
      %367 = vmatpush.msra.mxu0 %v178
      %368 = vmatpush.msra.mxu0 %v177
      %369 = vmatpush.msra.mxu0 %v176
      %370 = vmatpush.msra.mxu0 %v175
      %371 = vmatpush.msra.mxu0 %v174
      %372 = vmatpush.msra.mxu0 %v173
      %373 = vmatpush.msra.mxu0 %v172
      %374 = vmatpush.msra.mxu0 %v171
      %375 = vmatmul.f32.gmra.mxu0 %v334
      %v376 = vpop.f32.mrf.mxu0
      %v377 = vadd.f32 %v214, %v376
      %378 = vmatmul.f32.gmra.mxu0 %v335
      %v379 = vpop.f32.mrf.mxu0
      %v380 = vadd.f32 %v214, %v379
      %381 = vmatmul.f32.gmra.mxu0 %v336
      %v382 = vpop.f32.mrf.mxu0
      %v383 = vadd.f32 %v214, %v382
      %384 = vmatmul.f32.gmra.mxu0 %v337
      %v385 = vpop.f32.mrf.mxu0
      %v386 = vadd.f32 %v214, %v385
      %387 = vmatmul.f32.gmra.mxu0 %v338
      %v388 = vpop.f32.mrf.mxu0
      %v389 = vadd.f32 %v214, %v388
      %390 = vmatmul.f32.gmra.mxu0 %v339
      %v391 = vpop.f32.mrf.mxu0
      %v392 = vadd.f32 %v214, %v391
      %393 = vmatmul.f32.gmra.mxu0 %v340
      %v394 = vpop.f32.mrf.mxu0
      %v395 = vadd.f32 %v214, %v394
      %396 = vmatmul.f32.gmra.mxu0 %v341
      %v397 = vpop.f32.mrf.mxu0
      %v398 = vadd.f32 %v214, %v397
      %399 = vmatmul.f32.gmra.mxu0 %v342
      %v400 = vpop.f32.mrf.mxu0
      %v401 = vadd.f32 %v214, %v400
      %402 = vmatmul.f32.gmra.mxu0 %v343
      %v403 = vpop.f32.mrf.mxu0
      %v404 = vadd.f32 %v214, %v403
      %405 = vmatmul.f32.gmra.mxu0 %v344
      %v406 = vpop.f32.mrf.mxu0
      %v407 = vadd.f32 %v214, %v406
      %408 = vmatmul.f32.gmra.mxu0 %v345
      %v409 = vpop.f32.mrf.mxu0
      %v410 = vadd.f32 %v214, %v409
      %411 = vmatmul.f32.gmra.mxu0 %v346
      %v412 = vpop.f32.mrf.mxu0
      %v413 = vadd.f32 %v214, %v412
      %414 = vmatmul.f32.gmra.mxu0 %v347
      %v415 = vpop.f32.mrf.mxu0
      %v416 = vadd.f32 %v214, %v415
      %417 = vmatmul.f32.gmra.mxu0 %v348
      %v418 = vpop.f32.mrf.mxu0
      %v419 = vadd.f32 %v214, %v418
      %420 = vmatmul.f32.gmra.mxu0 %v349
      %v421 = vpop.f32.mrf.mxu0
      %v422 = vadd.f32 %v214, %v421
      %423 = vmatmul.f32.gmra.mxu0 %v350
      %v424 = vpop.f32.mrf.mxu0
      %v425 = vadd.f32 %v214, %v424
      %426 = vmatmul.f32.gmra.mxu0 %v351
      %v427 = vpop.f32.mrf.mxu0
      %v428 = vadd.f32 %v214, %v427
      %429 = vmatmul.f32.gmra.mxu0 %v352
      %v430 = vpop.f32.mrf.mxu0
      %v431 = vadd.f32 %v214, %v430
      %432 = vmatmul.f32.gmra.mxu0 %v353
      %v433 = vpop.f32.mrf.mxu0
      %v434 = vadd.f32 %v214, %v433
      %435 = vmatmul.f32.gmra.mxu0 %v354
      %v436 = vpop.f32.mrf.mxu0
      %v437 = vadd.f32 %v214, %v436
      %438 = vmatmul.f32.gmra.mxu0 %v355
      %v439 = vpop.f32.mrf.mxu0
      %v440 = vadd.f32 %v214, %v439
      %441 = vmatmul.f32.gmra.mxu0 %v356
      %v442 = vpop.f32.mrf.mxu0
      %v443 = vadd.f32 %v214, %v442
      %444 = vmatmul.f32.gmra.mxu0 %v357
      %v445 = vpop.f32.mrf.mxu0
      %v446 = vadd.f32 %v214, %v445
      %447 = vmatmul.f32.gmra.mxu0 %v358
      %v448 = vpop.f32.mrf.mxu0
      %v449 = vadd.f32 %v214, %v448
      %450 = vdwg.mxu0
      %v451 = vmax.f32 %v377, 0.0
      %v452 = vmax.f32 %v380, 0.0
      %v453 = vmax.f32 %v383, 0.0
      %v454 = vmax.f32 %v386, 0.0
      %v455 = vmax.f32 %v389, 0.0
      %v456 = vmax.f32 %v392, 0.0
      %v457 = vmax.f32 %v395, 0.0
      %v458 = vmax.f32 %v398, 0.0
      %v459 = vmax.f32 %v401, 0.0
      %v460 = vmax.f32 %v404, 0.0
      %v461 = vmax.f32 %v407, 0.0
      %v462 = vmax.f32 %v410, 0.0
      %v463 = vmax.f32 %v413, 0.0
      %v464 = vmax.f32 %v416, 0.0
      %v465 = vmax.f32 %v419, 0.0
      %v466 = vmax.f32 %v422, 0.0
      %v467 = vmax.f32 %v425, 0.0
      %v468 = vmax.f32 %v428, 0.0
      %v469 = vmax.f32 %v431, 0.0
      %v470 = vmax.f32 %v434, 0.0
      %v471 = vmax.f32 %v437, 0.0
      %v472 = vmax.f32 %v440, 0.0
      %v473 = vmax.f32 %v443, 0.0
      %v474 = vmax.f32 %v446, 0.0
      %v475 = vmax.f32 %v449, 0.0
      %v476 = vmax.f32 %v308, %v451
      %v477 = vmax.f32 %v309, %v452
      %v478 = vmax.f32 %v310, %v453
      %v479 = vmax.f32 %v311, %v454
      %v480 = vmax.f32 %v312, %v455
      %v481 = vmax.f32 %v313, %v456
      %v482 = vmax.f32 %v314, %v457
      %v483 = vmax.f32 %v315, %v458
      %v484 = vmax.f32 %v316, %v459
      %v485 = vmax.f32 %v317, %v460
      %v486 = vmax.f32 %v318, %v461
      %v487 = vmax.f32 %v319, %v462
      %v488 = vmax.f32 %v320, %v463
      %v489 = vmax.f32 %v321, %v464
      %v490 = vmax.f32 %v322, %v465
      %v491 = vmax.f32 %v323, %v466
      %v492 = vmax.f32 %v324, %v467
      %v493 = vmax.f32 %v325, %v468
      %v494 = vmax.f32 %v326, %v469
      %v495 = vmax.f32 %v327, %v470
      %v496 = vmax.f32 %v328, %v471
      %v497 = vmax.f32 %v329, %v472
      %v498 = vmax.f32 %v330, %v473
      %v499 = vmax.f32 %v331, %v474
      %v500 = vmax.f32 %v332, %v475
      %s501 = scalar_lea.vmem %s165, 400
      %v502 = vld [vmem:[%s501] sm:$0xff]
      %v503 = vld [vmem:[%s501 + $0x8] sm:$0xff]
      %v504 = vld [vmem:[%s501 + $0x10] sm:$0xff]
      %v505 = vld [vmem:[%s501 + $0x18] sm:$0xff]
      %v506 = vld [vmem:[%s501 + $0x20] sm:$0xff]
      %v507 = vld [vmem:[%s501 + $0x28] sm:$0xff]
      %v508 = vld [vmem:[%s501 + $0x30] sm:$0xff]
      %v509 = vld [vmem:[%s501 + $0x38] sm:$0xff]
      %v510 = vld [vmem:[%s501 + $0x40] sm:$0xff]
      %v511 = vld [vmem:[%s501 + $0x48] sm:$0xff]
      %v512 = vld [vmem:[%s501 + $0x50] sm:$0xff]
      %v513 = vld [vmem:[%s501 + $0x58] sm:$0xff]
      %v514 = vld [vmem:[%s501 + $0x60] sm:$0xff]
      %v515 = vld [vmem:[%s501 + $0x68] sm:$0xff]
      %v516 = vld [vmem:[%s501 + $0x70] sm:$0xff]
      %v517 = vld [vmem:[%s501 + $0x78] sm:$0xff]
      %v518 = vld [vmem:[%s501 + $0x80] sm:$0xff]
      %v519 = vld [vmem:[%s501 + $0x88] sm:$0xff]
      %v520 = vld [vmem:[%s501 + $0x90] sm:$0xff]
      %v521 = vld [vmem:[%s501 + $0x98] sm:$0xff]
      %v522 = vld [vmem:[%s501 + $0xa0] sm:$0xff]
      %v523 = vld [vmem:[%s501 + $0xa8] sm:$0xff]
      %v524 = vld [vmem:[%s501 + $0xb0] sm:$0xff]
      %v525 = vld [vmem:[%s501 + $0xb8] sm:$0xff]
      %v526 = vld [vmem:[%s501 + $0xc0] sm:$0xf]
      %527 = vmatpush.msra.mxu0 %v186
      %528 = vmatpush.msra.mxu0 %v185
      %529 = vmatpush.msra.mxu0 %v184
      %530 = vmatpush.msra.mxu0 %v183
      %531 = vmatpush.msra.mxu0 %v182
      %532 = vmatpush.msra.mxu0 %v181
      %533 = vmatpush.msra.mxu0 %v180
      %534 = vmatpush.msra.mxu0 %v179
      %535 = vmatpush.msra.mxu0 %v178
      %536 = vmatpush.msra.mxu0 %v177
      %537 = vmatpush.msra.mxu0 %v176
      %538 = vmatpush.msra.mxu0 %v175
      %539 = vmatpush.msra.mxu0 %v174
      %540 = vmatpush.msra.mxu0 %v173
      %541 = vmatpush.msra.mxu0 %v172
      %542 = vmatpush.msra.mxu0 %v171
      %543 = vmatmul.f32.gmra.mxu0 %v502
      %v544 = vpop.f32.mrf.mxu0
      %v545 = vadd.f32 %v214, %v544
      %546 = vmatmul.f32.gmra.mxu0 %v503
      %v547 = vpop.f32.mrf.mxu0
      %v548 = vadd.f32 %v214, %v547
      %549 = vmatmul.f32.gmra.mxu0 %v504
      %v550 = vpop.f32.mrf.mxu0
      %v551 = vadd.f32 %v214, %v550
      %552 = vmatmul.f32.gmra.mxu0 %v505
      %v553 = vpop.f32.mrf.mxu0
      %v554 = vadd.f32 %v214, %v553
      %555 = vmatmul.f32.gmra.mxu0 %v506
      %v556 = vpop.f32.mrf.mxu0
      %v557 = vadd.f32 %v214, %v556
      %558 = vmatmul.f32.gmra.mxu0 %v507
      %v559 = vpop.f32.mrf.mxu0
      %v560 = vadd.f32 %v214, %v559
      %561 = vmatmul.f32.gmra.mxu0 %v508
      %v562 = vpop.f32.mrf.mxu0
      %v563 = vadd.f32 %v214, %v562
      %564 = vmatmul.f32.gmra.mxu0 %v509
      %v565 = vpop.f32.mrf.mxu0
      %v566 = vadd.f32 %v214, %v565
      %567 = vmatmul.f32.gmra.mxu0 %v510
      %v568 = vpop.f32.mrf.mxu0
      %v569 = vadd.f32 %v214, %v568
      %570 = vmatmul.f32.gmra.mxu0 %v511
      %v571 = vpop.f32.mrf.mxu0
      %v572 = vadd.f32 %v214, %v571
      %573 = vmatmul.f32.gmra.mxu0 %v512
      %v574 = vpop.f32.mrf.mxu0
      %v575 = vadd.f32 %v214, %v574
      %576 = vmatmul.f32.gmra.mxu0 %v513
      %v577 = vpop.f32.mrf.mxu0
      %v578 = vadd.f32 %v214, %v577
      %579 = vmatmul.f32.gmra.mxu0 %v514
      %v580 = vpop.f32.mrf.mxu0
      %v581 = vadd.f32 %v214, %v580
      %582 = vmatmul.f32.gmra.mxu0 %v515
      %v583 = vpop.f32.mrf.mxu0
      %v584 = vadd.f32 %v214, %v583
      %585 = vmatmul.f32.gmra.mxu0 %v516
      %v586 = vpop.f32.mrf.mxu0
      %v587 = vadd.f32 %v214, %v586
      %588 = vmatmul.f32.gmra.mxu0 %v517
      %v589 = vpop.f32.mrf.mxu0
      %v590 = vadd.f32 %v214, %v589
      %591 = vmatmul.f32.gmra.mxu0 %v518
      %v592 = vpop.f32.mrf.mxu0
      %v593 = vadd.f32 %v214, %v592
      %594 = vmatmul.f32.gmra.mxu0 %v519
      %v595 = vpop.f32.mrf.mxu0
      %v596 = vadd.f32 %v214, %v595
      %597 = vmatmul.f32.gmra.mxu0 %v520
      %v598 = vpop.f32.mrf.mxu0
      %v599 = vadd.f32 %v214, %v598
      %600 = vmatmul.f32.gmra.mxu0 %v521
      %v601 = vpop.f32.mrf.mxu0
      %v602 = vadd.f32 %v214, %v601
      %603 = vmatmul.f32.gmra.mxu0 %v522
      %v604 = vpop.f32.mrf.mxu0
      %v605 = vadd.f32 %v214, %v604
      %606 = vmatmul.f32.gmra.mxu0 %v523
      %v607 = vpop.f32.mrf.mxu0
      %v608 = vadd.f32 %v214, %v607
      %609 = vmatmul.f32.gmra.mxu0 %v524
      %v610 = vpop.f32.mrf.mxu0
      %v611 = vadd.f32 %v214, %v610
      %612 = vmatmul.f32.gmra.mxu0 %v525
      %v613 = vpop.f32.mrf.mxu0
      %v614 = vadd.f32 %v214, %v613
      %615 = vmatmul.f32.gmra.mxu0 %v526
      %v616 = vpop.f32.mrf.mxu0
      %v617 = vadd.f32 %v214, %v616
      %618 = vdwg.mxu0
      %v619 = vmax.f32 %v545, 0.0
      %v620 = vmax.f32 %v548, 0.0
      %v621 = vmax.f32 %v551, 0.0
      %v622 = vmax.f32 %v554, 0.0
      %v623 = vmax.f32 %v557, 0.0
      %v624 = vmax.f32 %v560, 0.0
      %v625 = vmax.f32 %v563, 0.0
      %v626 = vmax.f32 %v566, 0.0
      %v627 = vmax.f32 %v569, 0.0
      %v628 = vmax.f32 %v572, 0.0
      %v629 = vmax.f32 %v575, 0.0
      %v630 = vmax.f32 %v578, 0.0
      %v631 = vmax.f32 %v581, 0.0
      %v632 = vmax.f32 %v584, 0.0
      %v633 = vmax.f32 %v587, 0.0
      %v634 = vmax.f32 %v590, 0.0
      %v635 = vmax.f32 %v593, 0.0
      %v636 = vmax.f32 %v596, 0.0
      %v637 = vmax.f32 %v599, 0.0
      %v638 = vmax.f32 %v602, 0.0
      %v639 = vmax.f32 %v605, 0.0
      %v640 = vmax.f32 %v608, 0.0
      %v641 = vmax.f32 %v611, 0.0
      %v642 = vmax.f32 %v614, 0.0
      %v643 = vmax.f32 %v617, 0.0
      %v644 = vmax.f32 %v476, %v619
      %v645 = vmax.f32 %v477, %v620
      %v646 = vmax.f32 %v478, %v621
      %v647 = vmax.f32 %v479, %v622
      %v648 = vmax.f32 %v480, %v623
      %v649 = vmax.f32 %v481, %v624
      %v650 = vmax.f32 %v482, %v625
      %v651 = vmax.f32 %v483, %v626
      %v652 = vmax.f32 %v484, %v627
      %v653 = vmax.f32 %v485, %v628
      %v654 = vmax.f32 %v486, %v629
      %v655 = vmax.f32 %v487, %v630
      %v656 = vmax.f32 %v488, %v631
      %v657 = vmax.f32 %v489, %v632
      %v658 = vmax.f32 %v490, %v633
      %v659 = vmax.f32 %v491, %v634
      %v660 = vmax.f32 %v492, %v635
      %v661 = vmax.f32 %v493, %v636
      %v662 = vmax.f32 %v494, %v637
      %v663 = vmax.f32 %v495, %v638
      %v664 = vmax.f32 %v496, %v639
      %v665 = vmax.f32 %v497, %v640
      %v666 = vmax.f32 %v498, %v641
      %v667 = vmax.f32 %v499, %v642
      %v668 = vmax.f32 %v500, %v643
      %s669 = scalar_lea.vmem %s165, 600
      %v670 = vld [vmem:[%s669] sm:$0xff]
      %v671 = vld [vmem:[%s669 + $0x8] sm:$0xff]
      %v672 = vld [vmem:[%s669 + $0x10] sm:$0xff]
      %v673 = vld [vmem:[%s669 + $0x18] sm:$0xff]
      %v674 = vld [vmem:[%s669 + $0x20] sm:$0xff]
      %v675 = vld [vmem:[%s669 + $0x28] sm:$0xff]
      %v676 = vld [vmem:[%s669 + $0x30] sm:$0xff]
      %v677 = vld [vmem:[%s669 + $0x38] sm:$0xff]
      %v678 = vld [vmem:[%s669 + $0x40] sm:$0xff]
      %v679 = vld [vmem:[%s669 + $0x48] sm:$0xff]
      %v680 = vld [vmem:[%s669 + $0x50] sm:$0xff]
      %v681 = vld [vmem:[%s669 + $0x58] sm:$0xff]
      %v682 = vld [vmem:[%s669 + $0x60] sm:$0xff]
      %v683 = vld [vmem:[%s669 + $0x68] sm:$0xff]
      %v684 = vld [vmem:[%s669 + $0x70] sm:$0xff]
      %v685 = vld [vmem:[%s669 + $0x78] sm:$0xff]
      %v686 = vld [vmem:[%s669 + $0x80] sm:$0xff]
      %v687 = vld [vmem:[%s669 + $0x88] sm:$0xff]
      %v688 = vld [vmem:[%s669 + $0x90] sm:$0xff]
      %v689 = vld [vmem:[%s669 + $0x98] sm:$0xff]
      %v690 = vld [vmem:[%s669 + $0xa0] sm:$0xff]
      %v691 = vld [vmem:[%s669 + $0xa8] sm:$0xff]
      %v692 = vld [vmem:[%s669 + $0xb0] sm:$0xff]
      %v693 = vld [vmem:[%s669 + $0xb8] sm:$0xff]
      %v694 = vld [vmem:[%s669 + $0xc0] sm:$0xf]
      %695 = vmatpush.msra.mxu0 %v186
      %696 = vmatpush.msra.mxu0 %v185
      %697 = vmatpush.msra.mxu0 %v184
      %698 = vmatpush.msra.mxu0 %v183
      %699 = vmatpush.msra.mxu0 %v182
      %700 = vmatpush.msra.mxu0 %v181
      %701 = vmatpush.msra.mxu0 %v180
      %702 = vmatpush.msra.mxu0 %v179
      %703 = vmatpush.msra.mxu0 %v178
      %704 = vmatpush.msra.mxu0 %v177
      %705 = vmatpush.msra.mxu0 %v176
      %706 = vmatpush.msra.mxu0 %v175
      %707 = vmatpush.msra.mxu0 %v174
      %708 = vmatpush.msra.mxu0 %v173
      %709 = vmatpush.msra.mxu0 %v172
      %710 = vmatpush.msra.mxu0 %v171
      %711 = vmatmul.f32.gmra.mxu0 %v670
      %v712 = vpop.f32.mrf.mxu0
      %v713 = vadd.f32 %v214, %v712
      %714 = vmatmul.f32.gmra.mxu0 %v671
      %v715 = vpop.f32.mrf.mxu0
      %v716 = vadd.f32 %v214, %v715
      %717 = vmatmul.f32.gmra.mxu0 %v672
      %v718 = vpop.f32.mrf.mxu0
      %v719 = vadd.f32 %v214, %v718
      %720 = vmatmul.f32.gmra.mxu0 %v673
      %v721 = vpop.f32.mrf.mxu0
      %v722 = vadd.f32 %v214, %v721
      %723 = vmatmul.f32.gmra.mxu0 %v674
      %v724 = vpop.f32.mrf.mxu0
      %v725 = vadd.f32 %v214, %v724
      %726 = vmatmul.f32.gmra.mxu0 %v675
      %v727 = vpop.f32.mrf.mxu0
      %v728 = vadd.f32 %v214, %v727
      %729 = vmatmul.f32.gmra.mxu0 %v676
      %v730 = vpop.f32.mrf.mxu0
      %v731 = vadd.f32 %v214, %v730
      %732 = vmatmul.f32.gmra.mxu0 %v677
      %v733 = vpop.f32.mrf.mxu0
      %v734 = vadd.f32 %v214, %v733
      %735 = vmatmul.f32.gmra.mxu0 %v678
      %v736 = vpop.f32.mrf.mxu0
      %v737 = vadd.f32 %v214, %v736
      %738 = vmatmul.f32.gmra.mxu0 %v679
      %v739 = vpop.f32.mrf.mxu0
      %v740 = vadd.f32 %v214, %v739
      %741 = vmatmul.f32.gmra.mxu0 %v680
      %v742 = vpop.f32.mrf.mxu0
      %v743 = vadd.f32 %v214, %v742
      %744 = vmatmul.f32.gmra.mxu0 %v681
      %v745 = vpop.f32.mrf.mxu0
      %v746 = vadd.f32 %v214, %v745
      %747 = vmatmul.f32.gmra.mxu0 %v682
      %v748 = vpop.f32.mrf.mxu0
      %v749 = vadd.f32 %v214, %v748
      %750 = vmatmul.f32.gmra.mxu0 %v683
      %v751 = vpop.f32.mrf.mxu0
      %v752 = vadd.f32 %v214, %v751
      %753 = vmatmul.f32.gmra.mxu0 %v684
      %v754 = vpop.f32.mrf.mxu0
      %v755 = vadd.f32 %v214, %v754
      %756 = vmatmul.f32.gmra.mxu0 %v685
      %v757 = vpop.f32.mrf.mxu0
      %v758 = vadd.f32 %v214, %v757
      %759 = vmatmul.f32.gmra.mxu0 %v686
      %v760 = vpop.f32.mrf.mxu0
      %v761 = vadd.f32 %v214, %v760
      %762 = vmatmul.f32.gmra.mxu0 %v687
      %v763 = vpop.f32.mrf.mxu0
      %v764 = vadd.f32 %v214, %v763
      %765 = vmatmul.f32.gmra.mxu0 %v688
      %v766 = vpop.f32.mrf.mxu0
      %v767 = vadd.f32 %v214, %v766
      %768 = vmatmul.f32.gmra.mxu0 %v689
      %v769 = vpop.f32.mrf.mxu0
      %v770 = vadd.f32 %v214, %v769
      %771 = vmatmul.f32.gmra.mxu0 %v690
      %v772 = vpop.f32.mrf.mxu0
      %v773 = vadd.f32 %v214, %v772
      %774 = vmatmul.f32.gmra.mxu0 %v691
      %v775 = vpop.f32.mrf.mxu0
      %v776 = vadd.f32 %v214, %v775
      %777 = vmatmul.f32.gmra.mxu0 %v692
      %v778 = vpop.f32.mrf.mxu0
      %v779 = vadd.f32 %v214, %v778
      %780 = vmatmul.f32.gmra.mxu0 %v693
      %v781 = vpop.f32.mrf.mxu0
      %v782 = vadd.f32 %v214, %v781
      %783 = vmatmul.f32.gmra.mxu0 %v694
      %v784 = vpop.f32.mrf.mxu0
      %v785 = vadd.f32 %v214, %v784
      %786 = vdwg.mxu0
      %v787 = vmax.f32 %v713, 0.0
      %v788 = vmax.f32 %v716, 0.0
      %v789 = vmax.f32 %v719, 0.0
      %v790 = vmax.f32 %v722, 0.0
      %v791 = vmax.f32 %v725, 0.0
      %v792 = vmax.f32 %v728, 0.0
      %v793 = vmax.f32 %v731, 0.0
      %v794 = vmax.f32 %v734, 0.0
      %v795 = vmax.f32 %v737, 0.0
      %v796 = vmax.f32 %v740, 0.0
      %v797 = vmax.f32 %v743, 0.0
      %v798 = vmax.f32 %v746, 0.0
      %v799 = vmax.f32 %v749, 0.0
      %v800 = vmax.f32 %v752, 0.0
      %v801 = vmax.f32 %v755, 0.0
      %v802 = vmax.f32 %v758, 0.0
      %v803 = vmax.f32 %v761, 0.0
      %v804 = vmax.f32 %v764, 0.0
      %v805 = vmax.f32 %v767, 0.0
      %v806 = vmax.f32 %v770, 0.0
      %v807 = vmax.f32 %v773, 0.0
      %v808 = vmax.f32 %v776, 0.0
      %v809 = vmax.f32 %v779, 0.0
      %v810 = vmax.f32 %v782, 0.0
      %v811 = vmax.f32 %v785, 0.0
      %v812 = vmax.f32 %v644, %v787
      %v813 = vmax.f32 %v645, %v788
      %v814 = vmax.f32 %v646, %v789
      %v815 = vmax.f32 %v647, %v790
      %v816 = vmax.f32 %v648, %v791
      %v817 = vmax.f32 %v649, %v792
      %v818 = vmax.f32 %v650, %v793
      %v819 = vmax.f32 %v651, %v794
      %v820 = vmax.f32 %v652, %v795
      %v821 = vmax.f32 %v653, %v796
      %v822 = vmax.f32 %v654, %v797
      %v823 = vmax.f32 %v655, %v798
      %v824 = vmax.f32 %v656, %v799
      %v825 = vmax.f32 %v657, %v800
      %v826 = vmax.f32 %v658, %v801
      %v827 = vmax.f32 %v659, %v802
      %v828 = vmax.f32 %v660, %v803
      %v829 = vmax.f32 %v661, %v804
      %v830 = vmax.f32 %v662, %v805
      %v831 = vmax.f32 %v663, %v806
      %v832 = vmax.f32 %v664, %v807
      %v833 = vmax.f32 %v665, %v808
      %v834 = vmax.f32 %v666, %v809
      %v835 = vmax.f32 %v667, %v810
      %v836 = vmax.f32 %v668, %v811
      %837 = vst [vmem:[%s170] sm:$0xff] %v812
      %838 = vst [vmem:[%s170 + $0x8] sm:$0xff] %v813
      %839 = vst [vmem:[%s170 + $0x10] sm:$0xff] %v814
      %840 = vst [vmem:[%s170 + $0x18] sm:$0xff] %v815
      %841 = vst [vmem:[%s170 + $0x20] sm:$0xff] %v816
      %842 = vst [vmem:[%s170 + $0x28] sm:$0xff] %v817
      %843 = vst [vmem:[%s170 + $0x30] sm:$0xff] %v818
      %844 = vst [vmem:[%s170 + $0x38] sm:$0xff] %v819
      %845 = vst [vmem:[%s170 + $0x40] sm:$0xff] %v820
      %846 = vst [vmem:[%s170 + $0x48] sm:$0xff] %v821
      %847 = vst [vmem:[%s170 + $0x50] sm:$0xff] %v822
      %848 = vst [vmem:[%s170 + $0x58] sm:$0xff] %v823
      %849 = vst [vmem:[%s170 + $0x60] sm:$0xff] %v824
      %850 = vst [vmem:[%s170 + $0x68] sm:$0xff] %v825
      %851 = vst [vmem:[%s170 + $0x70] sm:$0xff] %v826
      %852 = vst [vmem:[%s170 + $0x78] sm:$0xff] %v827
      %853 = vst [vmem:[%s170 + $0x80] sm:$0xff] %v828
      %854 = vst [vmem:[%s170 + $0x88] sm:$0xff] %v829
      %855 = vst [vmem:[%s170 + $0x90] sm:$0xff] %v830
      %856 = vst [vmem:[%s170 + $0x98] sm:$0xff] %v831
      %857 = vst [vmem:[%s170 + $0xa0] sm:$0xff] %v832
      %858 = vst [vmem:[%s170 + $0xa8] sm:$0xff] %v833
      %859 = vst [vmem:[%s170 + $0xb0] sm:$0xff] %v834
      %860 = vst [vmem:[%s170 + $0xb8] sm:$0xff] %v835
      %861 = vst [vmem:[%s170 + $0xc0] sm:$0xf] %v836
      %p862 = scmp.lt.s32.totalorder %s14, 1
      %s863 = scalar_select %p862, %s14, 1
      %s864 = smul.addr %s863, 25
      %s865 = smul.addr %s864, 8
      %s866 = scalar_lea.vmem %s3, %s865
      // Predicated region
      $region33: #{lenet_forward.3} parent=31 // pred_check
        %p867 = pneg %p100
      $region34: #{lenet_forward.3} parent=31 // pred_check_branch
        %869 = sbr.rel (%p867) target = $region36
      $region35: #{lenet_forward.3} parent=31 // pred_region
        _
      $region36: #{lenet_forward.3} parent=31 // pred_fallthru
        _
    $region32: #{lenet_forward.3} parent=5 // pred_fallthru
      _
    %p870 = scmp.le.s32.totalorder 2, %s9
    // Predicated region
    $region37: #{lenet_forward.3} parent=5 // pred_check
      %p871 = pneg %p870
    $region38: #{lenet_forward.3} parent=5 // pred_check_branch
      %873 = sbr.rel (%p871) target = $region40
    $region39: #{lenet_forward.3} parent=5 // pred_region
      %s874 = ssub.s32 %s9, 2
      // Predicated region
      $region41: #{lenet_forward.3} parent=39 // pred_check
        %p875 = pneg %p106
      $region42: #{lenet_forward.3} parent=39 // pred_check_branch
        %877 = sbr.rel (%p875) target = $region44
      $region43: #{lenet_forward.3} parent=39 // pred_region
        %p878 = scmp.lt.s32.totalorder %s15, 1
        %s879 = scalar_select %p878, %s15, 1
        %s880 = smul.addr %s879, 25
        %s881 = smul.addr %s880, 8
        %s882 = scalar_lea.vmem %s3, %s881
      $region44: #{lenet_forward.3} parent=39 // pred_fallthru
        _
    $region40: #{lenet_forward.3} parent=5 // pred_fallthru
      _
  $region6: #{lenet_forward.3} parent=0 // loop_footer
    %s13 = sadd.s32 1, %s9
  $region7: #{lenet_forward.3} parent=0 // loop_footer_branch
    %8 = sbr.rel target = $region3
  $region8: #{lenet_forward.3} parent=0 // loop_exit
    _

// kernel: lenet_forward.4
$region0: #{lenet_forward.4}
  #allocation0 [shape = 'u32[]', space=smem, size = 0x4, offset = 0x4, fixed_abs, tag = 'smem constant byte address 0x4 - core index']
  #allocation1 [shape = 'u32[72,128]{1,0:T(1,128)}', space=vmem, size = 0x9000, scoped, tag = 'internal scratch']
  %s0 = inlined_call_operand.vmem [shape: f32[2,4,25,256], index: 0, kind: input, shape index: {}]
  %s1 = inlined_call_operand.vmem [shape: f32[256,128], index: 1, kind: input, shape index: {}]
  %s2 = inlined_call_operand.vmem [shape: f32[1,128], index: 2, kind: input, shape index: {}]
  %s3 = inlined_call_operand.vmem [shape: f32[2,25,128], index: 3, kind: output, shape index: {}]
  %s4 = sld [smem:[#allocation0]]
  $region45: #{lenet_forward.4} parent=0
    _
  %s6 = ssub.s32 1, %s4
  %s7 = scalar_select 0, %s6, %s4
  loop: start=0, step=1, limit=4
  $region2: #{lenet_forward.4} parent=0 // loop_pre_header
    _
  $region3: #{lenet_forward.4} parent=0 // loop_header
    %s9 = sphi 0, %s13
    %p10 = scmp.ge.s32.totalorder %s9, 4
    %s19 = sphi 0, %s21
    %s22 = sphi 0, %s19
    %s23 = sphi 0, %s22
    %s39 = sphi 0, %s23
    %s43 = sphi 0, %s43
    %s45 = sphi 0, %s43
    %s46 = sphi 0, %s45
    %s60 = sphi 0, %s46
    %s64 = sphi 0, %s64
    %s66 = sphi 0, %s64
    %s67 = sphi 0, %s66
    %s81 = sphi 0, %s67
    %s87 = sphi 0, %s89
    %s90 = sphi 0, %s87
    %s91 = sphi 0, %s90
    %s107 = sphi 0, %s91
  $region4: #{lenet_forward.4} parent=0 // loop_header_branch
    %12 = sbr.rel (%p10) target = $region8
  $region5: #{lenet_forward.4} parent=0 // loop_body
    %s14 = ssub.s32 %s9, 1
    %s15 = ssub.s32 %s9, 2
    %s16 = sadd.s32 %s9, 1
    %s17 = ssub.s32 %s9, %s16
    %p18 = scmp.eq.s32.totalorder %s17, 0
    %s20 = sadd.s32 %s19, 1
    %s21 = scalar_select %p18, %s19, %s20
    %p24 = pneg %p18
    %p25 = scmp.eq.s32.totalorder %s9, 1
    %p26 = por %p24, %p25
    %p27 = scmp.ne.s32.totalorder %s19, %s22
    %p28 = scmp.eq.s32.totalorder %s9, 0
    %p29 = por %p27, %p28
    %p30 = scmp.ne.s32.totalorder %s19, %s22
    %p31 = scmp.eq.s32.totalorder %s14, 1
    %p32 = por %p30, %p31
    %p33 = scmp.ne.s32.totalorder %s22, %s23
    %p34 = scmp.eq.s32.totalorder %s14, 0
    %p35 = por %p33, %p34
    %p36 = scmp.ne.s32.totalorder %s22, %s23
    %p37 = scmp.eq.s32.totalorder %s15, 1
    %p38 = por %p36, %p37
    %p40 = scmp.ne.s32.totalorder %s23, %s39
    %p41 = scmp.eq.s32.totalorder %s15, 0
    %p42 = por %p40, %p41
    %s44 = sadd.s32 %s43, 1
    %p47 = scmp.eq.s32.totalorder %s9, 1
    %p48 = scmp.ne.s32.totalorder %s43, %s45
    %p49 = scmp.eq.s32.totalorder %s9, 0
    %p50 = por %p48, %p49
    %p51 = scmp.ne.s32.totalorder %s43, %s45
    %p52 = scmp.eq.s32.totalorder %s14, 1
    %p53 = por %p51, %p52
    %p54 = scmp.ne.s32.totalorder %s45, %s46
    %p55 = scmp.eq.s32.totalorder %s14, 0
    %p56 = por %p54, %p55
    %p57 = scmp.ne.s32.totalorder %s45, %s46
    %p58 = scmp.eq.s32.totalorder %s15, 1
    %p59 = por %p57, %p58
    %p61 = scmp.ne.s32.totalorder %s46, %s60
    %p62 = scmp.eq.s32.totalorder %s15, 0
    %p63 = por %p61, %p62
    %s65 = sadd.s32 %s64, 1
    %p68 = scmp.eq.s32.totalorder %s9, 1
    %p69 = scmp.ne.s32.totalorder %s64, %s66
    %p70 = scmp.eq.s32.totalorder %s9, 0
    %p71 = por %p69, %p70
    %p72 = scmp.ne.s32.totalorder %s64, %s66
    %p73 = scmp.eq.s32.totalorder %s14, 1
    %p74 = por %p72, %p73
    %p75 = scmp.ne.s32.totalorder %s66, %s67
    %p76 = scmp.eq.s32.totalorder %s14, 0
    %p77 = por %p75, %p76
    %p78 = scmp.ne.s32.totalorder %s66, %s67
    %p79 = scmp.eq.s32.totalorder %s15, 1
    %p80 = por %p78, %p79
    %p82 = scmp.ne.s32.totalorder %s67, %s81
    %p83 = scmp.eq.s32.totalorder %s15, 0
    %p84 = por %p82, %p83
    %s85 = ssub.s32 %s9, %s16
    %p86 = scmp.eq.s32.totalorder %s85, 0
    %s88 = sadd.s32 %s87, 1
    %s89 = scalar_select %p86, %s87, %s88
    %p92 = pneg %p86
    %p93 = scmp.eq.s32.totalorder %s9, 1
    %p94 = por %p92, %p93
    %p95 = scmp.ne.s32.totalorder %s87, %s90
    %p96 = scmp.eq.s32.totalorder %s9, 0
    %p97 = por %p95, %p96
    %p98 = scmp.ne.s32.totalorder %s87, %s90
    %p99 = scmp.eq.s32.totalorder %s14, 1
    %p100 = por %p98, %p99
    %p101 = scmp.ne.s32.totalorder %s90, %s91
    %p102 = scmp.eq.s32.totalorder %s14, 0
    %p103 = por %p101, %p102
    %p104 = scmp.ne.s32.totalorder %s90, %s91
    %p105 = scmp.eq.s32.totalorder %s15, 1
    %p106 = por %p104, %p105
    %p108 = scmp.ne.s32.totalorder %s91, %s107
    %p109 = scmp.eq.s32.totalorder %s15, 0
    %p110 = por %p108, %p109
    %p111 = scmp.le.s32.totalorder 1, %s9
    %p112 = scmp.lt.s32.totalorder %s9, 3
    %p113 = pnand %p111, %p112
    %p114 = pneg %p113
    // Predicated region
    $region9: #{lenet_forward.4} parent=5 // pred_check
      _
    $region10: #{lenet_forward.4} parent=5 // pred_check_branch
      %116 = sbr.rel (%p113) target = $region12
    $region11: #{lenet_forward.4} parent=5 // pred_region
      %s117 = ssub.s32 %s9, 1
      // Predicated region
      $region13: #{lenet_forward.4} parent=11 // pred_check
        %p118 = pneg %p56
      $region14: #{lenet_forward.4} parent=11 // pred_check_branch
        %120 = sbr.rel (%p118) target = $region16
      $region15: #{lenet_forward.4} parent=11 // pred_region
        _
      $region16: #{lenet_forward.4} parent=11 // pred_fallthru
        _
      // Predicated region
      $region17: #{lenet_forward.4} parent=11 // pred_check
        %p121 = pneg %p77
      $region18: #{lenet_forward.4} parent=11 // pred_check_branch
        %123 = sbr.rel (%p121) target = $region20
      $region19: #{lenet_forward.4} parent=11 // pred_region
        _
      $region20: #{lenet_forward.4} parent=11 // pred_fallthru
        _
    $region12: #{lenet_forward.4} parent=5 // pred_fallthru
      _
    %p124 = scmp.lt.s32.totalorder %s9, 2
    // Predicated region
    $region21: #{lenet_forward.4} parent=5 // pred_check
      %p125 = pneg %p124
    $region22: #{lenet_forward.4} parent=5 // pred_check_branch
      %127 = sbr.rel (%p125) target = $region24
    $region23: #{lenet_forward.4} parent=5 // pred_region
      // Predicated region
      $region25: #{lenet_forward.4} parent=23 // pred_check
        %p128 = pneg %p29
      $region26: #{lenet_forward.4} parent=23 // pred_check_branch
        %130 = sbr.rel (%p128) target = $region28
      $region27: #{lenet_forward.4} parent=23 // pred_region
        %p131 = scmp.lt.s32.totalorder %s9, 1
        %s132 = scalar_select %p131, %s9, 1
        %s133 = smul.addr %s132, 32
        %s134 = smul.addr %s133, 8
        %s135 = scalar_lea.vmem %s0, %s134
      $region28: #{lenet_forward.4} parent=23 // pred_fallthru
        _
    $region24: #{lenet_forward.4} parent=5 // pred_fallthru
      _
    %p136 = scmp.le.s32.totalorder 1, %s9
    %p137 = scmp.lt.s32.totalorder %s9, 3
    %p138 = pnand %p136, %p137
    %p139 = pneg %p138
    // Predicated region
    $region29: #{lenet_forward.4} parent=5 // pred_check
      _
    $region30: #{lenet_forward.4} parent=5 // pred_check_branch
      %141 = sbr.rel (%p138) target = $region32
    $region31: #{lenet_forward.4} parent=5 // pred_region
      %s142 = ssub.s32 %s9, 1
      %p143 = scmp.lt.s32.totalorder %s14, 1
      %s144 = scalar_select %p143, %s14, 1
      %s145 = smul.addr %s144, 32
      %s146 = smul.addr %s145, 8
      %s147 = scalar_lea.vmem %s0, %s146
      %p148 = pneg %p35
      %p149 = pneg %p32
      %p150 = pneg %p56
      %p151 = pneg %p53
      %p152 = pneg %p77
      %p153 = pneg %p74
      %p154 = pneg %p103
      %p155 = pneg %p100
      %p156 = scmp.lt.s32.totalorder %s14, 1
      %s157 = scalar_select %p156, %s14, 1
      %s158 = smul.addr %s157, 4
      %s159 = smul.addr %s158, 8
      %s160 = scalar_lea.vmem %s3, %s159
      %p161 = scmp.lt.s32.totalorder %s14, 1
      %s162 = scalar_select %p161, %s14, 1
      %s163 = smul.addr %s162, 32
      %s164 = smul.addr %s163, 8
      %s165 = scalar_lea.vmem %s0, %s164
      %p166 = scmp.lt.s32.totalorder %s14, 1
      %s167 = scalar_select %p166, %s14, 1
      %s168 = smul.addr %s167, 4
      %s169 = smul.addr %s168, 8
      %s170 = scalar_lea.vmem %s3, %s169
      %v171 = vld [vmem:[%s1] sm:$0xff]
      %v172 = vld [vmem:[%s1 + $0x8] sm:$0xff]
      %v173 = vld [vmem:[%s1 + $0x10] sm:$0xff]
      %v174 = vld [vmem:[%s1 + $0x18] sm:$0xff]
      %v175 = vld [vmem:[%s1 + $0x20] sm:$0xff]
      %v176 = vld [vmem:[%s1 + $0x28] sm:$0xff]
      %v177 = vld [vmem:[%s1 + $0x30] sm:$0xff]
      %v178 = vld [vmem:[%s1 + $0x38] sm:$0xff]
      %v179 = vld [vmem:[%s1 + $0x40] sm:$0xff]
      %v180 = vld [vmem:[%s1 + $0x48] sm:$0xff]
      %v181 = vld [vmem:[%s1 + $0x50] sm:$0xff]
      %v182 = vld [vmem:[%s1 + $0x58] sm:$0xff]
      %v183 = vld [vmem:[%s1 + $0x60] sm:$0xff]
      %v184 = vld [vmem:[%s1 + $0x68] sm:$0xff]
      %v185 = vld [vmem:[%s1 + $0x70] sm:$0xff]
      %v186 = vld [vmem:[%s1 + $0x78] sm:$0xff]
      %v187 = vld [vmem:[%s1 + $0x80] sm:$0xff]
      %v188 = vld [vmem:[%s1 + $0x88] sm:$0xff]
      %v189 = vld [vmem:[%s1 + $0x90] sm:$0xff]
      %v190 = vld [vmem:[%s1 + $0x98] sm:$0xff]
      %v191 = vld [vmem:[%s1 + $0xa0] sm:$0xff]
      %v192 = vld [vmem:[%s1 + $0xa8] sm:$0xff]
      %v193 = vld [vmem:[%s1 + $0xb0] sm:$0xff]
      %v194 = vld [vmem:[%s1 + $0xb8] sm:$0xff]
      %v195 = vld [vmem:[%s1 + $0xc0] sm:$0xff]
      %v196 = vld [vmem:[%s1 + $0xc8] sm:$0xff]
      %v197 = vld [vmem:[%s1 + $0xd0] sm:$0xff]
      %v198 = vld [vmem:[%s1 + $0xd8] sm:$0xff]
      %v199 = vld [vmem:[%s1 + $0xe0] sm:$0xff]
      %v200 = vld [vmem:[%s1 + $0xe8] sm:$0xff]
      %v201 = vld [vmem:[%s1 + $0xf0] sm:$0xff]
      %v202 = vld [vmem:[%s1 + $0xf8] sm:$0xff]
      %v203 = vld [vmem:[%s2] sm:$0x1]
      %v204 = vld [vmem:[%s165] sm:$0xff]
      %v205 = vld [vmem:[%s165 + $0x8] sm:$0xff]
      %v206 = vld [vmem:[%s165 + $0x10] sm:$0xff]
      %v207 = vld [vmem:[%s165 + $0x18] sm:$0xff]
      %v208 = vld [vmem:[%s165 + $0x20] sm:$0xff]
      %v209 = vld [vmem:[%s165 + $0x28] sm:$0xff]
      %v210 = vld [vmem:[%s165 + $0x30] sm:$0x1]
      %v211 = vld [vmem:[%s165 + $0x38] sm:$0x1]
      %v213 = vperm.slane %v203, 0
      %215 = vmatpush.msra.mxu0 %v186
      %216 = vmatpush.msra.mxu0 %v185
      %217 = vmatpush.msra.mxu0 %v184
      %218 = vmatpush.msra.mxu0 %v183
      %219 = vmatpush.msra.mxu0 %v182
      %220 = vmatpush.msra.mxu0 %v181
      %221 = vmatpush.msra.mxu0 %v180
      %222 = vmatpush.msra.mxu0 %v179
      %223 = vmatpush.msra.mxu0 %v178
      %224 = vmatpush.msra.mxu0 %v177
      %225 = vmatpush.msra.mxu0 %v176
      %226 = vmatpush.msra.mxu0 %v175
      %227 = vmatpush.msra.mxu0 %v174
      %228 = vmatpush.msra.mxu0 %v173
      %229 = vmatpush.msra.mxu0 %v172
      %230 = vmatpush.msra.mxu0 %v171
      %231 = vmatmul.f32.gmra.mxu0 %v204
      %v232 = vpop.f32.mrf.mxu0
      %v233 = vadd.f32 %v213, %v232
      %234 = vmatmul.f32.gmra.mxu0 %v206
      %v235 = vpop.f32.mrf.mxu0
      %v236 = vadd.f32 %v213, %v235
      %237 = vmatmul.f32.gmra.mxu0 %v208
      %v238 = vpop.f32.mrf.mxu0
      %v239 = vadd.f32 %v213, %v238
      %240 = vmatmul.f32.gmra.mxu0 %v210
      %v241 = vpop.f32.mrf.mxu0
      %v242 = vadd.f32 %v213, %v241
      %243 = vdwg.mxu0
      %244 = vmatpush.msra.mxu0 %v202
      %245 = vmatpush.msra.mxu0 %v201
      %246 = vmatpush.msra.mxu0 %v200
      %247 = vmatpush.msra.mxu0 %v199
      %248 = vmatpush.msra.mxu0 %v198
      %249 = vmatpush.msra.mxu0 %v197
      %250 = vmatpush.msra.mxu0 %v196
      %251 = vmatpush.msra.mxu0 %v195
      %252 = vmatpush.msra.mxu0 %v194
      %253 = vmatpush.msra.mxu0 %v193
      %254 = vmatpush.msra.mxu0 %v192
      %255 = vmatpush.msra.mxu0 %v191
      %256 = vmatpush.msra.mxu0 %v190
      %257 = vmatpush.msra.mxu0 %v189
      %258 = vmatpush.msra.mxu0 %v188
      %259 = vmatpush.msra.mxu0 %v187
      %260 = vmatmul.f32.gmra.mxu0 %v205
      %v261 = vpop.f32.mrf.mxu0
      %v262 = vadd.f32 %v233, %v261
      %263 = vmatmul.f32.gmra.mxu0 %v207
      %v264 = vpop.f32.mrf.mxu0
      %v265 = vadd.f32 %v236, %v264
      %266 = vmatmul.f32.gmra.mxu0 %v209
      %v267 = vpop.f32.mrf.mxu0
      %v268 = vadd.f32 %v239, %v267
      %269 = vmatmul.f32.gmra.mxu0 %v211
      %v270 = vpop.f32.mrf.mxu0
      %v271 = vadd.f32 %v242, %v270
      %272 = vdwg.mxu0
      %v273 = vmax.f32 %v262, 0.0
      %v274 = vmax.f32 %v265, 0.0
      %v275 = vmax.f32 %v268, 0.0
      %v276 = vmax.f32 %v271, 0.0
      %s277 = scalar_lea.vmem %s165, 64
      %v278 = vld [vmem:[%s277] sm:$0xff]
      %v279 = vld [vmem:[%s277 + $0x8] sm:$0xff]
      %v280 = vld [vmem:[%s277 + $0x10] sm:$0xff]
      %v281 = vld [vmem:[%s277 + $0x18] sm:$0xff]
      %v282 = vld [vmem:[%s277 + $0x20] sm:$0xff]
      %v283 = vld [vmem:[%s277 + $0x28] sm:$0xff]
      %v284 = vld [vmem:[%s277 + $0x30] sm:$0x1]
      %v285 = vld [vmem:[%s277 + $0x38] sm:$0x1]
      %286 = vmatpush.msra.mxu0 %v186
      %287 = vmatpush.msra.mxu0 %v185
      %288 = vmatpush.msra.mxu0 %v184
      %289 = vmatpush.msra.mxu0 %v183
      %290 = vmatpush.msra.mxu0 %v182
      %291 = vmatpush.msra.mxu0 %v181
      %292 = vmatpush.msra.mxu0 %v180
      %293 = vmatpush.msra.mxu0 %v179
      %294 = vmatpush.msra.mxu0 %v178
      %295 = vmatpush.msra.mxu0 %v177
      %296 = vmatpush.msra.mxu0 %v176
      %297 = vmatpush.msra.mxu0 %v175
      %298 = vmatpush.msra.mxu0 %v174
      %299 = vmatpush.msra.mxu0 %v173
      %300 = vmatpush.msra.mxu0 %v172
      %301 = vmatpush.msra.mxu0 %v171
      %302 = vmatmul.f32.gmra.mxu0 %v278
      %v303 = vpop.f32.mrf.mxu0
      %v304 = vadd.f32 %v213, %v303
      %305 = vmatmul.f32.gmra.mxu0 %v280
      %v306 = vpop.f32.mrf.mxu0
      %v307 = vadd.f32 %v213, %v306
      %308 = vmatmul.f32.gmra.mxu0 %v282
      %v309 = vpop.f32.mrf.mxu0
      %v310 = vadd.f32 %v213, %v309
      %311 = vmatmul.f32.gmra.mxu0 %v284
      %v312 = vpop.f32.mrf.mxu0
      %v313 = vadd.f32 %v213, %v312
      %314 = vdwg.mxu0
      %315 = vmatpush.msra.mxu0 %v202
      %316 = vmatpush.msra.mxu0 %v201
      %317 = vmatpush.msra.mxu0 %v200
      %318 = vmatpush.msra.mxu0 %v199
      %319 = vmatpush.msra.mxu0 %v198
      %320 = vmatpush.msra.mxu0 %v197
      %321 = vmatpush.msra.mxu0 %v196
      %322 = vmatpush.msra.mxu0 %v195
      %323 = vmatpush.msra.mxu0 %v194
      %324 = vmatpush.msra.mxu0 %v193
      %325 = vmatpush.msra.mxu0 %v192
      %326 = vmatpush.msra.mxu0 %v191
      %327 = vmatpush.msra.mxu0 %v190
      %328 = vmatpush.msra.mxu0 %v189
      %329 = vmatpush.msra.mxu0 %v188
      %330 = vmatpush.msra.mxu0 %v187
      %331 = vmatmul.f32.gmra.mxu0 %v279
      %v332 = vpop.f32.mrf.mxu0
      %v333 = vadd.f32 %v304, %v332
      %334 = vmatmul.f32.gmra.mxu0 %v281
      %v335 = vpop.f32.mrf.mxu0
      %v336 = vadd.f32 %v307, %v335
      %337 = vmatmul.f32.gmra.mxu0 %v283
      %v338 = vpop.f32.mrf.mxu0
      %v339 = vadd.f32 %v310, %v338
      %340 = vmatmul.f32.gmra.mxu0 %v285
      %v341 = vpop.f32.mrf.mxu0
      %v342 = vadd.f32 %v313, %v341
      %343 = vdwg.mxu0
      %v344 = vmax.f32 %v333, 0.0
      %v345 = vmax.f32 %v336, 0.0
      %v346 = vmax.f32 %v339, 0.0
      %v347 = vmax.f32 %v342, 0.0
      %v348 = vmax.f32 %v273, %v344
      %v349 = vmax.f32 %v274, %v345
      %v350 = vmax.f32 %v275, %v346
      %v351 = vmax.f32 %v276, %v347
      %s352 = scalar_lea.vmem %s165, 128
      %v353 = vld [vmem:[%s352] sm:$0xff]
      %v354 = vld [vmem:[%s352 + $0x8] sm:$0xff]
      %v355 = vld [vmem:[%s352 + $0x10] sm:$0xff]
      %v356 = vld [vmem:[%s352 + $0x18] sm:$0xff]
      %v357 = vld [vmem:[%s352 + $0x20] sm:$0xff]
      %v358 = vld [vmem:[%s352 + $0x28] sm:$0xff]
      %v359 = vld [vmem:[%s352 + $0x30] sm:$0x1]
      %v360 = vld [vmem:[%s352 + $0x38] sm:$0x1]
      %361 = vmatpush.msra.mxu0 %v186
      %362 = vmatpush.msra.mxu0 %v185
      %363 = vmatpush.msra.mxu0 %v184
      %364 = vmatpush.msra.mxu0 %v183
      %365 = vmatpush.msra.mxu0 %v182
      %366 = vmatpush.msra.mxu0 %v181
      %367 = vmatpush.msra.mxu0 %v180
      %368 = vmatpush.msra.mxu0 %v179
      %369 = vmatpush.msra.mxu0 %v178
      %370 = vmatpush.msra.mxu0 %v177
      %371 = vmatpush.msra.mxu0 %v176
      %372 = vmatpush.msra.mxu0 %v175
      %373 = vmatpush.msra.mxu0 %v174
      %374 = vmatpush.msra.mxu0 %v173
      %375 = vmatpush.msra.mxu0 %v172
      %376 = vmatpush.msra.mxu0 %v171
      %377 = vmatmul.f32.gmra.mxu0 %v353
      %v378 = vpop.f32.mrf.mxu0
      %v379 = vadd.f32 %v213, %v378
      %380 = vmatmul.f32.gmra.mxu0 %v355
      %v381 = vpop.f32.mrf.mxu0
      %v382 = vadd.f32 %v213, %v381
      %383 = vmatmul.f32.gmra.mxu0 %v357
      %v384 = vpop.f32.mrf.mxu0
      %v385 = vadd.f32 %v213, %v384
      %386 = vmatmul.f32.gmra.mxu0 %v359
      %v387 = vpop.f32.mrf.mxu0
      %v388 = vadd.f32 %v213, %v387
      %389 = vdwg.mxu0
      %390 = vmatpush.msra.mxu0 %v202
      %391 = vmatpush.msra.mxu0 %v201
      %392 = vmatpush.msra.mxu0 %v200
      %393 = vmatpush.msra.mxu0 %v199
      %394 = vmatpush.msra.mxu0 %v198
      %395 = vmatpush.msra.mxu0 %v197
      %396 = vmatpush.msra.mxu0 %v196
      %397 = vmatpush.msra.mxu0 %v195
      %398 = vmatpush.msra.mxu0 %v194
      %399 = vmatpush.msra.mxu0 %v193
      %400 = vmatpush.msra.mxu0 %v192
      %401 = vmatpush.msra.mxu0 %v191
      %402 = vmatpush.msra.mxu0 %v190
      %403 = vmatpush.msra.mxu0 %v189
      %404 = vmatpush.msra.mxu0 %v188
      %405 = vmatpush.msra.mxu0 %v187
      %406 = vmatmul.f32.gmra.mxu0 %v354
      %v407 = vpop.f32.mrf.mxu0
      %v408 = vadd.f32 %v379, %v407
      %409 = vmatmul.f32.gmra.mxu0 %v356
      %v410 = vpop.f32.mrf.mxu0
      %v411 = vadd.f32 %v382, %v410
      %412 = vmatmul.f32.gmra.mxu0 %v358
      %v413 = vpop.f32.mrf.mxu0
      %v414 = vadd.f32 %v385, %v413
      %415 = vmatmul.f32.gmra.mxu0 %v360
      %v416 = vpop.f32.mrf.mxu0
      %v417 = vadd.f32 %v388, %v416
      %418 = vdwg.mxu0
      %v419 = vmax.f32 %v408, 0.0
      %v420 = vmax.f32 %v411, 0.0
      %v421 = vmax.f32 %v414, 0.0
      %v422 = vmax.f32 %v417, 0.0
      %v423 = vmax.f32 %v348, %v419
      %v424 = vmax.f32 %v349, %v420
      %v425 = vmax.f32 %v350, %v421
      %v426 = vmax.f32 %v351, %v422
      %s427 = scalar_lea.vmem %s165, 192
      %v428 = vld [vmem:[%s427] sm:$0xff]
      %v429 = vld [vmem:[%s427 + $0x8] sm:$0xff]
      %v430 = vld [vmem:[%s427 + $0x10] sm:$0xff]
      %v431 = vld [vmem:[%s427 + $0x18] sm:$0xff]
      %v432 = vld [vmem:[%s427 + $0x20] sm:$0xff]
      %v433 = vld [vmem:[%s427 + $0x28] sm:$0xff]
      %v434 = vld [vmem:[%s427 + $0x30] sm:$0x1]
      %v435 = vld [vmem:[%s427 + $0x38] sm:$0x1]
      %436 = vmatpush.msra.mxu0 %v186
      %437 = vmatpush.msra.mxu0 %v185
      %438 = vmatpush.msra.mxu0 %v184
      %439 = vmatpush.msra.mxu0 %v183
      %440 = vmatpush.msra.mxu0 %v182
      %441 = vmatpush.msra.mxu0 %v181
      %442 = vmatpush.msra.mxu0 %v180
      %443 = vmatpush.msra.mxu0 %v179
      %444 = vmatpush.msra.mxu0 %v178
      %445 = vmatpush.msra.mxu0 %v177
      %446 = vmatpush.msra.mxu0 %v176
      %447 = vmatpush.msra.mxu0 %v175
      %448 = vmatpush.msra.mxu0 %v174
      %449 = vmatpush.msra.mxu0 %v173
      %450 = vmatpush.msra.mxu0 %v172
      %451 = vmatpush.msra.mxu0 %v171
      %452 = vmatmul.f32.gmra.mxu0 %v428
      %v453 = vpop.f32.mrf.mxu0
      %v454 = vadd.f32 %v213, %v453
      %455 = vmatmul.f32.gmra.mxu0 %v430
      %v456 = vpop.f32.mrf.mxu0
      %v457 = vadd.f32 %v213, %v456
      %458 = vmatmul.f32.gmra.mxu0 %v432
      %v459 = vpop.f32.mrf.mxu0
      %v460 = vadd.f32 %v213, %v459
      %461 = vmatmul.f32.gmra.mxu0 %v434
      %v462 = vpop.f32.mrf.mxu0
      %v463 = vadd.f32 %v213, %v462
      %464 = vdwg.mxu0
      %465 = vmatpush.msra.mxu0 %v202
      %466 = vmatpush.msra.mxu0 %v201
      %467 = vmatpush.msra.mxu0 %v200
      %468 = vmatpush.msra.mxu0 %v199
      %469 = vmatpush.msra.mxu0 %v198
      %470 = vmatpush.msra.mxu0 %v197
      %471 = vmatpush.msra.mxu0 %v196
      %472 = vmatpush.msra.mxu0 %v195
      %473 = vmatpush.msra.mxu0 %v194
      %474 = vmatpush.msra.mxu0 %v193
      %475 = vmatpush.msra.mxu0 %v192
      %476 = vmatpush.msra.mxu0 %v191
      %477 = vmatpush.msra.mxu0 %v190
      %478 = vmatpush.msra.mxu0 %v189
      %479 = vmatpush.msra.mxu0 %v188
      %480 = vmatpush.msra.mxu0 %v187
      %481 = vmatmul.f32.gmra.mxu0 %v429
      %v482 = vpop.f32.mrf.mxu0
      %v483 = vadd.f32 %v454, %v482
      %484 = vmatmul.f32.gmra.mxu0 %v431
      %v485 = vpop.f32.mrf.mxu0
      %v486 = vadd.f32 %v457, %v485
      %487 = vmatmul.f32.gmra.mxu0 %v433
      %v488 = vpop.f32.mrf.mxu0
      %v489 = vadd.f32 %v460, %v488
      %490 = vmatmul.f32.gmra.mxu0 %v435
      %v491 = vpop.f32.mrf.mxu0
      %v492 = vadd.f32 %v463, %v491
      %493 = vdwg.mxu0
      %v494 = vmax.f32 %v483, 0.0
      %v495 = vmax.f32 %v486, 0.0
      %v496 = vmax.f32 %v489, 0.0
      %v497 = vmax.f32 %v492, 0.0
      %v498 = vmax.f32 %v423, %v494
      %v499 = vmax.f32 %v424, %v495
      %v500 = vmax.f32 %v425, %v496
      %v501 = vmax.f32 %v426, %v497
      %502 = vst [vmem:[%s170] sm:$0xff] %v498
      %503 = vst [vmem:[%s170 + $0x8] sm:$0xff] %v499
      %504 = vst [vmem:[%s170 + $0x10] sm:$0xff] %v500
      %505 = vst [vmem:[%s170 + $0x18] sm:$0x1] %v501
      %p506 = scmp.lt.s32.totalorder %s14, 1
      %s507 = scalar_select %p506, %s14, 1
      %s508 = smul.addr %s507, 4
      %s509 = smul.addr %s508, 8
      %s510 = scalar_lea.vmem %s3, %s509
      // Predicated region
      $region33: #{lenet_forward.4} parent=31 // pred_check
        %p511 = pneg %p100
      $region34: #{lenet_forward.4} parent=31 // pred_check_branch
        %513 = sbr.rel (%p511) target = $region36
      $region35: #{lenet_forward.4} parent=31 // pred_region
        _
      $region36: #{lenet_forward.4} parent=31 // pred_fallthru
        _
    $region32: #{lenet_forward.4} parent=5 // pred_fallthru
      _
    %p514 = scmp.le.s32.totalorder 2, %s9
    // Predicated region
    $region37: #{lenet_forward.4} parent=5 // pred_check
      %p515 = pneg %p514
    $region38: #{lenet_forward.4} parent=5 // pred_check_branch
      %517 = sbr.rel (%p515) target = $region40
    $region39: #{lenet_forward.4} parent=5 // pred_region
      %s518 = ssub.s32 %s9, 2
      // Predicated region
      $region41: #{lenet_forward.4} parent=39 // pred_check
        %p519 = pneg %p106
      $region42: #{lenet_forward.4} parent=39 // pred_check_branch
        %521 = sbr.rel (%p519) target = $region44
      $region43: #{lenet_forward.4} parent=39 // pred_region
        %p522 = scmp.lt.s32.totalorder %s15, 1
        %s523 = scalar_select %p522, %s15, 1
        %s524 = smul.addr %s523, 4
        %s525 = smul.addr %s524, 8
        %s526 = scalar_lea.vmem %s3, %s525
      $region44: #{lenet_forward.4} parent=39 // pred_fallthru
        _
    $region40: #{lenet_forward.4} parent=5 // pred_fallthru
      _
  $region6: #{lenet_forward.4} parent=0 // loop_footer
    %s13 = sadd.s32 1, %s9
  $region7: #{lenet_forward.4} parent=0 // loop_footer_branch
    %8 = sbr.rel target = $region3
  $region8: #{lenet_forward.4} parent=0 // loop_exit
    _

// kernel: lenet_forward.5
$region0: #{lenet_forward.5}
  #allocation0 [shape = 'u32[]', space=smem, size = 0x4, offset = 0x4, fixed_abs, tag = 'smem constant byte address 0x4 - core index']
  #allocation1 [shape = 'u32[72,128]{1,0:T(1,128)}', space=vmem, size = 0x9000, scoped, tag = 'internal scratch']
  %s0 = inlined_call_operand.vmem [shape: f32[2,25,128], index: 0, kind: input, shape index: {}]
  %s1 = inlined_call_operand.vmem [shape: f32[25,128,128], index: 1, kind: input, shape index: {}]
  %s2 = inlined_call_operand.vmem [shape: f32[1,128], index: 2, kind: input, shape index: {}]
  %s3 = inlined_call_operand.vmem [shape: f32[128,128], index: 3, kind: input, shape index: {}]
  %s4 = inlined_call_operand.vmem [shape: f32[1,128], index: 4, kind: input, shape index: {}]
  %s5 = inlined_call_operand.vmem [shape: f32[128,128], index: 5, kind: input, shape index: {}]
  %s6 = inlined_call_operand.vmem [shape: f32[1,128], index: 6, kind: input, shape index: {}]
  %s7 = inlined_call_operand.hbm [shape: f32[2,128], index: 7, kind: output, shape index: {}]
  %s8 = sld [smem:[#allocation0]]
  $region38: #{lenet_forward.5} parent=0
    _
  %s10 = ssub.s32 1, %s8
  %s11 = scalar_select 0, %s10, %s8
  $region1: #{lenet_forward.5} parent=0
    #allocation2 [shape = 'u8[1024]{0}', space=vmem, size = 0x400, scoped, tag = 'output window, operand 0, single buffered']
    #allocation3 [shape = 's32[1]{0}', space=sflag, size = 0x4, scoped, tag = 'scoped memory for lenet_forward.5']
    %12 = vsyncpa [#allocation3], 0
    // Predicated region
    $region2: #{lenet_forward.5} parent=1 // pred_check
      _
    $region3: #{lenet_forward.5} parent=1 // pred_check_branch
      %14 = sbr.rel (0) target = $region5
    $region4: #{lenet_forward.5} parent=1 // pred_region
      _
    $region5: #{lenet_forward.5} parent=1 // pred_fallthru
      _
    // Predicated region
    $region6: #{lenet_forward.5} parent=1 // pred_check
      _
    $region7: #{lenet_forward.5} parent=1 // pred_check_branch
      %16 = sbr.rel (0) target = $region9
    $region8: #{lenet_forward.5} parent=1 // pred_region
      _
    $region9: #{lenet_forward.5} parent=1 // pred_fallthru
      _
    // Predicated region
    $region10: #{lenet_forward.5} parent=1 // pred_check
      _
    $region11: #{lenet_forward.5} parent=1 // pred_check_branch
      %18 = sbr.rel (0) target = $region13
    $region12: #{lenet_forward.5} parent=1 // pred_region
      _
    $region13: #{lenet_forward.5} parent=1 // pred_fallthru
      _
    // Predicated region
    $region14: #{lenet_forward.5} parent=1 // pred_check
      _
    $region15: #{lenet_forward.5} parent=1 // pred_check_branch
      %20 = sbr.rel (0) target = $region17
    $region16: #{lenet_forward.5} parent=1 // pred_region
      _
    $region17: #{lenet_forward.5} parent=1 // pred_fallthru
      _
    // Predicated region
    $region18: #{lenet_forward.5} parent=1 // pred_check
      _
    $region19: #{lenet_forward.5} parent=1 // pred_check_branch
      %22 = sbr.rel (0) target = $region21
    $region20: #{lenet_forward.5} parent=1 // pred_region
      _
    $region21: #{lenet_forward.5} parent=1 // pred_fallthru
      _
    // Predicated region
    $region22: #{lenet_forward.5} parent=1 // pred_check
      _
    $region23: #{lenet_forward.5} parent=1 // pred_check_branch
      %24 = sbr.rel (0) target = $region25
    $region24: #{lenet_forward.5} parent=1 // pred_region
      _
    $region25: #{lenet_forward.5} parent=1 // pred_fallthru
      _
    // Predicated region
    $region26: #{lenet_forward.5} parent=1 // pred_check
      _
    $region27: #{lenet_forward.5} parent=1 // pred_check_branch
      %26 = sbr.rel (0) target = $region29
    $region28: #{lenet_forward.5} parent=1 // pred_region
      _
    $region29: #{lenet_forward.5} parent=1 // pred_fallthru
      _
    %v27 = vld [vmem:[%s0] sm:$0x1]
    %v28 = vld [vmem:[%s0 + $0x20] sm:$0x1]
    %v29 = vld [vmem:[%s1] sm:$0xff]
    %v30 = vld [vmem:[%s1 + $0x8] sm:$0xff]
    %v31 = vld [vmem:[%s1 + $0x10] sm:$0xff]
    %v32 = vld [vmem:[%s1 + $0x18] sm:$0xff]
    %v33 = vld [vmem:[%s1 + $0x20] sm:$0xff]
    %v34 = vld [vmem:[%s1 + $0x28] sm:$0xff]
    %v35 = vld [vmem:[%s1 + $0x30] sm:$0xff]
    %v36 = vld [vmem:[%s1 + $0x38] sm:$0xff]
    %v37 = vld [vmem:[%s1 + $0x40] sm:$0xff]
    %v38 = vld [vmem:[%s1 + $0x48] sm:$0xff]
    %v39 = vld [vmem:[%s1 + $0x50] sm:$0xff]
    %v40 = vld [vmem:[%s1 + $0x58] sm:$0xff]
    %v41 = vld [vmem:[%s1 + $0x60] sm:$0xff]
    %v42 = vld [vmem:[%s1 + $0x68] sm:$0xff]
    %v43 = vld [vmem:[%s1 + $0x70] sm:$0xff]
    %v44 = vld [vmem:[%s1 + $0x78] sm:$0xff]
    %v45 = vld [vmem:[%s0 + $0x1] sm:$0x1]
    %v46 = vld [vmem:[%s0 + $0x21] sm:$0x1]
    %s47 = scalar_lea.vmem %s1, 128
    %v48 = vld [vmem:[%s47] sm:$0xff]
    %v49 = vld [vmem:[%s47 + $0x8] sm:$0xff]
    %v50 = vld [vmem:[%s47 + $0x10] sm:$0xff]
    %v51 = vld [vmem:[%s47 + $0x18] sm:$0xff]
    %v52 = vld [vmem:[%s47 + $0x20] sm:$0xff]
    %v53 = vld [vmem:[%s47 + $0x28] sm:$0xff]
    %v54 = vld [vmem:[%s47 + $0x30] sm:$0xff]
    %v55 = vld [vmem:[%s47 + $0x38] sm:$0xff]
    %v56 = vld [vmem:[%s47 + $0x40] sm:$0xff]
    %v57 = vld [vmem:[%s47 + $0x48] sm:$0xff]
    %v58 = vld [vmem:[%s47 + $0x50] sm:$0xff]
    %v59 = vld [vmem:[%s47 + $0x58] sm:$0xff]
    %v60 = vld [vmem:[%s47 + $0x60] sm:$0xff]
    %v61 = vld [vmem:[%s47 + $0x68] sm:$0xff]
    %v62 = vld [vmem:[%s47 + $0x70] sm:$0xff]
    %v63 = vld [vmem:[%s47 + $0x78] sm:$0xff]
    %v66 = vrot.slane %v46, 7
    %vm67 = vcmask 1041409
    %v68 = vsel %vm67, %v66, %v45
    %70 = vmatpush.msra.mxu0 %v63
    %71 = vmatpush.msra.mxu0 %v62
    %72 = vmatpush.msra.mxu0 %v61
    %73 = vmatpush.msra.mxu0 %v60
    %74 = vmatpush.msra.mxu0 %v59
    %75 = vmatpush.msra.mxu0 %v58
    %76 = vmatpush.msra.mxu0 %v57
    %77 = vmatpush.msra.mxu0 %v56
    %78 = vmatpush.msra.mxu0 %v55
    %79 = vmatpush.msra.mxu0 %v54
    %80 = vmatpush.msra.mxu0 %v53
    %81 = vmatpush.msra.mxu0 %v52
    %82 = vmatpush.msra.mxu0 %v51
    %83 = vmatpush.msra.mxu0 %v50
    %84 = vmatpush.msra.mxu0 %v49
    %85 = vmatpush.msra.mxu0 %v48
    %86 = vmatmul.f32.gmra.mxu0 %v68
    %v87 = vpop.f32.mrf.mxu0
    %v88 = vadd.f32 0.0, %v87
    %89 = vdwg.mxu0
    %v92 = vrot.slane %v28, 7
    %v93 = vsel %vm67, %v92, %v27
    %95 = vmatpush.msra.mxu0 %v44
    %96 = vmatpush.msra.mxu0 %v43
    %97 = vmatpush.msra.mxu0 %v42
    %98 = vmatpush.msra.mxu0 %v41
    %99 = vmatpush.msra.mxu0 %v40
    %100 = vmatpush.msra.mxu0 %v39
    %101 = vmatpush.msra.mxu0 %v38
    %102 = vmatpush.msra.mxu0 %v37
    %103 = vmatpush.msra.mxu0 %v36
    %104 = vmatpush.msra.mxu0 %v35
    %105 = vmatpush.msra.mxu0 %v34
    %106 = vmatpush.msra.mxu0 %v33
    %107 = vmatpush.msra.mxu0 %v32
    %108 = vmatpush.msra.mxu0 %v31
    %109 = vmatpush.msra.mxu0 %v30
    %110 = vmatpush.msra.mxu0 %v29
    %111 = vmatmul.f32.gmra.mxu0 %v93
    %v112 = vpop.f32.mrf.mxu0
    %v113 = vadd.f32 %v88, %v112
    %114 = vdwg.mxu0
    %v115 = vld [vmem:[%s0 + $0x2] sm:$0x1]
    %v116 = vld [vmem:[%s0 + $0x22] sm:$0x1]
    %s117 = scalar_lea.vmem %s1, 256
    %v118 = vld [vmem:[%s117] sm:$0xff]
    %v119 = vld [vmem:[%s117 + $0x8] sm:$0xff]
    %v120 = vld [vmem:[%s117 + $0x10] sm:$0xff]
    %v121 = vld [vmem:[%s117 + $0x18] sm:$0xff]
    %v122 = vld [vmem:[%s117 + $0x20] sm:$0xff]
    %v123 = vld [vmem:[%s117 + $0x28] sm:$0xff]
    %v124 = vld [vmem:[%s117 + $0x30] sm:$0xff]
    %v125 = vld [vmem:[%s117 + $0x38] sm:$0xff]
    %v126 = vld [vmem:[%s117 + $0x40] sm:$0xff]
    %v127 = vld [vmem:[%s117 + $0x48] sm:$0xff]
    %v128 = vld [vmem:[%s117 + $0x50] sm:$0xff]
    %v129 = vld [vmem:[%s117 + $0x58] sm:$0xff]
    %v130 = vld [vmem:[%s117 + $0x60] sm:$0xff]
    %v131 = vld [vmem:[%s117 + $0x68] sm:$0xff]
    %v132 = vld [vmem:[%s117 + $0x70] sm:$0xff]
    %v133 = vld [vmem:[%s117 + $0x78] sm:$0xff]
    %v136 = vrot.slane %v116, 7
    %v137 = vsel %vm67, %v136, %v115
    %139 = vmatpush.msra.mxu0 %v133
    %140 = vmatpush.msra.mxu0 %v132
    %141 = vmatpush.msra.mxu0 %v131
    %142 = vmatpush.msra.mxu0 %v130
    %143 = vmatpush.msra.mxu0 %v129
    %144 = vmatpush.msra.mxu0 %v128
    %145 = vmatpush.msra.mxu0 %v127
    %146 = vmatpush.msra.mxu0 %v126
    %147 = vmatpush.msra.mxu0 %v125
    %148 = vmatpush.msra.mxu0 %v124
    %149 = vmatpush.msra.mxu0 %v123
    %150 = vmatpush.msra.mxu0 %v122
    %151 = vmatpush.msra.mxu0 %v121
    %152 = vmatpush.msra.mxu0 %v120
    %153 = vmatpush.msra.mxu0 %v119
    %154 = vmatpush.msra.mxu0 %v118
    %155 = vmatmul.f32.gmra.mxu0 %v137
    %v156 = vpop.f32.mrf.mxu0
    %v157 = vadd.f32 0.0, %v156
    %158 = vdwg.mxu0
    %v159 = vadd.f32 %v113, %v157
    %v160 = vld [vmem:[%s0 + $0x3] sm:$0x1]
    %v161 = vld [vmem:[%s0 + $0x23] sm:$0x1]
    %s162 = scalar_lea.vmem %s1, 384
    %v163 = vld [vmem:[%s162] sm:$0xff]
    %v164 = vld [vmem:[%s162 + $0x8] sm:$0xff]
    %v165 = vld [vmem:[%s162 + $0x10] sm:$0xff]
    %v166 = vld [vmem:[%s162 + $0x18] sm:$0xff]
    %v167 = vld [vmem:[%s162 + $0x20] sm:$0xff]
    %v168 = vld [vmem:[%s162 + $0x28] sm:$0xff]
    %v169 = vld [vmem:[%s162 + $0x30] sm:$0xff]
    %v170 = vld [vmem:[%s162 + $0x38] sm:$0xff]
    %v171 = vld [vmem:[%s162 + $0x40] sm:$0xff]
    %v172 = vld [vmem:[%s162 + $0x48] sm:$0xff]
    %v173 = vld [vmem:[%s162 + $0x50] sm:$0xff]
    %v174 = vld [vmem:[%s162 + $0x58] sm:$0xff]
    %v175 = vld [vmem:[%s162 + $0x60] sm:$0xff]
    %v176 = vld [vmem:[%s162 + $0x68] sm:$0xff]
    %v177 = vld [vmem:[%s162 + $0x70] sm:$0xff]
    %v178 = vld [vmem:[%s162 + $0x78] sm:$0xff]
    %v181 = vrot.slane %v161, 7
    %v182 = vsel %vm67, %v181, %v160
    %184 = vmatpush.msra.mxu0 %v178
    %185 = vmatpush.msra.mxu0 %v177
    %186 = vmatpush.msra.mxu0 %v176
    %187 = vmatpush.msra.mxu0 %v175
    %188 = vmatpush.msra.mxu0 %v174
    %189 = vmatpush.msra.mxu0 %v173
    %190 = vmatpush.msra.mxu0 %v172
    %191 = vmatpush.msra.mxu0 %v171
    %192 = vmatpush.msra.mxu0 %v170
    %193 = vmatpush.msra.mxu0 %v169
    %194 = vmatpush.msra.mxu0 %v168
    %195 = vmatpush.msra.mxu0 %v167
    %196 = vmatpush.msra.mxu0 %v166
    %197 = vmatpush.msra.mxu0 %v165
    %198 = vmatpush.msra.mxu0 %v164
    %199 = vmatpush.msra.mxu0 %v163
    %200 = vmatmul.f32.gmra.mxu0 %v182
    %v201 = vpop.f32.mrf.mxu0
    %v202 = vadd.f32 0.0, %v201
    %203 = vdwg.mxu0
    %v204 = vadd.f32 %v159, %v202
    %v205 = vld [vmem:[%s0 + $0x4] sm:$0x1]
    %v206 = vld [vmem:[%s0 + $0x24] sm:$0x1]
    %s207 = scalar_lea.vmem %s1, 512
    %v208 = vld [vmem:[%s207] sm:$0xff]
    %v209 = vld [vmem:[%s207 + $0x8] sm:$0xff]
    %v210 = vld [vmem:[%s207 + $0x10] sm:$0xff]
    %v211 = vld [vmem:[%s207 + $0x18] sm:$0xff]
    %v212 = vld [vmem:[%s207 + $0x20] sm:$0xff]
    %v213 = vld [vmem:[%s207 + $0x28] sm:$0xff]
    %v214 = vld [vmem:[%s207 + $0x30] sm:$0xff]
    %v215 = vld [vmem:[%s207 + $0x38] sm:$0xff]
    %v216 = vld [vmem:[%s207 + $0x40] sm:$0xff]
    %v217 = vld [vmem:[%s207 + $0x48] sm:$0xff]
    %v218 = vld [vmem:[%s207 + $0x50] sm:$0xff]
    %v219 = vld [vmem:[%s207 + $0x58] sm:$0xff]
    %v220 = vld [vmem:[%s207 + $0x60] sm:$0xff]
    %v221 = vld [vmem:[%s207 + $0x68] sm:$0xff]
    %v222 = vld [vmem:[%s207 + $0x70] sm:$0xff]
    %v223 = vld [vmem:[%s207 + $0x78] sm:$0xff]
    %v226 = vrot.slane %v206, 7
    %v227 = vsel %vm67, %v226, %v205
    %229 = vmatpush.msra.mxu0 %v223
    %230 = vmatpush.msra.mxu0 %v222
    %231 = vmatpush.msra.mxu0 %v221
    %232 = vmatpush.msra.mxu0 %v220
    %233 = vmatpush.msra.mxu0 %v219
    %234 = vmatpush.msra.mxu0 %v218
    %235 = vmatpush.msra.mxu0 %v217
    %236 = vmatpush.msra.mxu0 %v216
    %237 = vmatpush.msra.mxu0 %v215
    %238 = vmatpush.msra.mxu0 %v214
    %239 = vmatpush.msra.mxu0 %v213
    %240 = vmatpush.msra.mxu0 %v212
    %241 = vmatpush.msra.mxu0 %v211
    %242 = vmatpush.msra.mxu0 %v210
    %243 = vmatpush.msra.mxu0 %v209
    %244 = vmatpush.msra.mxu0 %v208
    %245 = vmatmul.f32.gmra.mxu0 %v227
    %v246 = vpop.f32.mrf.mxu0
    %v247 = vadd.f32 0.0, %v246
    %248 = vdwg.mxu0
    %v249 = vadd.f32 %v204, %v247
    %v250 = vld [vmem:[%s0 + $0x5] sm:$0x1]
    %v251 = vld [vmem:[%s0 + $0x25] sm:$0x1]
    %s252 = scalar_lea.vmem %s1, 640
    %v253 = vld [vmem:[%s252] sm:$0xff]
    %v254 = vld [vmem:[%s252 + $0x8] sm:$0xff]
    %v255 = vld [vmem:[%s252 + $0x10] sm:$0xff]
    %v256 = vld [vmem:[%s252 + $0x18] sm:$0xff]
    %v257 = vld [vmem:[%s252 + $0x20] sm:$0xff]
    %v258 = vld [vmem:[%s252 + $0x28] sm:$0xff]
    %v259 = vld [vmem:[%s252 + $0x30] sm:$0xff]
    %v260 = vld [vmem:[%s252 + $0x38] sm:$0xff]
    %v261 = vld [vmem:[%s252 + $0x40] sm:$0xff]
    %v262 = vld [vmem:[%s252 + $0x48] sm:$0xff]
    %v263 = vld [vmem:[%s252 + $0x50] sm:$0xff]
    %v264 = vld [vmem:[%s252 + $0x58] sm:$0xff]
    %v265 = vld [vmem:[%s252 + $0x60] sm:$0xff]
    %v266 = vld [vmem:[%s252 + $0x68] sm:$0xff]
    %v267 = vld [vmem:[%s252 + $0x70] sm:$0xff]
    %v268 = vld [vmem:[%s252 + $0x78] sm:$0xff]
    %v271 = vrot.slane %v251, 7
    %v272 = vsel %vm67, %v271, %v250
    %274 = vmatpush.msra.mxu0 %v268
    %275 = vmatpush.msra.mxu0 %v267
    %276 = vmatpush.msra.mxu0 %v266
    %277 = vmatpush.msra.mxu0 %v265
    %278 = vmatpush.msra.mxu0 %v264
    %279 = vmatpush.msra.mxu0 %v263
    %280 = vmatpush.msra.mxu0 %v262
    %281 = vmatpush.msra.mxu0 %v261
    %282 = vmatpush.msra.mxu0 %v260
    %283 = vmatpush.msra.mxu0 %v259
    %284 = vmatpush.msra.mxu0 %v258
    %285 = vmatpush.msra.mxu0 %v257
    %286 = vmatpush.msra.mxu0 %v256
    %287 = vmatpush.msra.mxu0 %v255
    %288 = vmatpush.msra.mxu0 %v254
    %289 = vmatpush.msra.mxu0 %v253
    %290 = vmatmul.f32.gmra.mxu0 %v272
    %v291 = vpop.f32.mrf.mxu0
    %v292 = vadd.f32 0.0, %v291
    %293 = vdwg.mxu0
    %v294 = vadd.f32 %v249, %v292
    %v295 = vld [vmem:[%s0 + $0x6] sm:$0x1]
    %v296 = vld [vmem:[%s0 + $0x26] sm:$0x1]
    %s297 = scalar_lea.vmem %s1, 768
    %v298 = vld [vmem:[%s297] sm:$0xff]
    %v299 = vld [vmem:[%s297 + $0x8] sm:$0xff]
    %v300 = vld [vmem:[%s297 + $0x10] sm:$0xff]
    %v301 = vld [vmem:[%s297 + $0x18] sm:$0xff]
    %v302 = vld [vmem:[%s297 + $0x20] sm:$0xff]
    %v303 = vld [vmem:[%s297 + $0x28] sm:$0xff]
    %v304 = vld [vmem:[%s297 + $0x30] sm:$0xff]
    %v305 = vld [vmem:[%s297 + $0x38] sm:$0xff]
    %v306 = vld [vmem:[%s297 + $0x40] sm:$0xff]
    %v307 = vld [vmem:[%s297 + $0x48] sm:$0xff]
    %v308 = vld [vmem:[%s297 + $0x50] sm:$0xff]
    %v309 = vld [vmem:[%s297 + $0x58] sm:$0xff]
    %v310 = vld [vmem:[%s297 + $0x60] sm:$0xff]
    %v311 = vld [vmem:[%s297 + $0x68] sm:$0xff]
    %v312 = vld [vmem:[%s297 + $0x70] sm:$0xff]
    %v313 = vld [vmem:[%s297 + $0x78] sm:$0xff]
    %v316 = vrot.slane %v296, 7
    %v317 = vsel %vm67, %v316, %v295
    %319 = vmatpush.msra.mxu0 %v313
    %320 = vmatpush.msra.mxu0 %v312
    %321 = vmatpush.msra.mxu0 %v311
    %322 = vmatpush.msra.mxu0 %v310
    %323 = vmatpush.msra.mxu0 %v309
    %324 = vmatpush.msra.mxu0 %v308
    %325 = vmatpush.msra.mxu0 %v307
    %326 = vmatpush.msra.mxu0 %v306
    %327 = vmatpush.msra.mxu0 %v305
    %328 = vmatpush.msra.mxu0 %v304
    %329 = vmatpush.msra.mxu0 %v303
    %330 = vmatpush.msra.mxu0 %v302
    %331 = vmatpush.msra.mxu0 %v301
    %332 = vmatpush.msra.mxu0 %v300
    %333 = vmatpush.msra.mxu0 %v299
    %334 = vmatpush.msra.mxu0 %v298
    %335 = vmatmul.f32.gmra.mxu0 %v317
    %v336 = vpop.f32.mrf.mxu0
    %v337 = vadd.f32 0.0, %v336
    %338 = vdwg.mxu0
    %v339 = vadd.f32 %v294, %v337
    %v340 = vld [vmem:[%s0 + $0x7] sm:$0x1]
    %v341 = vld [vmem:[%s0 + $0x27] sm:$0x1]
    %s342 = scalar_lea.vmem %s1, 896
    %v343 = vld [vmem:[%s342] sm:$0xff]
    %v344 = vld [vmem:[%s342 + $0x8] sm:$0xff]
    %v345 = vld [vmem:[%s342 + $0x10] sm:$0xff]
    %v346 = vld [vmem:[%s342 + $0x18] sm:$0xff]
    %v347 = vld [vmem:[%s342 + $0x20] sm:$0xff]
    %v348 = vld [vmem:[%s342 + $0x28] sm:$0xff]
    %v349 = vld [vmem:[%s342 + $0x30] sm:$0xff]
    %v350 = vld [vmem:[%s342 + $0x38] sm:$0xff]
    %v351 = vld [vmem:[%s342 + $0x40] sm:$0xff]
    %v352 = vld [vmem:[%s342 + $0x48] sm:$0xff]
    %v353 = vld [vmem:[%s342 + $0x50] sm:$0xff]
    %v354 = vld [vmem:[%s342 + $0x58] sm:$0xff]
    %v355 = vld [vmem:[%s342 + $0x60] sm:$0xff]
    %v356 = vld [vmem:[%s342 + $0x68] sm:$0xff]
    %v357 = vld [vmem:[%s342 + $0x70] sm:$0xff]
    %v358 = vld [vmem:[%s342 + $0x78] sm:$0xff]
    %v361 = vrot.slane %v341, 7
    %v362 = vsel %vm67, %v361, %v340
    %364 = vmatpush.msra.mxu0 %v358
    %365 = vmatpush.msra.mxu0 %v357
    %366 = vmatpush.msra.mxu0 %v356
    %367 = vmatpush.msra.mxu0 %v355
    %368 = vmatpush.msra.mxu0 %v354
    %369 = vmatpush.msra.mxu0 %v353
    %370 = vmatpush.msra.mxu0 %v352
    %371 = vmatpush.msra.mxu0 %v351
    %372 = vmatpush.msra.mxu0 %v350
    %373 = vmatpush.msra.mxu0 %v349
    %374 = vmatpush.msra.mxu0 %v348
    %375 = vmatpush.msra.mxu0 %v347
    %376 = vmatpush.msra.mxu0 %v346
    %377 = vmatpush.msra.mxu0 %v345
    %378 = vmatpush.msra.mxu0 %v344
    %379 = vmatpush.msra.mxu0 %v343
    %380 = vmatmul.f32.gmra.mxu0 %v362
    %v381 = vpop.f32.mrf.mxu0
    %v382 = vadd.f32 0.0, %v381
    %383 = vdwg.mxu0
    %v384 = vadd.f32 %v339, %v382
    %v385 = vld [vmem:[%s0 + $0x8] sm:$0x1]
    %v386 = vld [vmem:[%s0 + $0x28] sm:$0x1]
    %s387 = scalar_lea.vmem %s1, 1024
    %v388 = vld [vmem:[%s387] sm:$0xff]
    %v389 = vld [vmem:[%s387 + $0x8] sm:$0xff]
    %v390 = vld [vmem:[%s387 + $0x10] sm:$0xff]
    %v391 = vld [vmem:[%s387 + $0x18] sm:$0xff]
    %v392 = vld [vmem:[%s387 + $0x20] sm:$0xff]
    %v393 = vld [vmem:[%s387 + $0x28] sm:$0xff]
    %v394 = vld [vmem:[%s387 + $0x30] sm:$0xff]
    %v395 = vld [vmem:[%s387 + $0x38] sm:$0xff]
    %v396 = vld [vmem:[%s387 + $0x40] sm:$0xff]
    %v397 = vld [vmem:[%s387 + $0x48] sm:$0xff]
    %v398 = vld [vmem:[%s387 + $0x50] sm:$0xff]
    %v399 = vld [vmem:[%s387 + $0x58] sm:$0xff]
    %v400 = vld [vmem:[%s387 + $0x60] sm:$0xff]
    %v401 = vld [vmem:[%s387 + $0x68] sm:$0xff]
    %v402 = vld [vmem:[%s387 + $0x70] sm:$0xff]
    %v403 = vld [vmem:[%s387 + $0x78] sm:$0xff]
    %v406 = vrot.slane %v386, 7
    %v407 = vsel %vm67, %v406, %v385
    %409 = vmatpush.msra.mxu0 %v403
    %410 = vmatpush.msra.mxu0 %v402
    %411 = vmatpush.msra.mxu0 %v401
    %412 = vmatpush.msra.mxu0 %v400
    %413 = vmatpush.msra.mxu0 %v399
    %414 = vmatpush.msra.mxu0 %v398
    %415 = vmatpush.msra.mxu0 %v397
    %416 = vmatpush.msra.mxu0 %v396
    %417 = vmatpush.msra.mxu0 %v395
    %418 = vmatpush.msra.mxu0 %v394
    %419 = vmatpush.msra.mxu0 %v393
    %420 = vmatpush.msra.mxu0 %v392
    %421 = vmatpush.msra.mxu0 %v391
    %422 = vmatpush.msra.mxu0 %v390
    %423 = vmatpush.msra.mxu0 %v389
    %424 = vmatpush.msra.mxu0 %v388
    %425 = vmatmul.f32.gmra.mxu0 %v407
    %v426 = vpop.f32.mrf.mxu0
    %v427 = vadd.f32 0.0, %v426
    %428 = vdwg.mxu0
    %v429 = vadd.f32 %v384, %v427
    %v430 = vld [vmem:[%s0 + $0x9] sm:$0x1]
    %v431 = vld [vmem:[%s0 + $0x29] sm:$0x1]
    %s432 = scalar_lea.vmem %s1, 1152
    %v433 = vld [vmem:[%s432] sm:$0xff]
    %v434 = vld [vmem:[%s432 + $0x8] sm:$0xff]
    %v435 = vld [vmem:[%s432 + $0x10] sm:$0xff]
    %v436 = vld [vmem:[%s432 + $0x18] sm:$0xff]
    %v437 = vld [vmem:[%s432 + $0x20] sm:$0xff]
    %v438 = vld [vmem:[%s432 + $0x28] sm:$0xff]
    %v439 = vld [vmem:[%s432 + $0x30] sm:$0xff]
    %v440 = vld [vmem:[%s432 + $0x38] sm:$0xff]
    %v441 = vld [vmem:[%s432 + $0x40] sm:$0xff]
    %v442 = vld [vmem:[%s432 + $0x48] sm:$0xff]
    %v443 = vld [vmem:[%s432 + $0x50] sm:$0xff]
    %v444 = vld [vmem:[%s432 + $0x58] sm:$0xff]
    %v445 = vld [vmem:[%s432 + $0x60] sm:$0xff]
    %v446 = vld [vmem:[%s432 + $0x68] sm:$0xff]
    %v447 = vld [vmem:[%s432 + $0x70] sm:$0xff]
    %v448 = vld [vmem:[%s432 + $0x78] sm:$0xff]
    %v451 = vrot.slane %v431, 7
    %v452 = vsel %vm67, %v451, %v430
    %454 = vmatpush.msra.mxu0 %v448
    %455 = vmatpush.msra.mxu0 %v447
    %456 = vmatpush.msra.mxu0 %v446
    %457 = vmatpush.msra.mxu0 %v445
    %458 = vmatpush.msra.mxu0 %v444
    %459 = vmatpush.msra.mxu0 %v443
    %460 = vmatpush.msra.mxu0 %v442
    %461 = vmatpush.msra.mxu0 %v441
    %462 = vmatpush.msra.mxu0 %v440
    %463 = vmatpush.msra.mxu0 %v439
    %464 = vmatpush.msra.mxu0 %v438
    %465 = vmatpush.msra.mxu0 %v437
    %466 = vmatpush.msra.mxu0 %v436
    %467 = vmatpush.msra.mxu0 %v435
    %468 = vmatpush.msra.mxu0 %v434
    %469 = vmatpush.msra.mxu0 %v433
    %470 = vmatmul.f32.gmra.mxu0 %v452
    %v471 = vpop.f32.mrf.mxu0
    %v472 = vadd.f32 0.0, %v471
    %473 = vdwg.mxu0
    %v474 = vadd.f32 %v429, %v472
    %v475 = vld [vmem:[%s0 + $0xa] sm:$0x1]
    %v476 = vld [vmem:[%s0 + $0x2a] sm:$0x1]
    %s477 = scalar_lea.vmem %s1, 1280
    %v478 = vld [vmem:[%s477] sm:$0xff]
    %v479 = vld [vmem:[%s477 + $0x8] sm:$0xff]
    %v480 = vld [vmem:[%s477 + $0x10] sm:$0xff]
    %v481 = vld [vmem:[%s477 + $0x18] sm:$0xff]
    %v482 = vld [vmem:[%s477 + $0x20] sm:$0xff]
    %v483 = vld [vmem:[%s477 + $0x28] sm:$0xff]
    %v484 = vld [vmem:[%s477 + $0x30] sm:$0xff]
    %v485 = vld [vmem:[%s477 + $0x38] sm:$0xff]
    %v486 = vld [vmem:[%s477 + $0x40] sm:$0xff]
    %v487 = vld [vmem:[%s477 + $0x48] sm:$0xff]
    %v488 = vld [vmem:[%s477 + $0x50] sm:$0xff]
    %v489 = vld [vmem:[%s477 + $0x58] sm:$0xff]
    %v490 = vld [vmem:[%s477 + $0x60] sm:$0xff]
    %v491 = vld [vmem:[%s477 + $0x68] sm:$0xff]
    %v492 = vld [vmem:[%s477 + $0x70] sm:$0xff]
    %v493 = vld [vmem:[%s477 + $0x78] sm:$0xff]
    %v496 = vrot.slane %v476, 7
    %v497 = vsel %vm67, %v496, %v475
    %499 = vmatpush.msra.mxu0 %v493
    %500 = vmatpush.msra.mxu0 %v492
    %501 = vmatpush.msra.mxu0 %v491
    %502 = vmatpush.msra.mxu0 %v490
    %503 = vmatpush.msra.mxu0 %v489
    %504 = vmatpush.msra.mxu0 %v488
    %505 = vmatpush.msra.mxu0 %v487
    %506 = vmatpush.msra.mxu0 %v486
    %507 = vmatpush.msra.mxu0 %v485
    %508 = vmatpush.msra.mxu0 %v484
    %509 = vmatpush.msra.mxu0 %v483
    %510 = vmatpush.msra.mxu0 %v482
    %511 = vmatpush.msra.mxu0 %v481
    %512 = vmatpush.msra.mxu0 %v480
    %513 = vmatpush.msra.mxu0 %v479
    %514 = vmatpush.msra.mxu0 %v478
    %515 = vmatmul.f32.gmra.mxu0 %v497
    %v516 = vpop.f32.mrf.mxu0
    %v517 = vadd.f32 0.0, %v516
    %518 = vdwg.mxu0
    %v519 = vadd.f32 %v474, %v517
    %v520 = vld [vmem:[%s0 + $0xb] sm:$0x1]
    %v521 = vld [vmem:[%s0 + $0x2b] sm:$0x1]
    %s522 = scalar_lea.vmem %s1, 1408
    %v523 = vld [vmem:[%s522] sm:$0xff]
    %v524 = vld [vmem:[%s522 + $0x8] sm:$0xff]
    %v525 = vld [vmem:[%s522 + $0x10] sm:$0xff]
    %v526 = vld [vmem:[%s522 + $0x18] sm:$0xff]
    %v527 = vld [vmem:[%s522 + $0x20] sm:$0xff]
    %v528 = vld [vmem:[%s522 + $0x28] sm:$0xff]
    %v529 = vld [vmem:[%s522 + $0x30] sm:$0xff]
    %v530 = vld [vmem:[%s522 + $0x38] sm:$0xff]
    %v531 = vld [vmem:[%s522 + $0x40] sm:$0xff]
    %v532 = vld [vmem:[%s522 + $0x48] sm:$0xff]
    %v533 = vld [vmem:[%s522 + $0x50] sm:$0xff]
    %v534 = vld [vmem:[%s522 + $0x58] sm:$0xff]
    %v535 = vld [vmem:[%s522 + $0x60] sm:$0xff]
    %v536 = vld [vmem:[%s522 + $0x68] sm:$0xff]
    %v537 = vld [vmem:[%s522 + $0x70] sm:$0xff]
    %v538 = vld [vmem:[%s522 + $0x78] sm:$0xff]
    %v541 = vrot.slane %v521, 7
    %v542 = vsel %vm67, %v541, %v520
    %544 = vmatpush.msra.mxu0 %v538
    %545 = vmatpush.msra.mxu0 %v537
    %546 = vmatpush.msra.mxu0 %v536
    %547 = vmatpush.msra.mxu0 %v535
    %548 = vmatpush.msra.mxu0 %v534
    %549 = vmatpush.msra.mxu0 %v533
    %550 = vmatpush.msra.mxu0 %v532
    %551 = vmatpush.msra.mxu0 %v531
    %552 = vmatpush.msra.mxu0 %v530
    %553 = vmatpush.msra.mxu0 %v529
    %554 = vmatpush.msra.mxu0 %v528
    %555 = vmatpush.msra.mxu0 %v527
    %556 = vmatpush.msra.mxu0 %v526
    %557 = vmatpush.msra.mxu0 %v525
    %558 = vmatpush.msra.mxu0 %v524
    %559 = vmatpush.msra.mxu0 %v523
    %560 = vmatmul.f32.gmra.mxu0 %v542
    %v561 = vpop.f32.mrf.mxu0
    %v562 = vadd.f32 0.0, %v561
    %563 = vdwg.mxu0
    %v564 = vadd.f32 %v519, %v562
    %v565 = vld [vmem:[%s0 + $0xc] sm:$0x1]
    %v566 = vld [vmem:[%s0 + $0x2c] sm:$0x1]
    %s567 = scalar_lea.vmem %s1, 1536
    %v568 = vld [vmem:[%s567] sm:$0xff]
    %v569 = vld [vmem:[%s567 + $0x8] sm:$0xff]
    %v570 = vld [vmem:[%s567 + $0x10] sm:$0xff]
    %v571 = vld [vmem:[%s567 + $0x18] sm:$0xff]
    %v572 = vld [vmem:[%s567 + $0x20] sm:$0xff]
    %v573 = vld [vmem:[%s567 + $0x28] sm:$0xff]
    %v574 = vld [vmem:[%s567 + $0x30] sm:$0xff]
    %v575 = vld [vmem:[%s567 + $0x38] sm:$0xff]
    %v576 = vld [vmem:[%s567 + $0x40] sm:$0xff]
    %v577 = vld [vmem:[%s567 + $0x48] sm:$0xff]
    %v578 = vld [vmem:[%s567 + $0x50] sm:$0xff]
    %v579 = vld [vmem:[%s567 + $0x58] sm:$0xff]
    %v580 = vld [vmem:[%s567 + $0x60] sm:$0xff]
    %v581 = vld [vmem:[%s567 + $0x68] sm:$0xff]
    %v582 = vld [vmem:[%s567 + $0x70] sm:$0xff]
    %v583 = vld [vmem:[%s567 + $0x78] sm:$0xff]
    %v586 = vrot.slane %v566, 7
    %v587 = vsel %vm67, %v586, %v565
    %589 = vmatpush.msra.mxu0 %v583
    %590 = vmatpush.msra.mxu0 %v582
    %591 = vmatpush.msra.mxu0 %v581
    %592 = vmatpush.msra.mxu0 %v580
    %593 = vmatpush.msra.mxu0 %v579
    %594 = vmatpush.msra.mxu0 %v578
    %595 = vmatpush.msra.mxu0 %v577
    %596 = vmatpush.msra.mxu0 %v576
    %597 = vmatpush.msra.mxu0 %v575
    %598 = vmatpush.msra.mxu0 %v574
    %599 = vmatpush.msra.mxu0 %v573
    %600 = vmatpush.msra.mxu0 %v572
    %601 = vmatpush.msra.mxu0 %v571
    %602 = vmatpush.msra.mxu0 %v570
    %603 = vmatpush.msra.mxu0 %v569
    %604 = vmatpush.msra.mxu0 %v568
    %605 = vmatmul.f32.gmra.mxu0 %v587
    %v606 = vpop.f32.mrf.mxu0
    %v607 = vadd.f32 0.0, %v606
    %608 = vdwg.mxu0
    %v609 = vadd.f32 %v564, %v607
    %v610 = vld [vmem:[%s0 + $0xd] sm:$0x1]
    %v611 = vld [vmem:[%s0 + $0x2d] sm:$0x1]
    %s612 = scalar_lea.vmem %s1, 1664
    %v613 = vld [vmem:[%s612] sm:$0xff]
    %v614 = vld [vmem:[%s612 + $0x8] sm:$0xff]
    %v615 = vld [vmem:[%s612 + $0x10] sm:$0xff]
    %v616 = vld [vmem:[%s612 + $0x18] sm:$0xff]
    %v617 = vld [vmem:[%s612 + $0x20] sm:$0xff]
    %v618 = vld [vmem:[%s612 + $0x28] sm:$0xff]
    %v619 = vld [vmem:[%s612 + $0x30] sm:$0xff]
    %v620 = vld [vmem:[%s612 + $0x38] sm:$0xff]
    %v621 = vld [vmem:[%s612 + $0x40] sm:$0xff]
    %v622 = vld [vmem:[%s612 + $0x48] sm:$0xff]
    %v623 = vld [vmem:[%s612 + $0x50] sm:$0xff]
    %v624 = vld [vmem:[%s612 + $0x58] sm:$0xff]
    %v625 = vld [vmem:[%s612 + $0x60] sm:$0xff]
    %v626 = vld [vmem:[%s612 + $0x68] sm:$0xff]
    %v627 = vld [vmem:[%s612 + $0x70] sm:$0xff]
    %v628 = vld [vmem:[%s612 + $0x78] sm:$0xff]
    %v631 = vrot.slane %v611, 7
    %v632 = vsel %vm67, %v631, %v610
    %634 = vmatpush.msra.mxu0 %v628
    %635 = vmatpush.msra.mxu0 %v627
    %636 = vmatpush.msra.mxu0 %v626
    %637 = vmatpush.msra.mxu0 %v625
    %638 = vmatpush.msra.mxu0 %v624
    %639 = vmatpush.msra.mxu0 %v623
    %640 = vmatpush.msra.mxu0 %v622
    %641 = vmatpush.msra.mxu0 %v621
    %642 = vmatpush.msra.mxu0 %v620
    %643 = vmatpush.msra.mxu0 %v619
    %644 = vmatpush.msra.mxu0 %v618
    %645 = vmatpush.msra.mxu0 %v617
    %646 = vmatpush.msra.mxu0 %v616
    %647 = vmatpush.msra.mxu0 %v615
    %648 = vmatpush.msra.mxu0 %v614
    %649 = vmatpush.msra.mxu0 %v613
    %650 = vmatmul.f32.gmra.mxu0 %v632
    %v651 = vpop.f32.mrf.mxu0
    %v652 = vadd.f32 0.0, %v651
    %653 = vdwg.mxu0
    %v654 = vadd.f32 %v609, %v652
    %v655 = vld [vmem:[%s0 + $0xe] sm:$0x1]
    %v656 = vld [vmem:[%s0 + $0x2e] sm:$0x1]
    %s657 = scalar_lea.vmem %s1, 1792
    %v658 = vld [vmem:[%s657] sm:$0xff]
    %v659 = vld [vmem:[%s657 + $0x8] sm:$0xff]
    %v660 = vld [vmem:[%s657 + $0x10] sm:$0xff]
    %v661 = vld [vmem:[%s657 + $0x18] sm:$0xff]
    %v662 = vld [vmem:[%s657 + $0x20] sm:$0xff]
    %v663 = vld [vmem:[%s657 + $0x28] sm:$0xff]
    %v664 = vld [vmem:[%s657 + $0x30] sm:$0xff]
    %v665 = vld [vmem:[%s657 + $0x38] sm:$0xff]
    %v666 = vld [vmem:[%s657 + $0x40] sm:$0xff]
    %v667 = vld [vmem:[%s657 + $0x48] sm:$0xff]
    %v668 = vld [vmem:[%s657 + $0x50] sm:$0xff]
    %v669 = vld [vmem:[%s657 + $0x58] sm:$0xff]
    %v670 = vld [vmem:[%s657 + $0x60] sm:$0xff]
    %v671 = vld [vmem:[%s657 + $0x68] sm:$0xff]
    %v672 = vld [vmem:[%s657 + $0x70] sm:$0xff]
    %v673 = vld [vmem:[%s657 + $0x78] sm:$0xff]
    %v676 = vrot.slane %v656, 7
    %v677 = vsel %vm67, %v676, %v655
    %679 = vmatpush.msra.mxu0 %v673
    %680 = vmatpush.msra.mxu0 %v672
    %681 = vmatpush.msra.mxu0 %v671
    %682 = vmatpush.msra.mxu0 %v670
    %683 = vmatpush.msra.mxu0 %v669
    %684 = vmatpush.msra.mxu0 %v668
    %685 = vmatpush.msra.mxu0 %v667
    %686 = vmatpush.msra.mxu0 %v666
    %687 = vmatpush.msra.mxu0 %v665
    %688 = vmatpush.msra.mxu0 %v664
    %689 = vmatpush.msra.mxu0 %v663
    %690 = vmatpush.msra.mxu0 %v662
    %691 = vmatpush.msra.mxu0 %v661
    %692 = vmatpush.msra.mxu0 %v660
    %693 = vmatpush.msra.mxu0 %v659
    %694 = vmatpush.msra.mxu0 %v658
    %695 = vmatmul.f32.gmra.mxu0 %v677
    %v696 = vpop.f32.mrf.mxu0
    %v697 = vadd.f32 0.0, %v696
    %698 = vdwg.mxu0
    %v699 = vadd.f32 %v654, %v697
    %v700 = vld [vmem:[%s0 + $0xf] sm:$0x1]
    %v701 = vld [vmem:[%s0 + $0x2f] sm:$0x1]
    %s702 = scalar_lea.vmem %s1, 1920
    %v703 = vld [vmem:[%s702] sm:$0xff]
    %v704 = vld [vmem:[%s702 + $0x8] sm:$0xff]
    %v705 = vld [vmem:[%s702 + $0x10] sm:$0xff]
    %v706 = vld [vmem:[%s702 + $0x18] sm:$0xff]
    %v707 = vld [vmem:[%s702 + $0x20] sm:$0xff]
    %v708 = vld [vmem:[%s702 + $0x28] sm:$0xff]
    %v709 = vld [vmem:[%s702 + $0x30] sm:$0xff]
    %v710 = vld [vmem:[%s702 + $0x38] sm:$0xff]
    %v711 = vld [vmem:[%s702 + $0x40] sm:$0xff]
    %v712 = vld [vmem:[%s702 + $0x48] sm:$0xff]
    %v713 = vld [vmem:[%s702 + $0x50] sm:$0xff]
    %v714 = vld [vmem:[%s702 + $0x58] sm:$0xff]
    %v715 = vld [vmem:[%s702 + $0x60] sm:$0xff]
    %v716 = vld [vmem:[%s702 + $0x68] sm:$0xff]
    %v717 = vld [vmem:[%s702 + $0x70] sm:$0xff]
    %v718 = vld [vmem:[%s702 + $0x78] sm:$0xff]
    %v721 = vrot.slane %v701, 7
    %v722 = vsel %vm67, %v721, %v700
    %724 = vmatpush.msra.mxu0 %v718
    %725 = vmatpush.msra.mxu0 %v717
    %726 = vmatpush.msra.mxu0 %v716
    %727 = vmatpush.msra.mxu0 %v715
    %728 = vmatpush.msra.mxu0 %v714
    %729 = vmatpush.msra.mxu0 %v713
    %730 = vmatpush.msra.mxu0 %v712
    %731 = vmatpush.msra.mxu0 %v711
    %732 = vmatpush.msra.mxu0 %v710
    %733 = vmatpush.msra.mxu0 %v709
    %734 = vmatpush.msra.mxu0 %v708
    %735 = vmatpush.msra.mxu0 %v707
    %736 = vmatpush.msra.mxu0 %v706
    %737 = vmatpush.msra.mxu0 %v705
    %738 = vmatpush.msra.mxu0 %v704
    %739 = vmatpush.msra.mxu0 %v703
    %740 = vmatmul.f32.gmra.mxu0 %v722
    %v741 = vpop.f32.mrf.mxu0
    %v742 = vadd.f32 0.0, %v741
    %743 = vdwg.mxu0
    %v744 = vadd.f32 %v699, %v742
    %v745 = vld [vmem:[%s0 + $0x10] sm:$0x1]
    %v746 = vld [vmem:[%s0 + $0x30] sm:$0x1]
    %s747 = scalar_lea.vmem %s1, 2048
    %v748 = vld [vmem:[%s747] sm:$0xff]
    %v749 = vld [vmem:[%s747 + $0x8] sm:$0xff]
    %v750 = vld [vmem:[%s747 + $0x10] sm:$0xff]
    %v751 = vld [vmem:[%s747 + $0x18] sm:$0xff]
    %v752 = vld [vmem:[%s747 + $0x20] sm:$0xff]
    %v753 = vld [vmem:[%s747 + $0x28] sm:$0xff]
    %v754 = vld [vmem:[%s747 + $0x30] sm:$0xff]
    %v755 = vld [vmem:[%s747 + $0x38] sm:$0xff]
    %v756 = vld [vmem:[%s747 + $0x40] sm:$0xff]
    %v757 = vld [vmem:[%s747 + $0x48] sm:$0xff]
    %v758 = vld [vmem:[%s747 + $0x50] sm:$0xff]
    %v759 = vld [vmem:[%s747 + $0x58] sm:$0xff]
    %v760 = vld [vmem:[%s747 + $0x60] sm:$0xff]
    %v761 = vld [vmem:[%s747 + $0x68] sm:$0xff]
    %v762 = vld [vmem:[%s747 + $0x70] sm:$0xff]
    %v763 = vld [vmem:[%s747 + $0x78] sm:$0xff]
    %v766 = vrot.slane %v746, 7
    %v767 = vsel %vm67, %v766, %v745
    %769 = vmatpush.msra.mxu0 %v763
    %770 = vmatpush.msra.mxu0 %v762
    %771 = vmatpush.msra.mxu0 %v761
    %772 = vmatpush.msra.mxu0 %v760
    %773 = vmatpush.msra.mxu0 %v759
    %774 = vmatpush.msra.mxu0 %v758
    %775 = vmatpush.msra.mxu0 %v757
    %776 = vmatpush.msra.mxu0 %v756
    %777 = vmatpush.msra.mxu0 %v755
    %778 = vmatpush.msra.mxu0 %v754
    %779 = vmatpush.msra.mxu0 %v753
    %780 = vmatpush.msra.mxu0 %v752
    %781 = vmatpush.msra.mxu0 %v751
    %782 = vmatpush.msra.mxu0 %v750
    %783 = vmatpush.msra.mxu0 %v749
    %784 = vmatpush.msra.mxu0 %v748
    %785 = vmatmul.f32.gmra.mxu0 %v767
    %v786 = vpop.f32.mrf.mxu0
    %v787 = vadd.f32 0.0, %v786
    %788 = vdwg.mxu0
    %v789 = vadd.f32 %v744, %v787
    %v790 = vld [vmem:[%s0 + $0x11] sm:$0x1]
    %v791 = vld [vmem:[%s0 + $0x31] sm:$0x1]
    %s792 = scalar_lea.vmem %s1, 2176
    %v793 = vld [vmem:[%s792] sm:$0xff]
    %v794 = vld [vmem:[%s792 + $0x8] sm:$0xff]
    %v795 = vld [vmem:[%s792 + $0x10] sm:$0xff]
    %v796 = vld [vmem:[%s792 + $0x18] sm:$0xff]
    %v797 = vld [vmem:[%s792 + $0x20] sm:$0xff]
    %v798 = vld [vmem:[%s792 + $0x28] sm:$0xff]
    %v799 = vld [vmem:[%s792 + $0x30] sm:$0xff]
    %v800 = vld [vmem:[%s792 + $0x38] sm:$0xff]
    %v801 = vld [vmem:[%s792 + $0x40] sm:$0xff]
    %v802 = vld [vmem:[%s792 + $0x48] sm:$0xff]
    %v803 = vld [vmem:[%s792 + $0x50] sm:$0xff]
    %v804 = vld [vmem:[%s792 + $0x58] sm:$0xff]
    %v805 = vld [vmem:[%s792 + $0x60] sm:$0xff]
    %v806 = vld [vmem:[%s792 + $0x68] sm:$0xff]
    %v807 = vld [vmem:[%s792 + $0x70] sm:$0xff]
    %v808 = vld [vmem:[%s792 + $0x78] sm:$0xff]
    %v811 = vrot.slane %v791, 7
    %v812 = vsel %vm67, %v811, %v790
    %814 = vmatpush.msra.mxu0 %v808
    %815 = vmatpush.msra.mxu0 %v807
    %816 = vmatpush.msra.mxu0 %v806
    %817 = vmatpush.msra.mxu0 %v805
    %818 = vmatpush.msra.mxu0 %v804
    %819 = vmatpush.msra.mxu0 %v803
    %820 = vmatpush.msra.mxu0 %v802
    %821 = vmatpush.msra.mxu0 %v801
    %822 = vmatpush.msra.mxu0 %v800
    %823 = vmatpush.msra.mxu0 %v799
    %824 = vmatpush.msra.mxu0 %v798
    %825 = vmatpush.msra.mxu0 %v797
    %826 = vmatpush.msra.mxu0 %v796
    %827 = vmatpush.msra.mxu0 %v795
    %828 = vmatpush.msra.mxu0 %v794
    %829 = vmatpush.msra.mxu0 %v793
    %830 = vmatmul.f32.gmra.mxu0 %v812
    %v831 = vpop.f32.mrf.mxu0
    %v832 = vadd.f32 0.0, %v831
    %833 = vdwg.mxu0
    %v834 = vadd.f32 %v789, %v832
    %v835 = vld [vmem:[%s0 + $0x12] sm:$0x1]
    %v836 = vld [vmem:[%s0 + $0x32] sm:$0x1]
    %s837 = scalar_lea.vmem %s1, 2304
    %v838 = vld [vmem:[%s837] sm:$0xff]
    %v839 = vld [vmem:[%s837 + $0x8] sm:$0xff]
    %v840 = vld [vmem:[%s837 + $0x10] sm:$0xff]
    %v841 = vld [vmem:[%s837 + $0x18] sm:$0xff]
    %v842 = vld [vmem:[%s837 + $0x20] sm:$0xff]
    %v843 = vld [vmem:[%s837 + $0x28] sm:$0xff]
    %v844 = vld [vmem:[%s837 + $0x30] sm:$0xff]
    %v845 = vld [vmem:[%s837 + $0x38] sm:$0xff]
    %v846 = vld [vmem:[%s837 + $0x40] sm:$0xff]
    %v847 = vld [vmem:[%s837 + $0x48] sm:$0xff]
    %v848 = vld [vmem:[%s837 + $0x50] sm:$0xff]
    %v849 = vld [vmem:[%s837 + $0x58] sm:$0xff]
    %v850 = vld [vmem:[%s837 + $0x60] sm:$0xff]
    %v851 = vld [vmem:[%s837 + $0x68] sm:$0xff]
    %v852 = vld [vmem:[%s837 + $0x70] sm:$0xff]
    %v853 = vld [vmem:[%s837 + $0x78] sm:$0xff]
    %v856 = vrot.slane %v836, 7
    %v857 = vsel %vm67, %v856, %v835
    %859 = vmatpush.msra.mxu0 %v853
    %860 = vmatpush.msra.mxu0 %v852
    %861 = vmatpush.msra.mxu0 %v851
    %862 = vmatpush.msra.mxu0 %v850
    %863 = vmatpush.msra.mxu0 %v849
    %864 = vmatpush.msra.mxu0 %v848
    %865 = vmatpush.msra.mxu0 %v847
    %866 = vmatpush.msra.mxu0 %v846
    %867 = vmatpush.msra.mxu0 %v845
    %868 = vmatpush.msra.mxu0 %v844
    %869 = vmatpush.msra.mxu0 %v843
    %870 = vmatpush.msra.mxu0 %v842
    %871 = vmatpush.msra.mxu0 %v841
    %872 = vmatpush.msra.mxu0 %v840
    %873 = vmatpush.msra.mxu0 %v839
    %874 = vmatpush.msra.mxu0 %v838
    %875 = vmatmul.f32.gmra.mxu0 %v857
    %v876 = vpop.f32.mrf.mxu0
    %v877 = vadd.f32 0.0, %v876
    %878 = vdwg.mxu0
    %v879 = vadd.f32 %v834, %v877
    %v880 = vld [vmem:[%s0 + $0x13] sm:$0x1]
    %v881 = vld [vmem:[%s0 + $0x33] sm:$0x1]
    %s882 = scalar_lea.vmem %s1, 2432
    %v883 = vld [vmem:[%s882] sm:$0xff]
    %v884 = vld [vmem:[%s882 + $0x8] sm:$0xff]
    %v885 = vld [vmem:[%s882 + $0x10] sm:$0xff]
    %v886 = vld [vmem:[%s882 + $0x18] sm:$0xff]
    %v887 = vld [vmem:[%s882 + $0x20] sm:$0xff]
    %v888 = vld [vmem:[%s882 + $0x28] sm:$0xff]
    %v889 = vld [vmem:[%s882 + $0x30] sm:$0xff]
    %v890 = vld [vmem:[%s882 + $0x38] sm:$0xff]
    %v891 = vld [vmem:[%s882 + $0x40] sm:$0xff]
    %v892 = vld [vmem:[%s882 + $0x48] sm:$0xff]
    %v893 = vld [vmem:[%s882 + $0x50] sm:$0xff]
    %v894 = vld [vmem:[%s882 + $0x58] sm:$0xff]
    %v895 = vld [vmem:[%s882 + $0x60] sm:$0xff]
    %v896 = vld [vmem:[%s882 + $0x68] sm:$0xff]
    %v897 = vld [vmem:[%s882 + $0x70] sm:$0xff]
    %v898 = vld [vmem:[%s882 + $0x78] sm:$0xff]
    %v901 = vrot.slane %v881, 7
    %v902 = vsel %vm67, %v901, %v880
    %904 = vmatpush.msra.mxu0 %v898
    %905 = vmatpush.msra.mxu0 %v897
    %906 = vmatpush.msra.mxu0 %v896
    %907 = vmatpush.msra.mxu0 %v895
    %908 = vmatpush.msra.mxu0 %v894
    %909 = vmatpush.msra.mxu0 %v893
    %910 = vmatpush.msra.mxu0 %v892
    %911 = vmatpush.msra.mxu0 %v891
    %912 = vmatpush.msra.mxu0 %v890
    %913 = vmatpush.msra.mxu0 %v889
    %914 = vmatpush.msra.mxu0 %v888
    %915 = vmatpush.msra.mxu0 %v887
    %916 = vmatpush.msra.mxu0 %v886
    %917 = vmatpush.msra.mxu0 %v885
    %918 = vmatpush.msra.mxu0 %v884
    %919 = vmatpush.msra.mxu0 %v883
    %920 = vmatmul.f32.gmra.mxu0 %v902
    %v921 = vpop.f32.mrf.mxu0
    %v922 = vadd.f32 0.0, %v921
    %923 = vdwg.mxu0
    %v924 = vadd.f32 %v879, %v922
    %v925 = vld [vmem:[%s0 + $0x14] sm:$0x1]
    %v926 = vld [vmem:[%s0 + $0x34] sm:$0x1]
    %s927 = scalar_lea.vmem %s1, 2560
    %v928 = vld [vmem:[%s927] sm:$0xff]
    %v929 = vld [vmem:[%s927 + $0x8] sm:$0xff]
    %v930 = vld [vmem:[%s927 + $0x10] sm:$0xff]
    %v931 = vld [vmem:[%s927 + $0x18] sm:$0xff]
    %v932 = vld [vmem:[%s927 + $0x20] sm:$0xff]
    %v933 = vld [vmem:[%s927 + $0x28] sm:$0xff]
    %v934 = vld [vmem:[%s927 + $0x30] sm:$0xff]
    %v935 = vld [vmem:[%s927 + $0x38] sm:$0xff]
    %v936 = vld [vmem:[%s927 + $0x40] sm:$0xff]
    %v937 = vld [vmem:[%s927 + $0x48] sm:$0xff]
    %v938 = vld [vmem:[%s927 + $0x50] sm:$0xff]
    %v939 = vld [vmem:[%s927 + $0x58] sm:$0xff]
    %v940 = vld [vmem:[%s927 + $0x60] sm:$0xff]
    %v941 = vld [vmem:[%s927 + $0x68] sm:$0xff]
    %v942 = vld [vmem:[%s927 + $0x70] sm:$0xff]
    %v943 = vld [vmem:[%s927 + $0x78] sm:$0xff]
    %v946 = vrot.slane %v926, 7
    %v947 = vsel %vm67, %v946, %v925
    %949 = vmatpush.msra.mxu0 %v943
    %950 = vmatpush.msra.mxu0 %v942
    %951 = vmatpush.msra.mxu0 %v941
    %952 = vmatpush.msra.mxu0 %v940
    %953 = vmatpush.msra.mxu0 %v939
    %954 = vmatpush.msra.mxu0 %v938
    %955 = vmatpush.msra.mxu0 %v937
    %956 = vmatpush.msra.mxu0 %v936
    %957 = vmatpush.msra.mxu0 %v935
    %958 = vmatpush.msra.mxu0 %v934
    %959 = vmatpush.msra.mxu0 %v933
    %960 = vmatpush.msra.mxu0 %v932
    %961 = vmatpush.msra.mxu0 %v931
    %962 = vmatpush.msra.mxu0 %v930
    %963 = vmatpush.msra.mxu0 %v929
    %964 = vmatpush.msra.mxu0 %v928
    %965 = vmatmul.f32.gmra.mxu0 %v947
    %v966 = vpop.f32.mrf.mxu0
    %v967 = vadd.f32 0.0, %v966
    %968 = vdwg.mxu0
    %v969 = vadd.f32 %v924, %v967
    %v970 = vld [vmem:[%s0 + $0x15] sm:$0x1]
    %v971 = vld [vmem:[%s0 + $0x35] sm:$0x1]
    %s972 = scalar_lea.vmem %s1, 2688
    %v973 = vld [vmem:[%s972] sm:$0xff]
    %v974 = vld [vmem:[%s972 + $0x8] sm:$0xff]
    %v975 = vld [vmem:[%s972 + $0x10] sm:$0xff]
    %v976 = vld [vmem:[%s972 + $0x18] sm:$0xff]
    %v977 = vld [vmem:[%s972 + $0x20] sm:$0xff]
    %v978 = vld [vmem:[%s972 + $0x28] sm:$0xff]
    %v979 = vld [vmem:[%s972 + $0x30] sm:$0xff]
    %v980 = vld [vmem:[%s972 + $0x38] sm:$0xff]
    %v981 = vld [vmem:[%s972 + $0x40] sm:$0xff]
    %v982 = vld [vmem:[%s972 + $0x48] sm:$0xff]
    %v983 = vld [vmem:[%s972 + $0x50] sm:$0xff]
    %v984 = vld [vmem:[%s972 + $0x58] sm:$0xff]
    %v985 = vld [vmem:[%s972 + $0x60] sm:$0xff]
    %v986 = vld [vmem:[%s972 + $0x68] sm:$0xff]
    %v987 = vld [vmem:[%s972 + $0x70] sm:$0xff]
    %v988 = vld [vmem:[%s972 + $0x78] sm:$0xff]
    %v991 = vrot.slane %v971, 7
    %v992 = vsel %vm67, %v991, %v970
    %994 = vmatpush.msra.mxu0 %v988
    %995 = vmatpush.msra.mxu0 %v987
    %996 = vmatpush.msra.mxu0 %v986
    %997 = vmatpush.msra.mxu0 %v985
    %998 = vmatpush.msra.mxu0 %v984
    %999 = vmatpush.msra.mxu0 %v983
    %1000 = vmatpush.msra.mxu0 %v982
    %1001 = vmatpush.msra.mxu0 %v981
    %1002 = vmatpush.msra.mxu0 %v980
    %1003 = vmatpush.msra.mxu0 %v979
    %1004 = vmatpush.msra.mxu0 %v978
    %1005 = vmatpush.msra.mxu0 %v977
    %1006 = vmatpush.msra.mxu0 %v976
    %1007 = vmatpush.msra.mxu0 %v975
    %1008 = vmatpush.msra.mxu0 %v974
    %1009 = vmatpush.msra.mxu0 %v973
    %1010 = vmatmul.f32.gmra.mxu0 %v992
    %v1011 = vpop.f32.mrf.mxu0
    %v1012 = vadd.f32 0.0, %v1011
    %1013 = vdwg.mxu0
    %v1014 = vadd.f32 %v969, %v1012
    %v1015 = vld [vmem:[%s0 + $0x16] sm:$0x1]
    %v1016 = vld [vmem:[%s0 + $0x36] sm:$0x1]
    %s1017 = scalar_lea.vmem %s1, 2816
    %v1018 = vld [vmem:[%s1017] sm:$0xff]
    %v1019 = vld [vmem:[%s1017 + $0x8] sm:$0xff]
    %v1020 = vld [vmem:[%s1017 + $0x10] sm:$0xff]
    %v1021 = vld [vmem:[%s1017 + $0x18] sm:$0xff]
    %v1022 = vld [vmem:[%s1017 + $0x20] sm:$0xff]
    %v1023 = vld [vmem:[%s1017 + $0x28] sm:$0xff]
    %v1024 = vld [vmem:[%s1017 + $0x30] sm:$0xff]
    %v1025 = vld [vmem:[%s1017 + $0x38] sm:$0xff]
    %v1026 = vld [vmem:[%s1017 + $0x40] sm:$0xff]
    %v1027 = vld [vmem:[%s1017 + $0x48] sm:$0xff]
    %v1028 = vld [vmem:[%s1017 + $0x50] sm:$0xff]
    %v1029 = vld [vmem:[%s1017 + $0x58] sm:$0xff]
    %v1030 = vld [vmem:[%s1017 + $0x60] sm:$0xff]
    %v1031 = vld [vmem:[%s1017 + $0x68] sm:$0xff]
    %v1032 = vld [vmem:[%s1017 + $0x70] sm:$0xff]
    %v1033 = vld [vmem:[%s1017 + $0x78] sm:$0xff]
    %v1036 = vrot.slane %v1016, 7
    %v1037 = vsel %vm67, %v1036, %v1015
    %1039 = vmatpush.msra.mxu0 %v1033
    %1040 = vmatpush.msra.mxu0 %v1032
    %1041 = vmatpush.msra.mxu0 %v1031
    %1042 = vmatpush.msra.mxu0 %v1030
    %1043 = vmatpush.msra.mxu0 %v1029
    %1044 = vmatpush.msra.mxu0 %v1028
    %1045 = vmatpush.msra.mxu0 %v1027
    %1046 = vmatpush.msra.mxu0 %v1026
    %1047 = vmatpush.msra.mxu0 %v1025
    %1048 = vmatpush.msra.mxu0 %v1024
    %1049 = vmatpush.msra.mxu0 %v1023
    %1050 = vmatpush.msra.mxu0 %v1022
    %1051 = vmatpush.msra.mxu0 %v1021
    %1052 = vmatpush.msra.mxu0 %v1020
    %1053 = vmatpush.msra.mxu0 %v1019
    %1054 = vmatpush.msra.mxu0 %v1018
    %1055 = vmatmul.f32.gmra.mxu0 %v1037
    %v1056 = vpop.f32.mrf.mxu0
    %v1057 = vadd.f32 0.0, %v1056
    %1058 = vdwg.mxu0
    %v1059 = vadd.f32 %v1014, %v1057
    %v1060 = vld [vmem:[%s0 + $0x17] sm:$0x1]
    %v1061 = vld [vmem:[%s0 + $0x37] sm:$0x1]
    %s1062 = scalar_lea.vmem %s1, 2944
    %v1063 = vld [vmem:[%s1062] sm:$0xff]
    %v1064 = vld [vmem:[%s1062 + $0x8] sm:$0xff]
    %v1065 = vld [vmem:[%s1062 + $0x10] sm:$0xff]
    %v1066 = vld [vmem:[%s1062 + $0x18] sm:$0xff]
    %v1067 = vld [vmem:[%s1062 + $0x20] sm:$0xff]
    %v1068 = vld [vmem:[%s1062 + $0x28] sm:$0xff]
    %v1069 = vld [vmem:[%s1062 + $0x30] sm:$0xff]
    %v1070 = vld [vmem:[%s1062 + $0x38] sm:$0xff]
    %v1071 = vld [vmem:[%s1062 + $0x40] sm:$0xff]
    %v1072 = vld [vmem:[%s1062 + $0x48] sm:$0xff]
    %v1073 = vld [vmem:[%s1062 + $0x50] sm:$0xff]
    %v1074 = vld [vmem:[%s1062 + $0x58] sm:$0xff]
    %v1075 = vld [vmem:[%s1062 + $0x60] sm:$0xff]
    %v1076 = vld [vmem:[%s1062 + $0x68] sm:$0xff]
    %v1077 = vld [vmem:[%s1062 + $0x70] sm:$0xff]
    %v1078 = vld [vmem:[%s1062 + $0x78] sm:$0xff]
    %v1081 = vrot.slane %v1061, 7
    %v1082 = vsel %vm67, %v1081, %v1060
    %1084 = vmatpush.msra.mxu0 %v1078
    %1085 = vmatpush.msra.mxu0 %v1077
    %1086 = vmatpush.msra.mxu0 %v1076
    %1087 = vmatpush.msra.mxu0 %v1075
    %1088 = vmatpush.msra.mxu0 %v1074
    %1089 = vmatpush.msra.mxu0 %v1073
    %1090 = vmatpush.msra.mxu0 %v1072
    %1091 = vmatpush.msra.mxu0 %v1071
    %1092 = vmatpush.msra.mxu0 %v1070
    %1093 = vmatpush.msra.mxu0 %v1069
    %1094 = vmatpush.msra.mxu0 %v1068
    %1095 = vmatpush.msra.mxu0 %v1067
    %1096 = vmatpush.msra.mxu0 %v1066
    %1097 = vmatpush.msra.mxu0 %v1065
    %1098 = vmatpush.msra.mxu0 %v1064
    %1099 = vmatpush.msra.mxu0 %v1063
    %1100 = vmatmul.f32.gmra.mxu0 %v1082
    %v1101 = vpop.f32.mrf.mxu0
    %v1102 = vadd.f32 0.0, %v1101
    %1103 = vdwg.mxu0
    %v1104 = vadd.f32 %v1059, %v1102
    %v1105 = vld [vmem:[%s0 + $0x18] sm:$0x1]
    %v1106 = vld [vmem:[%s0 + $0x38] sm:$0x1]
    %s1107 = scalar_lea.vmem %s1, 3072
    %v1108 = vld [vmem:[%s1107] sm:$0xff]
    %v1109 = vld [vmem:[%s1107 + $0x8] sm:$0xff]
    %v1110 = vld [vmem:[%s1107 + $0x10] sm:$0xff]
    %v1111 = vld [vmem:[%s1107 + $0x18] sm:$0xff]
    %v1112 = vld [vmem:[%s1107 + $0x20] sm:$0xff]
    %v1113 = vld [vmem:[%s1107 + $0x28] sm:$0xff]
    %v1114 = vld [vmem:[%s1107 + $0x30] sm:$0xff]
    %v1115 = vld [vmem:[%s1107 + $0x38] sm:$0xff]
    %v1116 = vld [vmem:[%s1107 + $0x40] sm:$0xff]
    %v1117 = vld [vmem:[%s1107 + $0x48] sm:$0xff]
    %v1118 = vld [vmem:[%s1107 + $0x50] sm:$0xff]
    %v1119 = vld [vmem:[%s1107 + $0x58] sm:$0xff]
    %v1120 = vld [vmem:[%s1107 + $0x60] sm:$0xff]
    %v1121 = vld [vmem:[%s1107 + $0x68] sm:$0xff]
    %v1122 = vld [vmem:[%s1107 + $0x70] sm:$0xff]
    %v1123 = vld [vmem:[%s1107 + $0x78] sm:$0xff]
    %v1126 = vrot.slane %v1106, 7
    %v1127 = vsel %vm67, %v1126, %v1105
    %1129 = vmatpush.msra.mxu0 %v1123
    %1130 = vmatpush.msra.mxu0 %v1122
    %1131 = vmatpush.msra.mxu0 %v1121
    %1132 = vmatpush.msra.mxu0 %v1120
    %1133 = vmatpush.msra.mxu0 %v1119
    %1134 = vmatpush.msra.mxu0 %v1118
    %1135 = vmatpush.msra.mxu0 %v1117
    %1136 = vmatpush.msra.mxu0 %v1116
    %1137 = vmatpush.msra.mxu0 %v1115
    %1138 = vmatpush.msra.mxu0 %v1114
    %1139 = vmatpush.msra.mxu0 %v1113
    %1140 = vmatpush.msra.mxu0 %v1112
    %1141 = vmatpush.msra.mxu0 %v1111
    %1142 = vmatpush.msra.mxu0 %v1110
    %1143 = vmatpush.msra.mxu0 %v1109
    %1144 = vmatpush.msra.mxu0 %v1108
    %1145 = vmatmul.f32.gmra.mxu0 %v1127
    %v1146 = vpop.f32.mrf.mxu0
    %v1147 = vadd.f32 0.0, %v1146
    %1148 = vdwg.mxu0
    %v1149 = vadd.f32 %v1104, %v1147
    %v1150 = vld [vmem:[%s2] sm:$0x1]
    %v1152 = vperm.slane %v1150, 0
    %v1154 = vadd.f32 %v1149, %v1152
    %v1155 = vmax.f32 %v1154, 0.0
    %v1156 = vld [vmem:[%s3] sm:$0xff]
    %v1157 = vld [vmem:[%s3 + $0x8] sm:$0xff]
    %v1158 = vld [vmem:[%s3 + $0x10] sm:$0xff]
    %v1159 = vld [vmem:[%s3 + $0x18] sm:$0xff]
    %v1160 = vld [vmem:[%s3 + $0x20] sm:$0xff]
    %v1161 = vld [vmem:[%s3 + $0x28] sm:$0xff]
    %v1162 = vld [vmem:[%s3 + $0x30] sm:$0xff]
    %v1163 = vld [vmem:[%s3 + $0x38] sm:$0xff]
    %v1164 = vld [vmem:[%s3 + $0x40] sm:$0xff]
    %v1165 = vld [vmem:[%s3 + $0x48] sm:$0xff]
    %v1166 = vld [vmem:[%s3 + $0x50] sm:$0xff]
    %v1167 = vld [vmem:[%s3 + $0x58] sm:$0xff]
    %v1168 = vld [vmem:[%s3 + $0x60] sm:$0xff]
    %v1169 = vld [vmem:[%s3 + $0x68] sm:$0xff]
    %v1170 = vld [vmem:[%s3 + $0x70] sm:$0xff]
    %v1171 = vld [vmem:[%s3 + $0x78] sm:$0xff]
    %v1172 = vld [vmem:[%s4] sm:$0x1]
    %v1174 = vperm.slane %v1172, 0
    %1176 = vmatpush.msra.mxu0 %v1171
    %1177 = vmatpush.msra.mxu0 %v1170
    %1178 = vmatpush.msra.mxu0 %v1169
    %1179 = vmatpush.msra.mxu0 %v1168
    %1180 = vmatpush.msra.mxu0 %v1167
    %1181 = vmatpush.msra.mxu0 %v1166
    %1182 = vmatpush.msra.mxu0 %v1165
    %1183 = vmatpush.msra.mxu0 %v1164
    %1184 = vmatpush.msra.mxu0 %v1163
    %1185 = vmatpush.msra.mxu0 %v1162
    %1186 = vmatpush.msra.mxu0 %v1161
    %1187 = vmatpush.msra.mxu0 %v1160
    %1188 = vmatpush.msra.mxu0 %v1159
    %1189 = vmatpush.msra.mxu0 %v1158
    %1190 = vmatpush.msra.mxu0 %v1157
    %1191 = vmatpush.msra.mxu0 %v1156
    %1192 = vmatmul.f32.gmra.mxu0 %v1155
    %v1193 = vpop.f32.mrf.mxu0
    %v1194 = vadd.f32 %v1174, %v1193
    %1195 = vdwg.mxu0
    %v1196 = vmax.f32 %v1194, 0.0
    %v1197 = vld [vmem:[%s5] sm:$0xff]
    %v1198 = vld [vmem:[%s5 + $0x8] sm:$0xff]
    %v1199 = vld [vmem:[%s5 + $0x10] sm:$0xff]
    %v1200 = vld [vmem:[%s5 + $0x18] sm:$0xff]
    %v1201 = vld [vmem:[%s5 + $0x20] sm:$0xff]
    %v1202 = vld [vmem:[%s5 + $0x28] sm:$0xff]
    %v1203 = vld [vmem:[%s5 + $0x30] sm:$0xff]
    %v1204 = vld [vmem:[%s5 + $0x38] sm:$0xff]
    %v1205 = vld [vmem:[%s5 + $0x40] sm:$0xff]
    %v1206 = vld [vmem:[%s5 + $0x48] sm:$0xff]
    %v1207 = vld [vmem:[%s5 + $0x50] sm:$0xff]
    %v1208 = vld [vmem:[%s5 + $0x58] sm:$0xff]
    %v1209 = vld [vmem:[%s5 + $0x60] sm:$0xff]
    %v1210 = vld [vmem:[%s5 + $0x68] sm:$0xff]
    %v1211 = vld [vmem:[%s5 + $0x70] sm:$0xff]
    %v1212 = vld [vmem:[%s5 + $0x78] sm:$0xff]
    %v1213 = vld [vmem:[%s6] sm:$0x1]
    %v1215 = vperm.slane %v1213, 0
    %1217 = vmatpush.msra.mxu0 %v1212
    %1218 = vmatpush.msra.mxu0 %v1211
    %1219 = vmatpush.msra.mxu0 %v1210
    %1220 = vmatpush.msra.mxu0 %v1209
    %1221 = vmatpush.msra.mxu0 %v1208
    %1222 = vmatpush.msra.mxu0 %v1207
    %1223 = vmatpush.msra.mxu0 %v1206
    %1224 = vmatpush.msra.mxu0 %v1205
    %1225 = vmatpush.msra.mxu0 %v1204
    %1226 = vmatpush.msra.mxu0 %v1203
    %1227 = vmatpush.msra.mxu0 %v1202
    %1228 = vmatpush.msra.mxu0 %v1201
    %1229 = vmatpush.msra.mxu0 %v1200
    %1230 = vmatpush.msra.mxu0 %v1199
    %1231 = vmatpush.msra.mxu0 %v1198
    %1232 = vmatpush.msra.mxu0 %v1197
    %1233 = vmatmul.f32.gmra.mxu0 %v1196
    %v1234 = vpop.f32.mrf.mxu0
    %v1235 = vadd.f32 %v1215, %v1234
    %1236 = vdwg.mxu0
    %1237 = vst [vmem:[#allocation2] sm:$0x3] %v1235
    // Predicated region
    $region30: #{lenet_forward.5} parent=1 // pred_check
      _
    $region31: #{lenet_forward.5} parent=1 // pred_check_branch
      %1239 = sbr.rel (0) target = $region33
    $region32: #{lenet_forward.5} parent=1 // pred_region
      %1241 = vsyncadd [#allocation3], 0
      %s1243 = sshll.u32 [#allocation2], 4
      %s1244 = int_to_ptr.vmem [resolvable:$true] %s1243
      %s1245 = sshll.u32 %s7, 4
      %s1246 = int_to_ptr.hbm [resolvable:$true] %s1245
      %1248 = dma.vmem_to_hbm [thread:$0]  %s1244, 32, %s1246, [#allocation3]
    $region33: #{lenet_forward.5} parent=1 // pred_fallthru
      _
    // Predicated region
    $region34: #{lenet_forward.5} parent=1 // pred_check
      _
    $region35: #{lenet_forward.5} parent=1 // pred_check_branch
      %1250 = sbr.rel (0) target = $region37
    $region36: #{lenet_forward.5} parent=1 // pred_region
      %1252 = dma.done [#allocation3], 32
    $region37: #{lenet_forward.5} parent=1 // pred_fallthru
      _
    %1253 = vsyncpa [#allocation3], 1

</llo_original>
